<compile_context>
chip_gen: v7x
topology: tpu7x:2x2x1
jax: 0.10.0
libtpu: 0.0.40
codegen_flags: <defaults>
</compile_context>

<pallas_src>
import math

import jax
import jax.numpy as jnp
from jax import lax
from jax.experimental import pallas as pl
from jax.experimental.pallas import tpu as pltpu


# ---------------------------------------------------------------------------
# Model hyperparameters
# ---------------------------------------------------------------------------
HIDDEN_DIM = 64
NUM_HEADS = 8
HEAD_DIM = HIDDEN_DIM // NUM_HEADS
MAX_POS = 1000
MAX_POS_PAD = 1024            # pos table padded to a lane-friendly row count
LN_EPS = 1e-5

# Rows of the packed small-parameter table (padded to 8 rows for sublane align)
SP_BO, SP_BF2, SP_G1, SP_BE1, SP_G2, SP_BE2 = 0, 1, 2, 3, 4, 5
SP_ROWS = 8


def _layer_norm(x, gamma, beta):
    # x: (M, H) f32; gamma/beta: (1, H) f32
    mean = jnp.mean(x, axis=-1, keepdims=True)
    xc = x - mean
    var = jnp.mean(xc * xc, axis=-1, keepdims=True)
    return xc * lax.rsqrt(var + LN_EPS) * gamma + beta


def _gelu_exact(x):
    # nn.GELU() default = exact erf-based gelu
    return 0.5 * x * (1.0 + lax.erf(x * (1.0 / math.sqrt(2.0))))


# ---------------------------------------------------------------------------
# Pallas kernel: one batch BLOCK (Bb elements) per grid step
# ---------------------------------------------------------------------------
def temporal_attention_kernel(
    idx_ref,                     # (Bb, S, 1)  int32 temporal indices
    emb_ref,                     # (Bb, S, H)  f32 embeddings
    pos_ref,                     # (MAX_POS_PAD, H) bf16 positional table
    wq_ref, wk_ref, wv_ref,      # (NH, H, HD) bf16 head-major projections
    bqkv_ref,                    # (3, NH, 1, HD) f32 packed q/k/v biases
    wo_ref,                      # (NH, HD, H) bf16 head-major out projection
    w1_ref, bf1_ref,             # (H, 4H) bf16, (1, 4H) f32
    w2_ref,                      # (4H, H) bf16
    sp_ref,                      # (8, H) f32 packed [bo, bf2, g1, be1, g2, be2]
    out_ref,                     # (Bb, S, H) f32
):
    Bb, S, H = emb_ref.shape
    M = Bb * S
    f32, bf16 = jnp.float32, jnp.bfloat16

    x0 = emb_ref[...].reshape(M, H)                       # original embeddings

    # ---- temporal positional encoding: in-kernel one-hot gather on the MXU ----
    idx = idx_ref[...].reshape(M, 1)                      # (M, 1) int32
    piota = lax.broadcasted_iota(jnp.int32, (M, MAX_POS_PAD), 1)
    onehot = (piota == idx).astype(bf16)                  # exact 0/1
    pos = jnp.dot(onehot, pos_ref[...], preferred_element_type=f32)   # (M, H)

    x = x0 + pos                                          # embeddings_with_time
    # heads become the batch dim of every attention einsum -> no lane slicing
    xb = jnp.broadcast_to(x.astype(bf16)[None], (NUM_HEADS, M, H))

    # ---- multi-head self-attention (Q = K = V = embeddings_with_time) ----
    bq, bk, bv = bqkv_ref[0], bqkv_ref[1], bqkv_ref[2]    # (NH, 1, HD) f32
    q = jnp.einsum("hmc,hcd->hmd", xb, wq_ref[...], preferred_element_type=f32) + bq
    k = jnp.einsum("hmc,hcd->hmd", xb, wk_ref[...], preferred_element_type=f32) + bk
    v = jnp.einsum("hmc,hcd->hmd", xb, wv_ref[...], preferred_element_type=f32) + bv

    HB = NUM_HEADS * Bb
    qb = q.astype(bf16).reshape(HB, S, HEAD_DIM)
    kb = k.astype(bf16).reshape(HB, S, HEAD_DIM)
    vb = v.astype(bf16).reshape(HB, S, HEAD_DIM)

    s = jnp.einsum("bqd,bkd->bqk", qb, kb, preferred_element_type=f32)
    s = s * (1.0 / math.sqrt(HEAD_DIM))
    m = jnp.max(s, axis=-1, keepdims=True)
    p = jnp.exp(s - m)
    p = p * pl.reciprocal(jnp.sum(p, axis=-1, keepdims=True), approx=True)
    ctx = jnp.einsum("bqk,bkd->bqd", p.astype(bf16), vb,
                     preferred_element_type=f32)          # (HB, S, HD)

    # output projection: one batched K=HD matmul over heads, then a head-sum
    sp = sp_ref[...]
    ctx_h = ctx.astype(bf16).reshape(NUM_HEADS, M, HEAD_DIM)
    per_head = jnp.einsum("hmd,hdo->hmo", ctx_h, wo_ref[...],
                          preferred_element_type=f32)     # (NH, M, H)
    attn2d = jnp.sum(per_head, axis=0) + sp[SP_BO:SP_BO + 1, :]

    # residual from ORIGINAL embeddings (not embeddings_with_time), then LN1
    y = _layer_norm(x0 + attn2d, sp[SP_G1:SP_G1 + 1, :], sp[SP_BE1:SP_BE1 + 1, :])

    # FFN: Linear(H,4H) -> GELU(exact) -> Linear(4H,H)   (dropout = identity)
    h1 = jnp.dot(y.astype(bf16), w1_ref[...], preferred_element_type=f32) + bf1_ref[...]
    h1 = _gelu_exact(h1)
    f = jnp.dot(h1.astype(bf16), w2_ref[...], preferred_element_type=f32) \
        + sp[SP_BF2:SP_BF2 + 1, :]

    out = _layer_norm(y + f, sp[SP_G2:SP_G2 + 1, :], sp[SP_BE2:SP_BE2 + 1, :])
    out_ref[...] = out.reshape(Bb, S, H)


# ---------------------------------------------------------------------------
# Wrapper
# ---------------------------------------------------------------------------
def temporal_attention_forward(embeddings, temporal_indices, params,
                               target_rows=1024):
    B, S, H = embeddings.shape
    assert H == HIDDEN_DIM
    NH, HD = NUM_HEADS, HEAD_DIM
    bf16 = jnp.bfloat16

    emb = embeddings if embeddings.dtype == jnp.float32 else embeddings.astype(jnp.float32)
    idx = temporal_indices.astype(jnp.int32).reshape(B, S, 1)

    # block_b: largest divisor of B with ~target_rows rows per step (no padding
    # copies); cap at B//2 when possible so >=2 blocks exist (v7x has 2 TCs).
    bb_max = max(1, min(B, target_rows // max(S, 1)))
    if B >= 2:
        bb_max = min(bb_max, max(1, B // 2))
    block_b = max(d for d in range(1, bb_max + 1) if B % d == 0)
    nb = B // block_b

    # --- one-time weight packing (host side, tiny) ---
    wq_h = params["wq"].reshape(H, NH, HD).transpose(1, 0, 2).astype(bf16)   # (NH,H,HD)
    wk_h = params["wk"].reshape(H, NH, HD).transpose(1, 0, 2).astype(bf16)
    wv_h = params["wv"].reshape(H, NH, HD).transpose(1, 0, 2).astype(bf16)
    wo_h = params["wo"].reshape(NH, HD, H).astype(bf16)                      # (NH,HD,H)
    bqkv = jnp.stack([params["bq"].reshape(NH, 1, HD),
                      params["bk"].reshape(NH, 1, HD),
                      params["bv"].reshape(NH, 1, HD)], axis=0)              # (3,NH,1,HD) f32
    pos_tab = jnp.zeros((MAX_POS_PAD, H), jnp.float32)
    pos_tab = pos_tab.at[:MAX_POS].set(params["pos_enc"]).astype(bf16)
    w1 = params["w1"].astype(bf16)
    w2 = params["w2"].astype(bf16)
    bf1 = params["bf1"]                                                      # (1,4H) f32
    smallp = jnp.concatenate(
        [params["bo"], params["bf2"], params["g1"], params["be1"],
         params["g2"], params["be2"],
         jnp.zeros((SP_ROWS - 6, H), jnp.float32)], axis=0)                  # (8,H) f32

    weights = (pos_tab, wq_h, wk_h, wv_h, bqkv, wo_h, w1, bf1, w2, smallp)

    idx_spec = pl.BlockSpec((block_b, S, 1), lambda b: (b, 0, 0))
    emb_spec = pl.BlockSpec((block_b, S, H), lambda b: (b, 0, 0))

    def w_spec(a):
        zero = (0,) * a.ndim
        return pl.BlockSpec(a.shape, lambda b, _z=zero: _z)

    out = pl.pallas_call(
        temporal_attention_kernel,
        grid=(nb,),
        in_specs=[idx_spec, emb_spec] + [w_spec(w) for w in weights],
        out_specs=emb_spec,
        out_shape=jax.ShapeDtypeStruct((B, S, H), jnp.float32),
        compiler_params=pltpu.CompilerParams(
            dimension_semantics=("parallel",),
            vmem_limit_bytes=48 * 1024 * 1024,
        ),
    )(idx, emb, *weights)
    return out


# ---------------------------------------------------------------------------
# Deterministic parameter construction (synthetic; mirrors module __init__ shapes)
# ---------------------------------------------------------------------------
def make_params(key):
    H = HIDDEN_DIM
    keys = jax.random.split(key, 16)
    std = 0.02

    # Sinusoidal temporal positional encoding (1000, H), as in init_temporal_encoding
    position = jnp.arange(MAX_POS, dtype=jnp.float32)[:, None]
    div_term = jnp.exp(
        jnp.arange(0, H, 2, dtype=jnp.float32) * -(math.log(10000.0) / H))
    pe = jnp.zeros((MAX_POS, H), jnp.float32)
    pe = pe.at[:, 0::2].set(jnp.sin(position * div_term))
    pe = pe.at[:, 1::2].set(jnp.cos(position * div_term))

    def w(k, shape, s=std):
        return (s * jax.random.normal(k, shape)).astype(jnp.float32)

    return {
        "pos_enc": pe,
        # MultiheadAttention in-projections (stored pre-transposed: x @ W)
        "wq": w(keys[0], (H, H)), "wk": w(keys[1], (H, H)), "wv": w(keys[2], (H, H)),
        "bq": w(keys[3], (1, H)), "bk": w(keys[4], (1, H)), "bv": w(keys[5], (1, H)),
        # out projection
        "wo": w(keys[6], (H, H)), "bo": w(keys[7], (1, H)),
        # LayerNorm1
        "g1": 1.0 + w(keys[8], (1, H), 0.1), "be1": w(keys[9], (1, H)),
        # FFN
        "w1": w(keys[10], (H, 4 * H)), "bf1": w(keys[11], (1, 4 * H)),
        "w2": w(keys[12], (4 * H, H)), "bf2": w(keys[13], (1, H)),
        # LayerNorm2
        "g2": 1.0 + w(keys[14], (1, H), 0.1), "be2": w(keys[15], (1, H)),
    }


# ---------------------------------------------------------------------------
# Pure-JAX f32 reference (for correctness check)
# ---------------------------------------------------------------------------
def reference_forward(embeddings, temporal_indices, p):
    B, S, H = embeddings.shape
    pos = p["pos_enc"][temporal_indices.reshape(-1)].reshape(B, S, H)
    x = embeddings + pos

    def proj(x, w, b):
        return jnp.einsum("bsh,hk->bsk", x, w) + b[0]

    q = proj(x, p["wq"], p["bq"])
    k = proj(x, p["wk"], p["bk"])
    v = proj(x, p["wv"], p["bv"])
    qh = q.reshape(B, S, NUM_HEADS, HEAD_DIM).transpose(0, 2, 1, 3)
    kh = k.reshape(B, S, NUM_HEADS, HEAD_DIM).transpose(0, 2, 1, 3)
    vh = v.reshape(B, S, NUM_HEADS, HEAD_DIM).transpose(0, 2, 1, 3)
    s = jnp.einsum("bhqd,bhkd->bhqk", qh, kh) / math.sqrt(HEAD_DIM)
    a = jax.nn.softmax(s, axis=-1)
    ctx = jnp.einsum("bhqk,bhkd->bhqd", a, vh).transpose(0, 2, 1, 3).reshape(B, S, H)
    attn_out = jnp.einsum("bsh,hk->bsk", ctx, p["wo"]) + p["bo"][0]

    def ln(x, g, b):
        mu = x.mean(-1, keepdims=True)
        var = ((x - mu) ** 2).mean(-1, keepdims=True)
        return (x - mu) / jnp.sqrt(var + LN_EPS) * g[0] + b[0]

    y = ln(embeddings + attn_out, p["g1"], p["be1"])
    h1 = jax.nn.gelu(jnp.einsum("bsh,hk->bsk", y, p["w1"]) + p["bf1"][0],
                     approximate=False)
    f = jnp.einsum("bsh,hk->bsk", h1, p["w2"]) + p["bf2"][0]
    return ln(y + f, p["g2"], p["be2"])


if __name__ == "__main__":
    key = jax.random.PRNGKey(0)
    k_param, k_emb, k_idx = jax.random.split(key, 3)

    B, S = 2, 8
    params = make_params(k_param)
    embeddings = jax.random.normal(k_emb, (B, S, HIDDEN_DIM), dtype=jnp.float32)
    temporal_indices = jax.random.randint(k_idx, (B, S), 0, MAX_POS, dtype=jnp.int32)

    out = temporal_attention_forward(embeddings, temporal_indices, params)
    out = jax.block_until_ready(out)

    ref = reference_forward(embeddings, temporal_indices, params)
    assert out.shape == (B, S, HIDDEN_DIM)
    max_err = float(jnp.max(jnp.abs(out - ref)))
    # bf16 MXU operands + approx softmax reciprocal -> relaxed tolerance
    assert jnp.allclose(out, ref, atol=2e-2, rtol=2e-2), f"max abs err = {max_err}"
    print("KERNEL_OK")
</pallas_src>

<mosaic_0001>
module attributes {stable_mosaic.version = 11 : i64} {
  func.func @temporal_attention_kernel(%arg0: i32, %arg1: memref<1x8x1xi32, #tpu.memory_space<vmem>>, %arg2: memref<1x8x64xf32, #tpu.memory_space<vmem>>, %arg3: memref<1024x64xbf16, #tpu.memory_space<vmem>>, %arg4: memref<8x64x8xbf16, #tpu.memory_space<vmem>>, %arg5: memref<8x64x8xbf16, #tpu.memory_space<vmem>>, %arg6: memref<8x64x8xbf16, #tpu.memory_space<vmem>>, %arg7: memref<3x8x1x8xf32, #tpu.memory_space<vmem>>, %arg8: memref<8x8x64xbf16, #tpu.memory_space<vmem>>, %arg9: memref<64x256xbf16, #tpu.memory_space<vmem>>, %arg10: memref<1x256xf32, #tpu.memory_space<vmem>>, %arg11: memref<256x64xbf16, #tpu.memory_space<vmem>>, %arg12: memref<8x64xf32, #tpu.memory_space<vmem>>, %arg13: memref<1x8x64xf32, #tpu.memory_space<vmem>>) attributes {dimension_semantics = [#tpu.dimension_semantics<parallel>], iteration_bounds = array<i64: 2>, scalar_prefetch = 0 : i64, scratch_operands = 0 : i64, tpu.core_type = #tpu.core_type<tc>, window_params = [{transform_indices = @transform_0, window_bounds = array<i64: 1, 8, 1>}, {transform_indices = @transform_1, window_bounds = array<i64: 1, 8, 64>}, {pipeline_mode = #tpu.pipeline_mode<synchronous>, transform_indices = @transform_2, window_bounds = array<i64: 1024, 64>}, {pipeline_mode = #tpu.pipeline_mode<synchronous>, transform_indices = @transform_3, window_bounds = array<i64: 8, 64, 8>}, {pipeline_mode = #tpu.pipeline_mode<synchronous>, transform_indices = @transform_4, window_bounds = array<i64: 8, 64, 8>}, {pipeline_mode = #tpu.pipeline_mode<synchronous>, transform_indices = @transform_5, window_bounds = array<i64: 8, 64, 8>}, {pipeline_mode = #tpu.pipeline_mode<synchronous>, transform_indices = @transform_6, window_bounds = array<i64: 3, 8, 1, 8>}, {pipeline_mode = #tpu.pipeline_mode<synchronous>, transform_indices = @transform_7, window_bounds = array<i64: 8, 8, 64>}, {pipeline_mode = #tpu.pipeline_mode<synchronous>, transform_indices = @transform_8, window_bounds = array<i64: 64, 256>}, {pipeline_mode = #tpu.pipeline_mode<synchronous>, transform_indices = @transform_9, window_bounds = array<i64: 1, 256>}, {pipeline_mode = #tpu.pipeline_mode<synchronous>, transform_indices = @transform_10, window_bounds = array<i64: 256, 64>}, {pipeline_mode = #tpu.pipeline_mode<synchronous>, transform_indices = @transform_11, window_bounds = array<i64: 8, 64>}, {transform_indices = @transform_12, window_bounds = array<i64: 1, 8, 64>}]} {
    %c0 = arith.constant 0 : index
    %c0_0 = arith.constant 0 : index
    %c0_1 = arith.constant 0 : index
    %0 = vector.load %arg2[%c0, %c0_0, %c0_1] : memref<1x8x64xf32, #tpu.memory_space<vmem>>, vector<1x8x64xf32>
    %1 = vector.shape_cast %0 : vector<1x8x64xf32> to vector<8x64xf32>
    %c0_2 = arith.constant 0 : index
    %c0_3 = arith.constant 0 : index
    %c0_4 = arith.constant 0 : index
    %2 = vector.load %arg1[%c0_2, %c0_3, %c0_4] : memref<1x8x1xi32, #tpu.memory_space<vmem>>, vector<1x8x1xi32>
    %3 = vector.shape_cast %2 : vector<1x8x1xi32> to vector<8x1xi32>
    %4 = tpu.iota {dimensions = array<i32: 1>} : vector<8x1024xi32>
    %5 = vector.broadcast %3 : vector<8x1xi32> to vector<8x1024xi32>
    %6 = arith.cmpi eq, %4, %5 : vector<8x1024xi32>
    %7 = arith.extui %6 : vector<8x1024xi1> to vector<8x1024xi32>
    %8 = arith.sitofp %7 : vector<8x1024xi32> to vector<8x1024xf32>
    %9 = arith.truncf %8 : vector<8x1024xf32> to vector<8x1024xbf16>
    %c0_5 = arith.constant 0 : index
    %c0_6 = arith.constant 0 : index
    %10 = vector.load %arg3[%c0_5, %c0_6] : memref<1024x64xbf16, #tpu.memory_space<vmem>>, vector<1024x64xbf16>
    %cst = arith.constant dense<0.000000e+00> : vector<8x64xf32>
    %11 = tpu.matmul %9, %10, %cst {dimension_numbers = #tpu.dot_dimension_numbers<[1], [0], [0], [1], [0, 0, 1, 1], [], []>} : vector<8x1024xbf16>, vector<1024x64xbf16>, vector<8x64xf32> -> vector<8x64xf32>
    %12 = arith.addf %1, %11 : vector<8x64xf32>
    %13 = arith.truncf %12 : vector<8x64xf32> to vector<8x64xbf16>
    %14 = vector.shape_cast %13 : vector<8x64xbf16> to vector<1x8x64xbf16>
    %15 = vector.shape_cast %14 : vector<1x8x64xbf16> to vector<1x8x64xbf16>
    %16 = vector.broadcast %15 : vector<1x8x64xbf16> to vector<8x8x64xbf16>
    %c0_7 = arith.constant 0 : index
    %c0_8 = arith.constant 0 : index
    %c0_9 = arith.constant 0 : index
    %c0_10 = arith.constant 0 : index
    %17 = vector.load %arg7[%c0_7, %c0_8, %c0_9, %c0_10] : memref<3x8x1x8xf32, #tpu.memory_space<vmem>>, vector<1x8x1x8xf32>
    %18 = vector.shape_cast %17 : vector<1x8x1x8xf32> to vector<8x1x8xf32>
    %c1 = arith.constant 1 : index
    %c0_11 = arith.constant 0 : index
    %c0_12 = arith.constant 0 : index
    %c0_13 = arith.constant 0 : index
    %19 = vector.load %arg7[%c1, %c0_11, %c0_12, %c0_13] : memref<3x8x1x8xf32, #tpu.memory_space<vmem>>, vector<1x8x1x8xf32>
    %20 = vector.shape_cast %19 : vector<1x8x1x8xf32> to vector<8x1x8xf32>
    %c2 = arith.constant 2 : index
    %c0_14 = arith.constant 0 : index
    %c0_15 = arith.constant 0 : index
    %c0_16 = arith.constant 0 : index
    %21 = vector.load %arg7[%c2, %c0_14, %c0_15, %c0_16] : memref<3x8x1x8xf32, #tpu.memory_space<vmem>>, vector<1x8x1x8xf32>
    %22 = vector.shape_cast %21 : vector<1x8x1x8xf32> to vector<8x1x8xf32>
    %c0_17 = arith.constant 0 : index
    %c0_18 = arith.constant 0 : index
    %c0_19 = arith.constant 0 : index
    %23 = vector.load %arg4[%c0_17, %c0_18, %c0_19] : memref<8x64x8xbf16, #tpu.memory_space<vmem>>, vector<8x64x8xbf16>
    "tpu.trace_start"() <{level = 10 : i32, message = "hmc,hcd->hmd"}> : () -> ()
    %cst_20 = arith.constant dense<0.000000e+00> : vector<8x8x8xf32>
    %24 = tpu.matmul %16, %23, %cst_20 {dimension_numbers = #tpu.dot_dimension_numbers<[2], [1], [1], [2], [0, 0, 0, 1, 1, 2], [0], [0]>} : vector<8x8x64xbf16>, vector<8x64x8xbf16>, vector<8x8x8xf32> -> vector<8x8x8xf32>
    "tpu.trace_stop"() : () -> ()
    %25 = vector.broadcast %18 : vector<8x1x8xf32> to vector<8x8x8xf32>
    %26 = arith.addf %24, %25 : vector<8x8x8xf32>
    %c0_21 = arith.constant 0 : index
    %c0_22 = arith.constant 0 : index
    %c0_23 = arith.constant 0 : index
    %27 = vector.load %arg5[%c0_21, %c0_22, %c0_23] : memref<8x64x8xbf16, #tpu.memory_space<vmem>>, vector<8x64x8xbf16>
    "tpu.trace_start"() <{level = 10 : i32, message = "hmc,hcd->hmd"}> : () -> ()
    %cst_24 = arith.constant dense<0.000000e+00> : vector<8x8x8xf32>
    %28 = tpu.matmul %16, %27, %cst_24 {dimension_numbers = #tpu.dot_dimension_numbers<[2], [1], [1], [2], [0, 0, 0, 1, 1, 2], [0], [0]>} : vector<8x8x64xbf16>, vector<8x64x8xbf16>, vector<8x8x8xf32> -> vector<8x8x8xf32>
    "tpu.trace_stop"() : () -> ()
    %29 = vector.broadcast %20 : vector<8x1x8xf32> to vector<8x8x8xf32>
    %30 = arith.addf %28, %29 : vector<8x8x8xf32>
    %c0_25 = arith.constant 0 : index
    %c0_26 = arith.constant 0 : index
    %c0_27 = arith.constant 0 : index
    %31 = vector.load %arg6[%c0_25, %c0_26, %c0_27] : memref<8x64x8xbf16, #tpu.memory_space<vmem>>, vector<8x64x8xbf16>
    "tpu.trace_start"() <{level = 10 : i32, message = "hmc,hcd->hmd"}> : () -> ()
    %cst_28 = arith.constant dense<0.000000e+00> : vector<8x8x8xf32>
    %32 = tpu.matmul %16, %31, %cst_28 {dimension_numbers = #tpu.dot_dimension_numbers<[2], [1], [1], [2], [0, 0, 0, 1, 1, 2], [0], [0]>} : vector<8x8x64xbf16>, vector<8x64x8xbf16>, vector<8x8x8xf32> -> vector<8x8x8xf32>
    "tpu.trace_stop"() : () -> ()
    %33 = vector.broadcast %22 : vector<8x1x8xf32> to vector<8x8x8xf32>
    %34 = arith.addf %32, %33 : vector<8x8x8xf32>
    %35 = arith.truncf %26 : vector<8x8x8xf32> to vector<8x8x8xbf16>
    %36 = arith.truncf %30 : vector<8x8x8xf32> to vector<8x8x8xbf16>
    %37 = arith.truncf %34 : vector<8x8x8xf32> to vector<8x8x8xbf16>
    "tpu.trace_start"() <{level = 10 : i32, message = "bqd,bkd->bqk"}> : () -> ()
    %cst_29 = arith.constant dense<0.000000e+00> : vector<8x8x8xf32>
    %38 = tpu.matmul %35, %36, %cst_29 {dimension_numbers = #tpu.dot_dimension_numbers<[2], [2], [1], [1], [0, 0, 0, 1, 1, 1], [0], [0]>} : vector<8x8x8xbf16>, vector<8x8x8xbf16>, vector<8x8x8xf32> -> vector<8x8x8xf32>
    "tpu.trace_stop"() : () -> ()
    %cst_30 = arith.constant 0.353553385 : f32
    %39 = vector.broadcast %cst_30 : f32 to vector<8x8x8xf32>
    %40 = arith.mulf %38, %39 : vector<8x8x8xf32>
    %cst_31 = arith.constant dense<0xFF800000> : vector<8x8xf32>
    %41 = vector.multi_reduction <maximumf>, %40, %cst_31 [2] : vector<8x8x8xf32> to vector<8x8xf32>
    %42 = vector.shape_cast %41 : vector<8x8xf32> to vector<8x8x1xf32>
    %43 = vector.broadcast %42 : vector<8x8x1xf32> to vector<8x8x8xf32>
    %44 = arith.subf %40, %43 : vector<8x8x8xf32>
    %45 = math.exp %44 : vector<8x8x8xf32>
    %cst_32 = arith.constant dense<0.000000e+00> : vector<8x8xf32>
    %46 = vector.multi_reduction <add>, %45, %cst_32 [2] : vector<8x8x8xf32> to vector<8x8xf32>
    %47 = vector.shape_cast %46 : vector<8x8xf32> to vector<8x8x1xf32>
    %48 = tpu.reciprocal %47 {approx = true} : vector<8x8x1xf32> -> vector<8x8x1xf32>
    %49 = vector.broadcast %48 : vector<8x8x1xf32> to vector<8x8x8xf32>
    %50 = arith.mulf %45, %49 : vector<8x8x8xf32>
    %51 = arith.truncf %50 : vector<8x8x8xf32> to vector<8x8x8xbf16>
    "tpu.trace_start"() <{level = 10 : i32, message = "bqk,bkd->bqd"}> : () -> ()
    %cst_33 = arith.constant dense<0.000000e+00> : vector<8x8x8xf32>
    %52 = tpu.matmul %51, %37, %cst_33 {dimension_numbers = #tpu.dot_dimension_numbers<[2], [1], [1], [2], [0, 0, 0, 1, 1, 2], [0], [0]>} : vector<8x8x8xbf16>, vector<8x8x8xbf16>, vector<8x8x8xf32> -> vector<8x8x8xf32>
    "tpu.trace_stop"() : () -> ()
    %c0_34 = arith.constant 0 : index
    %c0_35 = arith.constant 0 : index
    %53 = vector.load %arg12[%c0_34, %c0_35] : memref<8x64xf32, #tpu.memory_space<vmem>>, vector<8x64xf32>
    %54 = arith.truncf %52 : vector<8x8x8xf32> to vector<8x8x8xbf16>
    %c0_36 = arith.constant 0 : index
    %c0_37 = arith.constant 0 : index
    %c0_38 = arith.constant 0 : index
    %55 = vector.load %arg8[%c0_36, %c0_37, %c0_38] : memref<8x8x64xbf16, #tpu.memory_space<vmem>>, vector<8x8x64xbf16>
    "tpu.trace_start"() <{level = 10 : i32, message = "hmd,hdo->hmo"}> : () -> ()
    %cst_39 = arith.constant dense<0.000000e+00> : vector<8x8x64xf32>
    %56 = tpu.matmul %54, %55, %cst_39 {dimension_numbers = #tpu.dot_dimension_numbers<[2], [1], [1], [2], [0, 0, 0, 1, 1, 2], [0], [0]>} : vector<8x8x8xbf16>, vector<8x8x64xbf16>, vector<8x8x64xf32> -> vector<8x8x64xf32>
    "tpu.trace_stop"() : () -> ()
    %cst_40 = arith.constant dense<0.000000e+00> : vector<8x64xf32>
    %57 = vector.multi_reduction <add>, %56, %cst_40 [0] : vector<8x8x64xf32> to vector<8x64xf32>
    %58 = vector.extract_strided_slice %53 {offsets = [0, 0], sizes = [1, 64], strides = [1, 1]} : vector<8x64xf32> to vector<1x64xf32>
    %59 = vector.broadcast %58 : vector<1x64xf32> to vector<8x64xf32>
    %60 = arith.addf %57, %59 : vector<8x64xf32>
    %61 = arith.addf %1, %60 : vector<8x64xf32>
    %62 = vector.extract_strided_slice %53 {offsets = [2, 0], sizes = [1, 64], strides = [1, 1]} : vector<8x64xf32> to vector<1x64xf32>
    %63 = vector.extract_strided_slice %53 {offsets = [3, 0], sizes = [1, 64], strides = [1, 1]} : vector<8x64xf32> to vector<1x64xf32>
    %cst_41 = arith.constant dense<0.000000e+00> : vector<8xf32>
    %64 = vector.multi_reduction <add>, %61, %cst_41 [1] : vector<8x64xf32> to vector<8xf32>
    %65 = vector.shape_cast %64 : vector<8xf32> to vector<8x1xf32>
    %cst_42 = arith.constant 6.400000e+01 : f32
    %66 = vector.broadcast %cst_42 : f32 to vector<8x1xf32>
    %67 = arith.divf %65, %66 : vector<8x1xf32>
    %68 = vector.broadcast %67 : vector<8x1xf32> to vector<8x64xf32>
    %69 = arith.subf %61, %68 : vector<8x64xf32>
    %70 = arith.mulf %69, %69 : vector<8x64xf32>
    %cst_43 = arith.constant dense<0.000000e+00> : vector<8xf32>
    %71 = vector.multi_reduction <add>, %70, %cst_43 [1] : vector<8x64xf32> to vector<8xf32>
    %72 = vector.shape_cast %71 : vector<8xf32> to vector<8x1xf32>
    %cst_44 = arith.constant 6.400000e+01 : f32
    %73 = vector.broadcast %cst_44 : f32 to vector<8x1xf32>
    %74 = arith.divf %72, %73 : vector<8x1xf32>
    %cst_45 = arith.constant 9.99999974E-6 : f32
    %75 = vector.broadcast %cst_45 : f32 to vector<8x1xf32>
    %76 = arith.addf %74, %75 : vector<8x1xf32>
    %77 = math.rsqrt %76 : vector<8x1xf32>
    %78 = vector.broadcast %77 : vector<8x1xf32> to vector<8x64xf32>
    %79 = arith.mulf %69, %78 : vector<8x64xf32>
    %80 = vector.broadcast %62 : vector<1x64xf32> to vector<8x64xf32>
    %81 = arith.mulf %79, %80 : vector<8x64xf32>
    %82 = vector.broadcast %63 : vector<1x64xf32> to vector<8x64xf32>
    %83 = arith.addf %81, %82 : vector<8x64xf32>
    %84 = arith.truncf %83 : vector<8x64xf32> to vector<8x64xbf16>
    %c0_46 = arith.constant 0 : index
    %c0_47 = arith.constant 0 : index
    %85 = vector.load %arg9[%c0_46, %c0_47] : memref<64x256xbf16, #tpu.memory_space<vmem>>, vector<64x256xbf16>
    %cst_48 = arith.constant dense<0.000000e+00> : vector<8x256xf32>
    %86 = tpu.matmul %84, %85, %cst_48 {dimension_numbers = #tpu.dot_dimension_numbers<[1], [0], [0], [1], [0, 0, 1, 1], [], []>} : vector<8x64xbf16>, vector<64x256xbf16>, vector<8x256xf32> -> vector<8x256xf32>
    %c0_49 = arith.constant 0 : index
    %c0_50 = arith.constant 0 : index
    %87 = vector.load %arg10[%c0_49, %c0_50] : memref<1x256xf32, #tpu.memory_space<vmem>>, vector<1x256xf32>
    %88 = vector.broadcast %87 : vector<1x256xf32> to vector<8x256xf32>
    %89 = arith.addf %86, %88 : vector<8x256xf32>
    %cst_51 = arith.constant 5.000000e-01 : f32
    %90 = vector.broadcast %cst_51 : f32 to vector<8x256xf32>
    %91 = arith.mulf %90, %89 : vector<8x256xf32>
    %cst_52 = arith.constant 0.707106769 : f32
    %92 = vector.broadcast %cst_52 : f32 to vector<8x256xf32>
    %93 = arith.mulf %89, %92 : vector<8x256xf32>
    %94 = math.erf %93 : vector<8x256xf32>
    %cst_53 = arith.constant 1.000000e+00 : f32
    %95 = vector.broadcast %cst_53 : f32 to vector<8x256xf32>
    %96 = arith.addf %95, %94 : vector<8x256xf32>
    %97 = arith.mulf %91, %96 : vector<8x256xf32>
    %98 = arith.truncf %97 : vector<8x256xf32> to vector<8x256xbf16>
    %c0_54 = arith.constant 0 : index
    %c0_55 = arith.constant 0 : index
    %99 = vector.load %arg11[%c0_54, %c0_55] : memref<256x64xbf16, #tpu.memory_space<vmem>>, vector<256x64xbf16>
    %cst_56 = arith.constant dense<0.000000e+00> : vector<8x64xf32>
    %100 = tpu.matmul %98, %99, %cst_56 {dimension_numbers = #tpu.dot_dimension_numbers<[1], [0], [0], [1], [0, 0, 1, 1], [], []>} : vector<8x256xbf16>, vector<256x64xbf16>, vector<8x64xf32> -> vector<8x64xf32>
    %101 = vector.extract_strided_slice %53 {offsets = [1, 0], sizes = [1, 64], strides = [1, 1]} : vector<8x64xf32> to vector<1x64xf32>
    %102 = vector.broadcast %101 : vector<1x64xf32> to vector<8x64xf32>
    %103 = arith.addf %100, %102 : vector<8x64xf32>
    %104 = arith.addf %83, %103 : vector<8x64xf32>
    %105 = vector.extract_strided_slice %53 {offsets = [4, 0], sizes = [1, 64], strides = [1, 1]} : vector<8x64xf32> to vector<1x64xf32>
    %106 = vector.extract_strided_slice %53 {offsets = [5, 0], sizes = [1, 64], strides = [1, 1]} : vector<8x64xf32> to vector<1x64xf32>
    %cst_57 = arith.constant dense<0.000000e+00> : vector<8xf32>
    %107 = vector.multi_reduction <add>, %104, %cst_57 [1] : vector<8x64xf32> to vector<8xf32>
    %108 = vector.shape_cast %107 : vector<8xf32> to vector<8x1xf32>
    %cst_58 = arith.constant 6.400000e+01 : f32
    %109 = vector.broadcast %cst_58 : f32 to vector<8x1xf32>
    %110 = arith.divf %108, %109 : vector<8x1xf32>
    %111 = vector.broadcast %110 : vector<8x1xf32> to vector<8x64xf32>
    %112 = arith.subf %104, %111 : vector<8x64xf32>
    %113 = arith.mulf %112, %112 : vector<8x64xf32>
    %cst_59 = arith.constant dense<0.000000e+00> : vector<8xf32>
    %114 = vector.multi_reduction <add>, %113, %cst_59 [1] : vector<8x64xf32> to vector<8xf32>
    %115 = vector.shape_cast %114 : vector<8xf32> to vector<8x1xf32>
    %cst_60 = arith.constant 6.400000e+01 : f32
    %116 = vector.broadcast %cst_60 : f32 to vector<8x1xf32>
    %117 = arith.divf %115, %116 : vector<8x1xf32>
    %cst_61 = arith.constant 9.99999974E-6 : f32
    %118 = vector.broadcast %cst_61 : f32 to vector<8x1xf32>
    %119 = arith.addf %117, %118 : vector<8x1xf32>
    %120 = math.rsqrt %119 : vector<8x1xf32>
    %121 = vector.broadcast %120 : vector<8x1xf32> to vector<8x64xf32>
    %122 = arith.mulf %112, %121 : vector<8x64xf32>
    %123 = vector.broadcast %105 : vector<1x64xf32> to vector<8x64xf32>
    %124 = arith.mulf %122, %123 : vector<8x64xf32>
    %125 = vector.broadcast %106 : vector<1x64xf32> to vector<8x64xf32>
    %126 = arith.addf %124, %125 : vector<8x64xf32>
    %127 = vector.shape_cast %126 : vector<8x64xf32> to vector<1x8x64xf32>
    %c0_62 = arith.constant 0 : index
    %c0_63 = arith.constant 0 : index
    %c0_64 = arith.constant 0 : index
    %128 = vector.load %arg13[%c0_62, %c0_63, %c0_64] : memref<1x8x64xf32, #tpu.memory_space<vmem>>, vector<1x8x64xf32>
    tpu.vector_store %arg13[%c0_62, %c0_63, %c0_64], %127 {strides = array<i32>} : memref<1x8x64xf32, #tpu.memory_space<vmem>>, vector<1x8x64xf32>,
    return
  }
  func.func @transform_0(%arg0: i32) -> (i32, i32, i32) {
    %c0_i32 = arith.constant 0 : i32
    %c0_i32_0 = arith.constant 0 : i32
    %c0_i32_1 = arith.constant 0 : i32
    return %arg0, %c0_i32, %c0_i32_0 : i32, i32, i32
  }
  func.func @transform_1(%arg0: i32) -> (i32, i32, i32) {
    %c0_i32 = arith.constant 0 : i32
    %c0_i32_0 = arith.constant 0 : i32
    %c0_i32_1 = arith.constant 0 : i32
    return %arg0, %c0_i32, %c0_i32_0 : i32, i32, i32
  }
  func.func @transform_2(%arg0: i32) -> (i32, i32) {
    %c0_i32 = arith.constant 0 : i32
    %c0_i32_0 = arith.constant 0 : i32
    %c0_i32_1 = arith.constant 0 : i32
    return %c0_i32, %c0_i32_0 : i32, i32
  }
  func.func @transform_3(%arg0: i32) -> (i32, i32, i32) {
    %c0_i32 = arith.constant 0 : i32
    %c0_i32_0 = arith.constant 0 : i32
    %c0_i32_1 = arith.constant 0 : i32
    %c0_i32_2 = arith.constant 0 : i32
    return %c0_i32, %c0_i32_0, %c0_i32_1 : i32, i32, i32
  }
  func.func @transform_4(%arg0: i32) -> (i32, i32, i32) {
    %c0_i32 = arith.constant 0 : i32
    %c0_i32_0 = arith.constant 0 : i32
    %c0_i32_1 = arith.constant 0 : i32
    %c0_i32_2 = arith.constant 0 : i32
    return %c0_i32, %c0_i32_0, %c0_i32_1 : i32, i32, i32
  }
  func.func @transform_5(%arg0: i32) -> (i32, i32, i32) {
    %c0_i32 = arith.constant 0 : i32
    %c0_i32_0 = arith.constant 0 : i32
    %c0_i32_1 = arith.constant 0 : i32
    %c0_i32_2 = arith.constant 0 : i32
    return %c0_i32, %c0_i32_0, %c0_i32_1 : i32, i32, i32
  }
  func.func @transform_6(%arg0: i32) -> (i32, i32, i32, i32) {
    %c0_i32 = arith.constant 0 : i32
    %c0_i32_0 = arith.constant 0 : i32
    %c0_i32_1 = arith.constant 0 : i32
    %c0_i32_2 = arith.constant 0 : i32
    %c0_i32_3 = arith.constant 0 : i32
    return %c0_i32, %c0_i32_0, %c0_i32_1, %c0_i32_2 : i32, i32, i32, i32
  }
  func.func @transform_7(%arg0: i32) -> (i32, i32, i32) {
    %c0_i32 = arith.constant 0 : i32
    %c0_i32_0 = arith.constant 0 : i32
    %c0_i32_1 = arith.constant 0 : i32
    %c0_i32_2 = arith.constant 0 : i32
    return %c0_i32, %c0_i32_0, %c0_i32_1 : i32, i32, i32
  }
  func.func @transform_8(%arg0: i32) -> (i32, i32) {
    %c0_i32 = arith.constant 0 : i32
    %c0_i32_0 = arith.constant 0 : i32
    %c0_i32_1 = arith.constant 0 : i32
    return %c0_i32, %c0_i32_0 : i32, i32
  }
  func.func @transform_9(%arg0: i32) -> (i32, i32) {
    %c0_i32 = arith.constant 0 : i32
    %c0_i32_0 = arith.constant 0 : i32
    %c0_i32_1 = arith.constant 0 : i32
    return %c0_i32, %c0_i32_0 : i32, i32
  }
  func.func @transform_10(%arg0: i32) -> (i32, i32) {
    %c0_i32 = arith.constant 0 : i32
    %c0_i32_0 = arith.constant 0 : i32
    %c0_i32_1 = arith.constant 0 : i32
    return %c0_i32, %c0_i32_0 : i32, i32
  }
  func.func @transform_11(%arg0: i32) -> (i32, i32) {
    %c0_i32 = arith.constant 0 : i32
    %c0_i32_0 = arith.constant 0 : i32
    %c0_i32_1 = arith.constant 0 : i32
    return %c0_i32, %c0_i32_0 : i32, i32
  }
  func.func @transform_12(%arg0: i32) -> (i32, i32, i32) {
    %c0_i32 = arith.constant 0 : i32
    %c0_i32_0 = arith.constant 0 : i32
    %c0_i32_1 = arith.constant 0 : i32
    return %arg0, %c0_i32, %c0_i32_0 : i32, i32, i32
  }
}

</mosaic_0001>

<llo_original>
// kernel: tpu_custom_call.1
$region0: #{tpu_custom_call.1}
  #allocation0 [shape = 'u32[]', space=smem, size = 0x4, offset = 0x4, fixed_abs, tag = 'smem constant byte address 0x4 - core index']
  #allocation1 [shape = 'u32[144,128]{1,0:T(1,128)}', space=vmem, size = 0x12000, scoped, tag = 'internal scratch']
  %s0 = inlined_call_operand.vmem [shape: s32[2,8,1], index: 0, kind: input, shape index: {}]
  %s1 = inlined_call_operand.vmem [shape: f32[2,8,64], index: 1, kind: input, shape index: {}]
  %s2 = inlined_call_operand.vmem [shape: bf16[1024,64], index: 2, kind: input, shape index: {}]
  %s3 = inlined_call_operand.vmem [shape: bf16[8,64,8], index: 3, kind: input, shape index: {}]
  %s4 = inlined_call_operand.vmem [shape: bf16[8,64,8], index: 4, kind: input, shape index: {}]
  %s5 = inlined_call_operand.vmem [shape: bf16[8,64,8], index: 5, kind: input, shape index: {}]
  %s6 = inlined_call_operand.vmem [shape: f32[3,8,1,8], index: 6, kind: input, shape index: {}]
  %s7 = inlined_call_operand.vmem [shape: bf16[8,8,64], index: 7, kind: input, shape index: {}]
  %s8 = inlined_call_operand.vmem [shape: bf16[64,256], index: 8, kind: input, shape index: {}]
  %s9 = inlined_call_operand.vmem [shape: f32[1,256], index: 9, kind: input, shape index: {}]
  %s10 = inlined_call_operand.vmem [shape: bf16[256,64], index: 10, kind: input, shape index: {}]
  %s11 = inlined_call_operand.vmem [shape: f32[8,64], index: 11, kind: input, shape index: {}]
  %s12 = inlined_call_operand.hbm [shape: f32[2,8,64], index: 12, kind: output, shape index: {}]
  %s13 = sld [smem:[#allocation0]]
  $region81: #{tpu_custom_call.1} parent=0
    _
  %s15 = ssub.s32 1, %s13
  %s16 = scalar_select 0, %s15, %s13
  $region1: #{tpu_custom_call.1} parent=0
    #allocation2 [shape = 'u8[8192]{0}', space=vmem, size = 0x2000, scoped, tag = 'output window, operand 0']
    #allocation3 [shape = 's32[2]{0}', space=sflag, size = 0x8, scoped, tag = 'scoped memory for tpu_custom_call.1']
    %17 = vsyncpa [#allocation3], 0
    %s18 = scalar_lea.sflag [#allocation3], 1
    %19 = vsyncpa %s18, 0
    loop: start=0, step=1, limit=4
    $region2: #{tpu_custom_call.1} parent=1 // loop_pre_header
      _
    $region3: #{tpu_custom_call.1} parent=1 // loop_header
      %s21 = sphi 0, %s25
      %p22 = scmp.ge.s32.totalorder %s21, 4
      %s31 = sphi 0, %s33
      %s34 = sphi 0, %s31
      %s35 = sphi 0, %s34
      %s51 = sphi 0, %s35
      %s57 = sphi 0, %s59
      %s60 = sphi 0, %s57
      %s61 = sphi 0, %s60
      %s77 = sphi 0, %s61
      %s81 = sphi 0, %s81
      %s83 = sphi 0, %s81
      %s84 = sphi 0, %s83
      %s98 = sphi 0, %s84
      %s102 = sphi 0, %s102
      %s104 = sphi 0, %s102
      %s105 = sphi 0, %s104
      %s119 = sphi 0, %s105
      %s123 = sphi 0, %s123
      %s125 = sphi 0, %s123
      %s126 = sphi 0, %s125
      %s140 = sphi 0, %s126
      %s144 = sphi 0, %s144
      %s146 = sphi 0, %s144
      %s147 = sphi 0, %s146
      %s161 = sphi 0, %s147
      %s165 = sphi 0, %s165
      %s167 = sphi 0, %s165
      %s168 = sphi 0, %s167
      %s182 = sphi 0, %s168
      %s186 = sphi 0, %s186
      %s188 = sphi 0, %s186
      %s189 = sphi 0, %s188
      %s203 = sphi 0, %s189
      %s207 = sphi 0, %s207
      %s209 = sphi 0, %s207
      %s210 = sphi 0, %s209
      %s224 = sphi 0, %s210
      %s228 = sphi 0, %s228
      %s230 = sphi 0, %s228
      %s231 = sphi 0, %s230
      %s245 = sphi 0, %s231
      %s249 = sphi 0, %s249
      %s251 = sphi 0, %s249
      %s252 = sphi 0, %s251
      %s266 = sphi 0, %s252
      %s270 = sphi 0, %s270
      %s272 = sphi 0, %s270
      %s273 = sphi 0, %s272
      %s287 = sphi 0, %s273
      %s293 = sphi 0, %s295
      %s296 = sphi 0, %s293
      %s297 = sphi 0, %s296
      %s313 = sphi 0, %s297
    $region4: #{tpu_custom_call.1} parent=1 // loop_header_branch
      %24 = sbr.rel (%p22) target = $region8
    $region5: #{tpu_custom_call.1} parent=1 // loop_body
      %s26 = ssub.s32 %s21, 1
      %s27 = ssub.s32 %s21, 2
      %s28 = sadd.s32 %s21, 1
      %s29 = ssub.s32 %s21, %s28
      %p30 = scmp.eq.s32.totalorder %s29, 0
      %s32 = sadd.s32 %s31, 1
      %s33 = scalar_select %p30, %s31, %s32
      %p36 = pneg %p30
      %p37 = scmp.eq.s32.totalorder %s21, 1
      %p38 = por %p36, %p37
      %p39 = scmp.ne.s32.totalorder %s31, %s34
      %p40 = scmp.eq.s32.totalorder %s21, 0
      %p41 = por %p39, %p40
      %p42 = scmp.ne.s32.totalorder %s31, %s34
      %p43 = scmp.eq.s32.totalorder %s26, 1
      %p44 = por %p42, %p43
      %p45 = scmp.ne.s32.totalorder %s34, %s35
      %p46 = scmp.eq.s32.totalorder %s26, 0
      %p47 = por %p45, %p46
      %p48 = scmp.ne.s32.totalorder %s34, %s35
      %p49 = scmp.eq.s32.totalorder %s27, 1
      %p50 = por %p48, %p49
      %p52 = scmp.ne.s32.totalorder %s35, %s51
      %p53 = scmp.eq.s32.totalorder %s27, 0
      %p54 = por %p52, %p53
      %s55 = ssub.s32 %s21, %s28
      %p56 = scmp.eq.s32.totalorder %s55, 0
      %s58 = sadd.s32 %s57, 1
      %s59 = scalar_select %p56, %s57, %s58
      %p62 = pneg %p56
      %p63 = scmp.eq.s32.totalorder %s21, 1
      %p64 = por %p62, %p63
      %p65 = scmp.ne.s32.totalorder %s57, %s60
      %p66 = scmp.eq.s32.totalorder %s21, 0
      %p67 = por %p65, %p66
      %p68 = scmp.ne.s32.totalorder %s57, %s60
      %p69 = scmp.eq.s32.totalorder %s26, 1
      %p70 = por %p68, %p69
      %p71 = scmp.ne.s32.totalorder %s60, %s61
      %p72 = scmp.eq.s32.totalorder %s26, 0
      %p73 = por %p71, %p72
      %p74 = scmp.ne.s32.totalorder %s60, %s61
      %p75 = scmp.eq.s32.totalorder %s27, 1
      %p76 = por %p74, %p75
      %p78 = scmp.ne.s32.totalorder %s61, %s77
      %p79 = scmp.eq.s32.totalorder %s27, 0
      %p80 = por %p78, %p79
      %s82 = sadd.s32 %s81, 1
      %p85 = scmp.eq.s32.totalorder %s21, 1
      %p86 = scmp.ne.s32.totalorder %s81, %s83
      %p87 = scmp.eq.s32.totalorder %s21, 0
      %p88 = por %p86, %p87
      %p89 = scmp.ne.s32.totalorder %s81, %s83
      %p90 = scmp.eq.s32.totalorder %s26, 1
      %p91 = por %p89, %p90
      %p92 = scmp.ne.s32.totalorder %s83, %s84
      %p93 = scmp.eq.s32.totalorder %s26, 0
      %p94 = por %p92, %p93
      %p95 = scmp.ne.s32.totalorder %s83, %s84
      %p96 = scmp.eq.s32.totalorder %s27, 1
      %p97 = por %p95, %p96
      %p99 = scmp.ne.s32.totalorder %s84, %s98
      %p100 = scmp.eq.s32.totalorder %s27, 0
      %p101 = por %p99, %p100
      %s103 = sadd.s32 %s102, 1
      %p106 = scmp.eq.s32.totalorder %s21, 1
      %p107 = scmp.ne.s32.totalorder %s102, %s104
      %p108 = scmp.eq.s32.totalorder %s21, 0
      %p109 = por %p107, %p108
      %p110 = scmp.ne.s32.totalorder %s102, %s104
      %p111 = scmp.eq.s32.totalorder %s26, 1
      %p112 = por %p110, %p111
      %p113 = scmp.ne.s32.totalorder %s104, %s105
      %p114 = scmp.eq.s32.totalorder %s26, 0
      %p115 = por %p113, %p114
      %p116 = scmp.ne.s32.totalorder %s104, %s105
      %p117 = scmp.eq.s32.totalorder %s27, 1
      %p118 = por %p116, %p117
      %p120 = scmp.ne.s32.totalorder %s105, %s119
      %p121 = scmp.eq.s32.totalorder %s27, 0
      %p122 = por %p120, %p121
      %s124 = sadd.s32 %s123, 1
      %p127 = scmp.eq.s32.totalorder %s21, 1
      %p128 = scmp.ne.s32.totalorder %s123, %s125
      %p129 = scmp.eq.s32.totalorder %s21, 0
      %p130 = por %p128, %p129
      %p131 = scmp.ne.s32.totalorder %s123, %s125
      %p132 = scmp.eq.s32.totalorder %s26, 1
      %p133 = por %p131, %p132
      %p134 = scmp.ne.s32.totalorder %s125, %s126
      %p135 = scmp.eq.s32.totalorder %s26, 0
      %p136 = por %p134, %p135
      %p137 = scmp.ne.s32.totalorder %s125, %s126
      %p138 = scmp.eq.s32.totalorder %s27, 1
      %p139 = por %p137, %p138
      %p141 = scmp.ne.s32.totalorder %s126, %s140
      %p142 = scmp.eq.s32.totalorder %s27, 0
      %p143 = por %p141, %p142
      %s145 = sadd.s32 %s144, 1
      %p148 = scmp.eq.s32.totalorder %s21, 1
      %p149 = scmp.ne.s32.totalorder %s144, %s146
      %p150 = scmp.eq.s32.totalorder %s21, 0
      %p151 = por %p149, %p150
      %p152 = scmp.ne.s32.totalorder %s144, %s146
      %p153 = scmp.eq.s32.totalorder %s26, 1
      %p154 = por %p152, %p153
      %p155 = scmp.ne.s32.totalorder %s146, %s147
      %p156 = scmp.eq.s32.totalorder %s26, 0
      %p157 = por %p155, %p156
      %p158 = scmp.ne.s32.totalorder %s146, %s147
      %p159 = scmp.eq.s32.totalorder %s27, 1
      %p160 = por %p158, %p159
      %p162 = scmp.ne.s32.totalorder %s147, %s161
      %p163 = scmp.eq.s32.totalorder %s27, 0
      %p164 = por %p162, %p163
      %s166 = sadd.s32 %s165, 1
      %p169 = scmp.eq.s32.totalorder %s21, 1
      %p170 = scmp.ne.s32.totalorder %s165, %s167
      %p171 = scmp.eq.s32.totalorder %s21, 0
      %p172 = por %p170, %p171
      %p173 = scmp.ne.s32.totalorder %s165, %s167
      %p174 = scmp.eq.s32.totalorder %s26, 1
      %p175 = por %p173, %p174
      %p176 = scmp.ne.s32.totalorder %s167, %s168
      %p177 = scmp.eq.s32.totalorder %s26, 0
      %p178 = por %p176, %p177
      %p179 = scmp.ne.s32.totalorder %s167, %s168
      %p180 = scmp.eq.s32.totalorder %s27, 1
      %p181 = por %p179, %p180
      %p183 = scmp.ne.s32.totalorder %s168, %s182
      %p184 = scmp.eq.s32.totalorder %s27, 0
      %p185 = por %p183, %p184
      %s187 = sadd.s32 %s186, 1
      %p190 = scmp.eq.s32.totalorder %s21, 1
      %p191 = scmp.ne.s32.totalorder %s186, %s188
      %p192 = scmp.eq.s32.totalorder %s21, 0
      %p193 = por %p191, %p192
      %p194 = scmp.ne.s32.totalorder %s186, %s188
      %p195 = scmp.eq.s32.totalorder %s26, 1
      %p196 = por %p194, %p195
      %p197 = scmp.ne.s32.totalorder %s188, %s189
      %p198 = scmp.eq.s32.totalorder %s26, 0
      %p199 = por %p197, %p198
      %p200 = scmp.ne.s32.totalorder %s188, %s189
      %p201 = scmp.eq.s32.totalorder %s27, 1
      %p202 = por %p200, %p201
      %p204 = scmp.ne.s32.totalorder %s189, %s203
      %p205 = scmp.eq.s32.totalorder %s27, 0
      %p206 = por %p204, %p205
      %s208 = sadd.s32 %s207, 1
      %p211 = scmp.eq.s32.totalorder %s21, 1
      %p212 = scmp.ne.s32.totalorder %s207, %s209
      %p213 = scmp.eq.s32.totalorder %s21, 0
      %p214 = por %p212, %p213
      %p215 = scmp.ne.s32.totalorder %s207, %s209
      %p216 = scmp.eq.s32.totalorder %s26, 1
      %p217 = por %p215, %p216
      %p218 = scmp.ne.s32.totalorder %s209, %s210
      %p219 = scmp.eq.s32.totalorder %s26, 0
      %p220 = por %p218, %p219
      %p221 = scmp.ne.s32.totalorder %s209, %s210
      %p222 = scmp.eq.s32.totalorder %s27, 1
      %p223 = por %p221, %p222
      %p225 = scmp.ne.s32.totalorder %s210, %s224
      %p226 = scmp.eq.s32.totalorder %s27, 0
      %p227 = por %p225, %p226
      %s229 = sadd.s32 %s228, 1
      %p232 = scmp.eq.s32.totalorder %s21, 1
      %p233 = scmp.ne.s32.totalorder %s228, %s230
      %p234 = scmp.eq.s32.totalorder %s21, 0
      %p235 = por %p233, %p234
      %p236 = scmp.ne.s32.totalorder %s228, %s230
      %p237 = scmp.eq.s32.totalorder %s26, 1
      %p238 = por %p236, %p237
      %p239 = scmp.ne.s32.totalorder %s230, %s231
      %p240 = scmp.eq.s32.totalorder %s26, 0
      %p241 = por %p239, %p240
      %p242 = scmp.ne.s32.totalorder %s230, %s231
      %p243 = scmp.eq.s32.totalorder %s27, 1
      %p244 = por %p242, %p243
      %p246 = scmp.ne.s32.totalorder %s231, %s245
      %p247 = scmp.eq.s32.totalorder %s27, 0
      %p248 = por %p246, %p247
      %s250 = sadd.s32 %s249, 1
      %p253 = scmp.eq.s32.totalorder %s21, 1
      %p254 = scmp.ne.s32.totalorder %s249, %s251
      %p255 = scmp.eq.s32.totalorder %s21, 0
      %p256 = por %p254, %p255
      %p257 = scmp.ne.s32.totalorder %s249, %s251
      %p258 = scmp.eq.s32.totalorder %s26, 1
      %p259 = por %p257, %p258
      %p260 = scmp.ne.s32.totalorder %s251, %s252
      %p261 = scmp.eq.s32.totalorder %s26, 0
      %p262 = por %p260, %p261
      %p263 = scmp.ne.s32.totalorder %s251, %s252
      %p264 = scmp.eq.s32.totalorder %s27, 1
      %p265 = por %p263, %p264
      %p267 = scmp.ne.s32.totalorder %s252, %s266
      %p268 = scmp.eq.s32.totalorder %s27, 0
      %p269 = por %p267, %p268
      %s271 = sadd.s32 %s270, 1
      %p274 = scmp.eq.s32.totalorder %s21, 1
      %p275 = scmp.ne.s32.totalorder %s270, %s272
      %p276 = scmp.eq.s32.totalorder %s21, 0
      %p277 = por %p275, %p276
      %p278 = scmp.ne.s32.totalorder %s270, %s272
      %p279 = scmp.eq.s32.totalorder %s26, 1
      %p280 = por %p278, %p279
      %p281 = scmp.ne.s32.totalorder %s272, %s273
      %p282 = scmp.eq.s32.totalorder %s26, 0
      %p283 = por %p281, %p282
      %p284 = scmp.ne.s32.totalorder %s272, %s273
      %p285 = scmp.eq.s32.totalorder %s27, 1
      %p286 = por %p284, %p285
      %p288 = scmp.ne.s32.totalorder %s273, %s287
      %p289 = scmp.eq.s32.totalorder %s27, 0
      %p290 = por %p288, %p289
      %s291 = ssub.s32 %s21, %s28
      %p292 = scmp.eq.s32.totalorder %s291, 0
      %s294 = sadd.s32 %s293, 1
      %s295 = scalar_select %p292, %s293, %s294
      %p298 = pneg %p292
      %p299 = scmp.eq.s32.totalorder %s21, 1
      %p300 = por %p298, %p299
      %p301 = scmp.ne.s32.totalorder %s293, %s296
      %p302 = scmp.eq.s32.totalorder %s21, 0
      %p303 = por %p301, %p302
      %p304 = scmp.ne.s32.totalorder %s293, %s296
      %p305 = scmp.eq.s32.totalorder %s26, 1
      %p306 = por %p304, %p305
      %p307 = scmp.ne.s32.totalorder %s296, %s297
      %p308 = scmp.eq.s32.totalorder %s26, 0
      %p309 = por %p307, %p308
      %p310 = scmp.ne.s32.totalorder %s296, %s297
      %p311 = scmp.eq.s32.totalorder %s27, 1
      %p312 = por %p310, %p311
      %p314 = scmp.ne.s32.totalorder %s297, %s313
      %p315 = scmp.eq.s32.totalorder %s27, 0
      %p316 = por %p314, %p315
      %p317 = scmp.le.s32.totalorder 1, %s21
      %p318 = scmp.lt.s32.totalorder %s21, 3
      %p319 = pnand %p317, %p318
      %p320 = pneg %p319
      // Predicated region
      $region9: #{tpu_custom_call.1} parent=5 // pred_check
        _
      $region10: #{tpu_custom_call.1} parent=5 // pred_check_branch
        %322 = sbr.rel (%p319) target = $region12
      $region11: #{tpu_custom_call.1} parent=5 // pred_region
        %s323 = ssub.s32 %s21, 1
        // Predicated region
        $region13: #{tpu_custom_call.1} parent=11 // pred_check
          %p324 = pneg %p94
        $region14: #{tpu_custom_call.1} parent=11 // pred_check_branch
          %326 = sbr.rel (%p324) target = $region16
        $region15: #{tpu_custom_call.1} parent=11 // pred_region
          _
        $region16: #{tpu_custom_call.1} parent=11 // pred_fallthru
          _
        // Predicated region
        $region17: #{tpu_custom_call.1} parent=11 // pred_check
          %p327 = pneg %p115
        $region18: #{tpu_custom_call.1} parent=11 // pred_check_branch
          %329 = sbr.rel (%p327) target = $region20
        $region19: #{tpu_custom_call.1} parent=11 // pred_region
          _
        $region20: #{tpu_custom_call.1} parent=11 // pred_fallthru
          _
        // Predicated region
        $region21: #{tpu_custom_call.1} parent=11 // pred_check
          %p330 = pneg %p136
        $region22: #{tpu_custom_call.1} parent=11 // pred_check_branch
          %332 = sbr.rel (%p330) target = $region24
        $region23: #{tpu_custom_call.1} parent=11 // pred_region
          _
        $region24: #{tpu_custom_call.1} parent=11 // pred_fallthru
          _
        // Predicated region
        $region25: #{tpu_custom_call.1} parent=11 // pred_check
          %p333 = pneg %p157
        $region26: #{tpu_custom_call.1} parent=11 // pred_check_branch
          %335 = sbr.rel (%p333) target = $region28
        $region27: #{tpu_custom_call.1} parent=11 // pred_region
          _
        $region28: #{tpu_custom_call.1} parent=11 // pred_fallthru
          _
        // Predicated region
        $region29: #{tpu_custom_call.1} parent=11 // pred_check
          %p336 = pneg %p178
        $region30: #{tpu_custom_call.1} parent=11 // pred_check_branch
          %338 = sbr.rel (%p336) target = $region32
        $region31: #{tpu_custom_call.1} parent=11 // pred_region
          _
        $region32: #{tpu_custom_call.1} parent=11 // pred_fallthru
          _
        // Predicated region
        $region33: #{tpu_custom_call.1} parent=11 // pred_check
          %p339 = pneg %p199
        $region34: #{tpu_custom_call.1} parent=11 // pred_check_branch
          %341 = sbr.rel (%p339) target = $region36
        $region35: #{tpu_custom_call.1} parent=11 // pred_region
          _
        $region36: #{tpu_custom_call.1} parent=11 // pred_fallthru
          _
        // Predicated region
        $region37: #{tpu_custom_call.1} parent=11 // pred_check
          %p342 = pneg %p220
        $region38: #{tpu_custom_call.1} parent=11 // pred_check_branch
          %344 = sbr.rel (%p342) target = $region40
        $region39: #{tpu_custom_call.1} parent=11 // pred_region
          _
        $region40: #{tpu_custom_call.1} parent=11 // pred_fallthru
          _
        // Predicated region
        $region41: #{tpu_custom_call.1} parent=11 // pred_check
          %p345 = pneg %p241
        $region42: #{tpu_custom_call.1} parent=11 // pred_check_branch
          %347 = sbr.rel (%p345) target = $region44
        $region43: #{tpu_custom_call.1} parent=11 // pred_region
          _
        $region44: #{tpu_custom_call.1} parent=11 // pred_fallthru
          _
        // Predicated region
        $region45: #{tpu_custom_call.1} parent=11 // pred_check
          %p348 = pneg %p262
        $region46: #{tpu_custom_call.1} parent=11 // pred_check_branch
          %350 = sbr.rel (%p348) target = $region48
        $region47: #{tpu_custom_call.1} parent=11 // pred_region
          _
        $region48: #{tpu_custom_call.1} parent=11 // pred_fallthru
          _
        // Predicated region
        $region49: #{tpu_custom_call.1} parent=11 // pred_check
          %p351 = pneg %p283
        $region50: #{tpu_custom_call.1} parent=11 // pred_check_branch
          %353 = sbr.rel (%p351) target = $region52
        $region51: #{tpu_custom_call.1} parent=11 // pred_region
          _
        $region52: #{tpu_custom_call.1} parent=11 // pred_fallthru
          _
      $region12: #{tpu_custom_call.1} parent=5 // pred_fallthru
        _
      %p354 = scmp.lt.s32.totalorder %s21, 2
      // Predicated region
      $region53: #{tpu_custom_call.1} parent=5 // pred_check
        %p355 = pneg %p354
      $region54: #{tpu_custom_call.1} parent=5 // pred_check_branch
        %357 = sbr.rel (%p355) target = $region56
      $region55: #{tpu_custom_call.1} parent=5 // pred_region
        // Predicated region
        $region57: #{tpu_custom_call.1} parent=55 // pred_check
          %p358 = pneg %p41
        $region58: #{tpu_custom_call.1} parent=55 // pred_check_branch
          %360 = sbr.rel (%p358) target = $region60
        $region59: #{tpu_custom_call.1} parent=55 // pred_region
          %p361 = scmp.lt.s32.totalorder %s21, 1
          %s362 = scalar_select %p361, %s21, 1
          %s363 = smul.addr %s362, 8
          %s364 = scalar_lea.vmem %s0, %s363
        $region60: #{tpu_custom_call.1} parent=55 // pred_fallthru
          _
        // Predicated region
        $region61: #{tpu_custom_call.1} parent=55 // pred_check
          %p365 = pneg %p67
        $region62: #{tpu_custom_call.1} parent=55 // pred_check_branch
          %367 = sbr.rel (%p365) target = $region64
        $region63: #{tpu_custom_call.1} parent=55 // pred_region
          %p368 = scmp.lt.s32.totalorder %s21, 1
          %s369 = scalar_select %p368, %s21, 1
          %s370 = smul.addr %s369, 8
          %s371 = scalar_lea.vmem %s1, %s370
        $region64: #{tpu_custom_call.1} parent=55 // pred_fallthru
          _
      $region56: #{tpu_custom_call.1} parent=5 // pred_fallthru
        _
      %p372 = scmp.le.s32.totalorder 1, %s21
      %p373 = scmp.lt.s32.totalorder %s21, 3
      %p374 = pnand %p372, %p373
      %p375 = pneg %p374
      // Predicated region
      $region65: #{tpu_custom_call.1} parent=5 // pred_check
        _
      $region66: #{tpu_custom_call.1} parent=5 // pred_check_branch
        %377 = sbr.rel (%p374) target = $region68
      $region67: #{tpu_custom_call.1} parent=5 // pred_region
        %s378 = ssub.s32 %s21, 1
        %p379 = scmp.lt.s32.totalorder %s26, 1
        %s380 = scalar_select %p379, %s26, 1
        %s381 = smul.addr %s380, 8
        %s382 = scalar_lea.vmem %s0, %s381
        %p383 = pneg %p47
        %p384 = pneg %p44
        %p385 = scmp.lt.s32.totalorder %s26, 1
        %s386 = scalar_select %p385, %s26, 1
        %s387 = smul.addr %s386, 8
        %s388 = scalar_lea.vmem %s1, %s387
        %p389 = pneg %p73
        %p390 = pneg %p70
        %p391 = pneg %p94
        %p392 = pneg %p91
        %p393 = pneg %p115
        %p394 = pneg %p112
        %p395 = pneg %p136
        %p396 = pneg %p133
        %p397 = pneg %p157
        %p398 = pneg %p154
        %p399 = pneg %p178
        %p400 = pneg %p175
        %p401 = pneg %p199
        %p402 = pneg %p196
        %p403 = pneg %p220
        %p404 = pneg %p217
        %p405 = pneg %p241
        %p406 = pneg %p238
        %p407 = pneg %p262
        %p408 = pneg %p259
        %p409 = pneg %p283
        %p410 = pneg %p280
        %p411 = pneg %p309
        %p412 = pneg %p306
        %s413 = sand.u32 %s296, 1
        %s414 = scalar_lea.sflag [#allocation3], %s413
        %s415 = sand.u32 %s296, 1
        %s416 = smul.addr %s415, 8
        %s417 = scalar_lea.vmem [#allocation2], %s416
        %p418 = scmp.lt.s32.totalorder %s26, 1
        %s419 = scalar_select %p418, %s26, 1
        %s420 = smul.addr %s419, 8
        %s421 = scalar_lea.vmem %s0, %s420
        %p422 = scmp.lt.s32.totalorder %s26, 1
        %s423 = scalar_select %p422, %s26, 1
        %s424 = smul.addr %s423, 8
        %s425 = scalar_lea.vmem %s1, %s424
        %v427 = vld [vmem:[%s425] sm:$0xff]
        %v428 = vld [vmem:[%s421] sm:$0xff]
        %v429 = vlaneseq
        %v430 = vand.u32 %v429, 127
        %v431 = vadd.s32 %v430, 128
        %v432 = vadd.s32 %v430, 256
        %v433 = vadd.s32 %v430, 384
        %v434 = vadd.s32 %v430, 512
        %v435 = vadd.s32 %v430, 640
        %v436 = vadd.s32 %v430, 768
        %v437 = vadd.s32 %v430, 896
        %438 = vset.pattern.permute.xlu0 0
        %439 = vperm.xlu0 %438, %v428
        %v440 = vpop.permute.xlu0 %439
        %vm441 = vcmp.eq.s32.totalorder %v430, %v440
        %vm442 = vcmp.eq.s32.totalorder %v431, %v440
        %vm443 = vcmp.eq.s32.totalorder %v432, %v440
        %vm444 = vcmp.eq.s32.totalorder %v433, %v440
        %vm445 = vcmp.eq.s32.totalorder %v434, %v440
        %vm446 = vcmp.eq.s32.totalorder %v435, %v440
        %vm447 = vcmp.eq.s32.totalorder %v436, %v440
        %vm448 = vcmp.eq.s32.totalorder %v437, %v440
        %v449 = vsel %vm441, 1, 0
        %v450 = vsel %vm442, 1, 0
        %v451 = vsel %vm443, 1, 0
        %v452 = vsel %vm444, 1, 0
        %v453 = vsel %vm445, 1, 0
        %v454 = vsel %vm446, 1, 0
        %v455 = vsel %vm447, 1, 0
        %v456 = vsel %vm448, 1, 0
        %v457 = vcvt.s32.f32 %v449
        %v458 = vcvt.s32.f32 %v450
        %v459 = vcvt.s32.f32 %v451
        %v460 = vcvt.s32.f32 %v452
        %v461 = vcvt.s32.f32 %v453
        %v462 = vcvt.s32.f32 %v454
        %v463 = vcvt.s32.f32 %v455
        %v464 = vcvt.s32.f32 %v456
        %v465 = vpack.c.bf16 %v457, %v457
        %v466 = vpack.c.bf16 %v458, %v458
        %v467 = vpack.c.bf16 %v459, %v459
        %v468 = vpack.c.bf16 %v460, %v460
        %v469 = vpack.c.bf16 %v461, %v461
        %v470 = vpack.c.bf16 %v462, %v462
        %v471 = vpack.c.bf16 %v463, %v463
        %v472 = vpack.c.bf16 %v464, %v464
        %v473 = vld [vmem:[%s2] sm:$0xf]
        %v474 = vld [vmem:[%s2 + $0x4] sm:$0xf]
        %v475 = vld [vmem:[%s2 + $0x8] sm:$0xf]
        %v476 = vld [vmem:[%s2 + $0xc] sm:$0xf]
        %v477 = vld [vmem:[%s2 + $0x10] sm:$0xf]
        %v478 = vld [vmem:[%s2 + $0x14] sm:$0xf]
        %v479 = vld [vmem:[%s2 + $0x18] sm:$0xf]
        %v480 = vld [vmem:[%s2 + $0x1c] sm:$0xf]
        %v481 = vld [vmem:[%s2 + $0x20] sm:$0xf]
        %v482 = vld [vmem:[%s2 + $0x24] sm:$0xf]
        %v483 = vld [vmem:[%s2 + $0x28] sm:$0xf]
        %v484 = vld [vmem:[%s2 + $0x2c] sm:$0xf]
        %v485 = vld [vmem:[%s2 + $0x30] sm:$0xf]
        %v486 = vld [vmem:[%s2 + $0x34] sm:$0xf]
        %v487 = vld [vmem:[%s2 + $0x38] sm:$0xf]
        %v488 = vld [vmem:[%s2 + $0x3c] sm:$0xf]
        %v489 = vld [vmem:[%s2 + $0x40] sm:$0xf]
        %v490 = vld [vmem:[%s2 + $0x44] sm:$0xf]
        %v491 = vld [vmem:[%s2 + $0x48] sm:$0xf]
        %v492 = vld [vmem:[%s2 + $0x4c] sm:$0xf]
        %v493 = vld [vmem:[%s2 + $0x50] sm:$0xf]
        %v494 = vld [vmem:[%s2 + $0x54] sm:$0xf]
        %v495 = vld [vmem:[%s2 + $0x58] sm:$0xf]
        %v496 = vld [vmem:[%s2 + $0x5c] sm:$0xf]
        %v497 = vld [vmem:[%s2 + $0x60] sm:$0xf]
        %v498 = vld [vmem:[%s2 + $0x64] sm:$0xf]
        %v499 = vld [vmem:[%s2 + $0x68] sm:$0xf]
        %v500 = vld [vmem:[%s2 + $0x6c] sm:$0xf]
        %v501 = vld [vmem:[%s2 + $0x70] sm:$0xf]
        %v502 = vld [vmem:[%s2 + $0x74] sm:$0xf]
        %v503 = vld [vmem:[%s2 + $0x78] sm:$0xf]
        %v504 = vld [vmem:[%s2 + $0x7c] sm:$0xf]
        %v505 = vld [vmem:[%s2 + $0x80] sm:$0xf]
        %v506 = vld [vmem:[%s2 + $0x84] sm:$0xf]
        %v507 = vld [vmem:[%s2 + $0x88] sm:$0xf]
        %v508 = vld [vmem:[%s2 + $0x8c] sm:$0xf]
        %v509 = vld [vmem:[%s2 + $0x90] sm:$0xf]
        %v510 = vld [vmem:[%s2 + $0x94] sm:$0xf]
        %v511 = vld [vmem:[%s2 + $0x98] sm:$0xf]
        %v512 = vld [vmem:[%s2 + $0x9c] sm:$0xf]
        %v513 = vld [vmem:[%s2 + $0xa0] sm:$0xf]
        %v514 = vld [vmem:[%s2 + $0xa4] sm:$0xf]
        %v515 = vld [vmem:[%s2 + $0xa8] sm:$0xf]
        %v516 = vld [vmem:[%s2 + $0xac] sm:$0xf]
        %v517 = vld [vmem:[%s2 + $0xb0] sm:$0xf]
        %v518 = vld [vmem:[%s2 + $0xb4] sm:$0xf]
        %v519 = vld [vmem:[%s2 + $0xb8] sm:$0xf]
        %v520 = vld [vmem:[%s2 + $0xbc] sm:$0xf]
        %v521 = vld [vmem:[%s2 + $0xc0] sm:$0xf]
        %v522 = vld [vmem:[%s2 + $0xc4] sm:$0xf]
        %v523 = vld [vmem:[%s2 + $0xc8] sm:$0xf]
        %v524 = vld [vmem:[%s2 + $0xcc] sm:$0xf]
        %v525 = vld [vmem:[%s2 + $0xd0] sm:$0xf]
        %v526 = vld [vmem:[%s2 + $0xd4] sm:$0xf]
        %v527 = vld [vmem:[%s2 + $0xd8] sm:$0xf]
        %v528 = vld [vmem:[%s2 + $0xdc] sm:$0xf]
        %v529 = vld [vmem:[%s2 + $0xe0] sm:$0xf]
        %v530 = vld [vmem:[%s2 + $0xe4] sm:$0xf]
        %v531 = vld [vmem:[%s2 + $0xe8] sm:$0xf]
        %v532 = vld [vmem:[%s2 + $0xec] sm:$0xf]
        %v533 = vld [vmem:[%s2 + $0xf0] sm:$0xf]
        %v534 = vld [vmem:[%s2 + $0xf4] sm:$0xf]
        %v535 = vld [vmem:[%s2 + $0xf8] sm:$0xf]
        %v536 = vld [vmem:[%s2 + $0xfc] sm:$0xf]
        %v537 = vld [vmem:[%s2 + $0x100] sm:$0xf]
        %v538 = vld [vmem:[%s2 + $0x104] sm:$0xf]
        %v539 = vld [vmem:[%s2 + $0x108] sm:$0xf]
        %v540 = vld [vmem:[%s2 + $0x10c] sm:$0xf]
        %v541 = vld [vmem:[%s2 + $0x110] sm:$0xf]
        %v542 = vld [vmem:[%s2 + $0x114] sm:$0xf]
        %v543 = vld [vmem:[%s2 + $0x118] sm:$0xf]
        %v544 = vld [vmem:[%s2 + $0x11c] sm:$0xf]
        %v545 = vld [vmem:[%s2 + $0x120] sm:$0xf]
        %v546 = vld [vmem:[%s2 + $0x124] sm:$0xf]
        %v547 = vld [vmem:[%s2 + $0x128] sm:$0xf]
        %v548 = vld [vmem:[%s2 + $0x12c] sm:$0xf]
        %v549 = vld [vmem:[%s2 + $0x130] sm:$0xf]
        %v550 = vld [vmem:[%s2 + $0x134] sm:$0xf]
        %v551 = vld [vmem:[%s2 + $0x138] sm:$0xf]
        %v552 = vld [vmem:[%s2 + $0x13c] sm:$0xf]
        %v553 = vld [vmem:[%s2 + $0x140] sm:$0xf]
        %v554 = vld [vmem:[%s2 + $0x144] sm:$0xf]
        %v555 = vld [vmem:[%s2 + $0x148] sm:$0xf]
        %v556 = vld [vmem:[%s2 + $0x14c] sm:$0xf]
        %v557 = vld [vmem:[%s2 + $0x150] sm:$0xf]
        %v558 = vld [vmem:[%s2 + $0x154] sm:$0xf]
        %v559 = vld [vmem:[%s2 + $0x158] sm:$0xf]
        %v560 = vld [vmem:[%s2 + $0x15c] sm:$0xf]
        %v561 = vld [vmem:[%s2 + $0x160] sm:$0xf]
        %v562 = vld [vmem:[%s2 + $0x164] sm:$0xf]
        %v563 = vld [vmem:[%s2 + $0x168] sm:$0xf]
        %v564 = vld [vmem:[%s2 + $0x16c] sm:$0xf]
        %v565 = vld [vmem:[%s2 + $0x170] sm:$0xf]
        %v566 = vld [vmem:[%s2 + $0x174] sm:$0xf]
        %v567 = vld [vmem:[%s2 + $0x178] sm:$0xf]
        %v568 = vld [vmem:[%s2 + $0x17c] sm:$0xf]
        %v569 = vld [vmem:[%s2 + $0x180] sm:$0xf]
        %v570 = vld [vmem:[%s2 + $0x184] sm:$0xf]
        %v571 = vld [vmem:[%s2 + $0x188] sm:$0xf]
        %v572 = vld [vmem:[%s2 + $0x18c] sm:$0xf]
        %v573 = vld [vmem:[%s2 + $0x190] sm:$0xf]
        %v574 = vld [vmem:[%s2 + $0x194] sm:$0xf]
        %v575 = vld [vmem:[%s2 + $0x198] sm:$0xf]
        %v576 = vld [vmem:[%s2 + $0x19c] sm:$0xf]
        %v577 = vld [vmem:[%s2 + $0x1a0] sm:$0xf]
        %v578 = vld [vmem:[%s2 + $0x1a4] sm:$0xf]
        %v579 = vld [vmem:[%s2 + $0x1a8] sm:$0xf]
        %v580 = vld [vmem:[%s2 + $0x1ac] sm:$0xf]
        %v581 = vld [vmem:[%s2 + $0x1b0] sm:$0xf]
        %v582 = vld [vmem:[%s2 + $0x1b4] sm:$0xf]
        %v583 = vld [vmem:[%s2 + $0x1b8] sm:$0xf]
        %v584 = vld [vmem:[%s2 + $0x1bc] sm:$0xf]
        %v585 = vld [vmem:[%s2 + $0x1c0] sm:$0xf]
        %v586 = vld [vmem:[%s2 + $0x1c4] sm:$0xf]
        %v587 = vld [vmem:[%s2 + $0x1c8] sm:$0xf]
        %v588 = vld [vmem:[%s2 + $0x1cc] sm:$0xf]
        %v589 = vld [vmem:[%s2 + $0x1d0] sm:$0xf]
        %v590 = vld [vmem:[%s2 + $0x1d4] sm:$0xf]
        %v591 = vld [vmem:[%s2 + $0x1d8] sm:$0xf]
        %v592 = vld [vmem:[%s2 + $0x1dc] sm:$0xf]
        %v593 = vld [vmem:[%s2 + $0x1e0] sm:$0xf]
        %v594 = vld [vmem:[%s2 + $0x1e4] sm:$0xf]
        %v595 = vld [vmem:[%s2 + $0x1e8] sm:$0xf]
        %v596 = vld [vmem:[%s2 + $0x1ec] sm:$0xf]
        %v597 = vld [vmem:[%s2 + $0x1f0] sm:$0xf]
        %v598 = vld [vmem:[%s2 + $0x1f4] sm:$0xf]
        %v599 = vld [vmem:[%s2 + $0x1f8] sm:$0xf]
        %v600 = vld [vmem:[%s2 + $0x1fc] sm:$0xf]
        %v729 = vunpack.c.l.b16 %v473
        %v730 = vunpack.c.l.b16 %v474
        %v731 = vunpack.c.l.b16 %v475
        %v732 = vunpack.c.l.b16 %v476
        %v733 = vunpack.c.l.b16 %v477
        %v734 = vunpack.c.l.b16 %v478
        %v735 = vunpack.c.l.b16 %v479
        %v736 = vunpack.c.l.b16 %v480
        %v737 = vunpack.c.l.b16 %v481
        %v738 = vunpack.c.l.b16 %v482
        %v739 = vunpack.c.l.b16 %v483
        %v740 = vunpack.c.l.b16 %v484
        %v741 = vunpack.c.l.b16 %v485
        %v742 = vunpack.c.l.b16 %v486
        %v743 = vunpack.c.l.b16 %v487
        %v744 = vunpack.c.l.b16 %v488
        %v745 = vunpack.c.l.b16 %v489
        %v746 = vunpack.c.l.b16 %v490
        %v747 = vunpack.c.l.b16 %v491
        %v748 = vunpack.c.l.b16 %v492
        %v749 = vunpack.c.l.b16 %v493
        %v750 = vunpack.c.l.b16 %v494
        %v751 = vunpack.c.l.b16 %v495
        %v752 = vunpack.c.l.b16 %v496
        %v753 = vunpack.c.l.b16 %v497
        %v754 = vunpack.c.l.b16 %v498
        %v755 = vunpack.c.l.b16 %v499
        %v756 = vunpack.c.l.b16 %v500
        %v757 = vunpack.c.l.b16 %v501
        %v758 = vunpack.c.l.b16 %v502
        %v759 = vunpack.c.l.b16 %v503
        %v760 = vunpack.c.l.b16 %v504
        %v761 = vunpack.c.l.b16 %v505
        %v762 = vunpack.c.l.b16 %v506
        %v763 = vunpack.c.l.b16 %v507
        %v764 = vunpack.c.l.b16 %v508
        %v765 = vunpack.c.l.b16 %v509
        %v766 = vunpack.c.l.b16 %v510
        %v767 = vunpack.c.l.b16 %v511
        %v768 = vunpack.c.l.b16 %v512
        %v769 = vunpack.c.l.b16 %v513
        %v770 = vunpack.c.l.b16 %v514
        %v771 = vunpack.c.l.b16 %v515
        %v772 = vunpack.c.l.b16 %v516
        %v773 = vunpack.c.l.b16 %v517
        %v774 = vunpack.c.l.b16 %v518
        %v775 = vunpack.c.l.b16 %v519
        %v776 = vunpack.c.l.b16 %v520
        %v777 = vunpack.c.l.b16 %v521
        %v778 = vunpack.c.l.b16 %v522
        %v779 = vunpack.c.l.b16 %v523
        %v780 = vunpack.c.l.b16 %v524
        %v781 = vunpack.c.l.b16 %v525
        %v782 = vunpack.c.l.b16 %v526
        %v783 = vunpack.c.l.b16 %v527
        %v784 = vunpack.c.l.b16 %v528
        %v785 = vunpack.c.l.b16 %v529
        %v786 = vunpack.c.l.b16 %v530
        %v787 = vunpack.c.l.b16 %v531
        %v788 = vunpack.c.l.b16 %v532
        %v789 = vunpack.c.l.b16 %v533
        %v790 = vunpack.c.l.b16 %v534
        %v791 = vunpack.c.l.b16 %v535
        %v792 = vunpack.c.l.b16 %v536
        %v793 = vunpack.c.l.b16 %v537
        %v794 = vunpack.c.l.b16 %v538
        %v795 = vunpack.c.l.b16 %v539
        %v796 = vunpack.c.l.b16 %v540
        %v797 = vunpack.c.l.b16 %v541
        %v798 = vunpack.c.l.b16 %v542
        %v799 = vunpack.c.l.b16 %v543
        %v800 = vunpack.c.l.b16 %v544
        %v801 = vunpack.c.l.b16 %v545
        %v802 = vunpack.c.l.b16 %v546
        %v803 = vunpack.c.l.b16 %v547
        %v804 = vunpack.c.l.b16 %v548
        %v805 = vunpack.c.l.b16 %v549
        %v806 = vunpack.c.l.b16 %v550
        %v807 = vunpack.c.l.b16 %v551
        %v808 = vunpack.c.l.b16 %v552
        %v809 = vunpack.c.l.b16 %v553
        %v810 = vunpack.c.l.b16 %v554
        %v811 = vunpack.c.l.b16 %v555
        %v812 = vunpack.c.l.b16 %v556
        %v813 = vunpack.c.l.b16 %v557
        %v814 = vunpack.c.l.b16 %v558
        %v815 = vunpack.c.l.b16 %v559
        %v816 = vunpack.c.l.b16 %v560
        %v817 = vunpack.c.l.b16 %v561
        %v818 = vunpack.c.l.b16 %v562
        %v819 = vunpack.c.l.b16 %v563
        %v820 = vunpack.c.l.b16 %v564
        %v821 = vunpack.c.l.b16 %v565
        %v822 = vunpack.c.l.b16 %v566
        %v823 = vunpack.c.l.b16 %v567
        %v824 = vunpack.c.l.b16 %v568
        %v825 = vunpack.c.l.b16 %v569
        %v826 = vunpack.c.l.b16 %v570
        %v827 = vunpack.c.l.b16 %v571
        %v828 = vunpack.c.l.b16 %v572
        %v829 = vunpack.c.l.b16 %v573
        %v830 = vunpack.c.l.b16 %v574
        %v831 = vunpack.c.l.b16 %v575
        %v832 = vunpack.c.l.b16 %v576
        %v833 = vunpack.c.l.b16 %v577
        %v834 = vunpack.c.l.b16 %v578
        %v835 = vunpack.c.l.b16 %v579
        %v836 = vunpack.c.l.b16 %v580
        %v837 = vunpack.c.l.b16 %v581
        %v838 = vunpack.c.l.b16 %v582
        %v839 = vunpack.c.l.b16 %v583
        %v840 = vunpack.c.l.b16 %v584
        %v841 = vunpack.c.l.b16 %v585
        %v842 = vunpack.c.l.b16 %v586
        %v843 = vunpack.c.l.b16 %v587
        %v844 = vunpack.c.l.b16 %v588
        %v845 = vunpack.c.l.b16 %v589
        %v846 = vunpack.c.l.b16 %v590
        %v847 = vunpack.c.l.b16 %v591
        %v848 = vunpack.c.l.b16 %v592
        %v849 = vunpack.c.l.b16 %v593
        %v850 = vunpack.c.l.b16 %v594
        %v851 = vunpack.c.l.b16 %v595
        %v852 = vunpack.c.l.b16 %v596
        %v853 = vunpack.c.l.b16 %v597
        %v854 = vunpack.c.l.b16 %v598
        %v855 = vunpack.c.l.b16 %v599
        %v856 = vunpack.c.l.b16 %v600
        %v857 = vpack.c.b16 %v730, %v729
        %v858 = vpack.c.b16 %v732, %v731
        %v859 = vpack.c.b16 %v734, %v733
        %v860 = vpack.c.b16 %v736, %v735
        %v861 = vpack.c.b16 %v738, %v737
        %v862 = vpack.c.b16 %v740, %v739
        %v863 = vpack.c.b16 %v742, %v741
        %v864 = vpack.c.b16 %v744, %v743
        %v865 = vpack.c.b16 %v746, %v745
        %v866 = vpack.c.b16 %v748, %v747
        %v867 = vpack.c.b16 %v750, %v749
        %v868 = vpack.c.b16 %v752, %v751
        %v869 = vpack.c.b16 %v754, %v753
        %v870 = vpack.c.b16 %v756, %v755
        %v871 = vpack.c.b16 %v758, %v757
        %v872 = vpack.c.b16 %v760, %v759
        %v873 = vpack.c.b16 %v762, %v761
        %v874 = vpack.c.b16 %v764, %v763
        %v875 = vpack.c.b16 %v766, %v765
        %v876 = vpack.c.b16 %v768, %v767
        %v877 = vpack.c.b16 %v770, %v769
        %v878 = vpack.c.b16 %v772, %v771
        %v879 = vpack.c.b16 %v774, %v773
        %v880 = vpack.c.b16 %v776, %v775
        %v881 = vpack.c.b16 %v778, %v777
        %v882 = vpack.c.b16 %v780, %v779
        %v883 = vpack.c.b16 %v782, %v781
        %v884 = vpack.c.b16 %v784, %v783
        %v885 = vpack.c.b16 %v786, %v785
        %v886 = vpack.c.b16 %v788, %v787
        %v887 = vpack.c.b16 %v790, %v789
        %v888 = vpack.c.b16 %v792, %v791
        %v889 = vpack.c.b16 %v794, %v793
        %v890 = vpack.c.b16 %v796, %v795
        %v891 = vpack.c.b16 %v798, %v797
        %v892 = vpack.c.b16 %v800, %v799
        %v893 = vpack.c.b16 %v802, %v801
        %v894 = vpack.c.b16 %v804, %v803
        %v895 = vpack.c.b16 %v806, %v805
        %v896 = vpack.c.b16 %v808, %v807
        %v897 = vpack.c.b16 %v810, %v809
        %v898 = vpack.c.b16 %v812, %v811
        %v899 = vpack.c.b16 %v814, %v813
        %v900 = vpack.c.b16 %v816, %v815
        %v901 = vpack.c.b16 %v818, %v817
        %v902 = vpack.c.b16 %v820, %v819
        %v903 = vpack.c.b16 %v822, %v821
        %v904 = vpack.c.b16 %v824, %v823
        %v905 = vpack.c.b16 %v826, %v825
        %v906 = vpack.c.b16 %v828, %v827
        %v907 = vpack.c.b16 %v830, %v829
        %v908 = vpack.c.b16 %v832, %v831
        %v909 = vpack.c.b16 %v834, %v833
        %v910 = vpack.c.b16 %v836, %v835
        %v911 = vpack.c.b16 %v838, %v837
        %v912 = vpack.c.b16 %v840, %v839
        %v913 = vpack.c.b16 %v842, %v841
        %v914 = vpack.c.b16 %v844, %v843
        %v915 = vpack.c.b16 %v846, %v845
        %v916 = vpack.c.b16 %v848, %v847
        %v917 = vpack.c.b16 %v850, %v849
        %v918 = vpack.c.b16 %v852, %v851
        %v919 = vpack.c.b16 %v854, %v853
        %v920 = vpack.c.b16 %v856, %v855
        %985 = vmatprep.subr.bf16.mxu0 0
        %986 = vmatpush1.bf16.msra.mxu0 %v857
        %987 = vmatprep.subr.bf16.mxu0 0
        %988 = vmatpush1.bf16.msra.mxu0 %v858
        %989 = vmatprep.subr.bf16.mxu0 0
        %990 = vmatpush1.bf16.msra.mxu0 %v859
        %991 = vmatprep.subr.bf16.mxu0 0
        %992 = vmatpush1.bf16.msra.mxu0 %v860
        %993 = vmatprep.subr.bf16.mxu0 0
        %994 = vmatpush1.bf16.msra.mxu0 %v861
        %995 = vmatprep.subr.bf16.mxu0 0
        %996 = vmatpush1.bf16.msra.mxu0 %v862
        %997 = vmatprep.subr.bf16.mxu0 0
        %998 = vmatpush1.bf16.msra.mxu0 %v863
        %999 = vmatprep.subr.bf16.mxu0 0
        %1000 = vmatpush1.bf16.msra.mxu0 %v864
        %1001 = vmatprep.subr.bf16.mxu0 0
        %1002 = vmatpush1.bf16.msra.mxu0 %v865
        %1003 = vmatprep.subr.bf16.mxu0 0
        %1004 = vmatpush1.bf16.msra.mxu0 %v866
        %1005 = vmatprep.subr.bf16.mxu0 0
        %1006 = vmatpush1.bf16.msra.mxu0 %v867
        %1007 = vmatprep.subr.bf16.mxu0 0
        %1008 = vmatpush1.bf16.msra.mxu0 %v868
        %1009 = vmatprep.subr.bf16.mxu0 0
        %1010 = vmatpush1.bf16.msra.mxu0 %v869
        %1011 = vmatprep.subr.bf16.mxu0 0
        %1012 = vmatpush1.bf16.msra.mxu0 %v870
        %1013 = vmatprep.subr.bf16.mxu0 0
        %1014 = vmatpush1.bf16.msra.mxu0 %v871
        %1015 = vmatprep.subr.bf16.mxu0 0
        %1016 = vmatpush1.bf16.msra.mxu0 %v872
        %1017 = vmatprep.mubr.bf16.mxu0 %v466
        %1018 = vmatmul.mubr.bf16.gmra.mrb[0].mxu0 %v465
        %v1019 = vpop.f32.mrb[0].mxu0
        %v1020 = vadd.f32 0.0, %v1019
        %v1021 = vpop.f32.mrb[0].mxu0
        %v1022 = vpop.f32.mrb[0].mxu0
        %v1023 = vpop.f32.mrb[0].mxu0
        %1024 = vdwg.mxu0
        %1025 = vmatprep.subr.bf16.mxu0 0
        %1026 = vmatpush1.bf16.msra.mxu0 %v873
        %1027 = vmatprep.subr.bf16.mxu0 0
        %1028 = vmatpush1.bf16.msra.mxu0 %v874
        %1029 = vmatprep.subr.bf16.mxu0 0
        %1030 = vmatpush1.bf16.msra.mxu0 %v875
        %1031 = vmatprep.subr.bf16.mxu0 0
        %1032 = vmatpush1.bf16.msra.mxu0 %v876
        %1033 = vmatprep.subr.bf16.mxu0 0
        %1034 = vmatpush1.bf16.msra.mxu0 %v877
        %1035 = vmatprep.subr.bf16.mxu0 0
        %1036 = vmatpush1.bf16.msra.mxu0 %v878
        %1037 = vmatprep.subr.bf16.mxu0 0
        %1038 = vmatpush1.bf16.msra.mxu0 %v879
        %1039 = vmatprep.subr.bf16.mxu0 0
        %1040 = vmatpush1.bf16.msra.mxu0 %v880
        %1041 = vmatprep.subr.bf16.mxu0 0
        %1042 = vmatpush1.bf16.msra.mxu0 %v881
        %1043 = vmatprep.subr.bf16.mxu0 0
        %1044 = vmatpush1.bf16.msra.mxu0 %v882
        %1045 = vmatprep.subr.bf16.mxu0 0
        %1046 = vmatpush1.bf16.msra.mxu0 %v883
        %1047 = vmatprep.subr.bf16.mxu0 0
        %1048 = vmatpush1.bf16.msra.mxu0 %v884
        %1049 = vmatprep.subr.bf16.mxu0 0
        %1050 = vmatpush1.bf16.msra.mxu0 %v885
        %1051 = vmatprep.subr.bf16.mxu0 0
        %1052 = vmatpush1.bf16.msra.mxu0 %v886
        %1053 = vmatprep.subr.bf16.mxu0 0
        %1054 = vmatpush1.bf16.msra.mxu0 %v887
        %1055 = vmatprep.subr.bf16.mxu0 0
        %1056 = vmatpush1.bf16.msra.mxu0 %v888
        %1057 = vmatprep.mubr.bf16.mxu0 %v468
        %1058 = vmatmul.mubr.bf16.gmra.mrb[0].mxu0 %v467
        %v1059 = vpop.f32.mrb[0].mxu0
        %v1060 = vadd.f32 %v1020, %v1059
        %v1061 = vpop.f32.mrb[0].mxu0
        %v1062 = vpop.f32.mrb[0].mxu0
        %v1063 = vpop.f32.mrb[0].mxu0
        %1064 = vdwg.mxu0
        %1065 = vmatprep.subr.bf16.mxu0 0
        %1066 = vmatpush1.bf16.msra.mxu0 %v889
        %1067 = vmatprep.subr.bf16.mxu0 0
        %1068 = vmatpush1.bf16.msra.mxu0 %v890
        %1069 = vmatprep.subr.bf16.mxu0 0
        %1070 = vmatpush1.bf16.msra.mxu0 %v891
        %1071 = vmatprep.subr.bf16.mxu0 0
        %1072 = vmatpush1.bf16.msra.mxu0 %v892
        %1073 = vmatprep.subr.bf16.mxu0 0
        %1074 = vmatpush1.bf16.msra.mxu0 %v893
        %1075 = vmatprep.subr.bf16.mxu0 0
        %1076 = vmatpush1.bf16.msra.mxu0 %v894
        %1077 = vmatprep.subr.bf16.mxu0 0
        %1078 = vmatpush1.bf16.msra.mxu0 %v895
        %1079 = vmatprep.subr.bf16.mxu0 0
        %1080 = vmatpush1.bf16.msra.mxu0 %v896
        %1081 = vmatprep.subr.bf16.mxu0 0
        %1082 = vmatpush1.bf16.msra.mxu0 %v897
        %1083 = vmatprep.subr.bf16.mxu0 0
        %1084 = vmatpush1.bf16.msra.mxu0 %v898
        %1085 = vmatprep.subr.bf16.mxu0 0
        %1086 = vmatpush1.bf16.msra.mxu0 %v899
        %1087 = vmatprep.subr.bf16.mxu0 0
        %1088 = vmatpush1.bf16.msra.mxu0 %v900
        %1089 = vmatprep.subr.bf16.mxu0 0
        %1090 = vmatpush1.bf16.msra.mxu0 %v901
        %1091 = vmatprep.subr.bf16.mxu0 0
        %1092 = vmatpush1.bf16.msra.mxu0 %v902
        %1093 = vmatprep.subr.bf16.mxu0 0
        %1094 = vmatpush1.bf16.msra.mxu0 %v903
        %1095 = vmatprep.subr.bf16.mxu0 0
        %1096 = vmatpush1.bf16.msra.mxu0 %v904
        %1097 = vmatprep.mubr.bf16.mxu0 %v470
        %1098 = vmatmul.mubr.bf16.gmra.mrb[0].mxu0 %v469
        %v1099 = vpop.f32.mrb[0].mxu0
        %v1100 = vadd.f32 %v1060, %v1099
        %v1101 = vpop.f32.mrb[0].mxu0
        %v1102 = vpop.f32.mrb[0].mxu0
        %v1103 = vpop.f32.mrb[0].mxu0
        %1104 = vdwg.mxu0
        %1105 = vmatprep.subr.bf16.mxu0 0
        %1106 = vmatpush1.bf16.msra.mxu0 %v905
        %1107 = vmatprep.subr.bf16.mxu0 0
        %1108 = vmatpush1.bf16.msra.mxu0 %v906
        %1109 = vmatprep.subr.bf16.mxu0 0
        %1110 = vmatpush1.bf16.msra.mxu0 %v907
        %1111 = vmatprep.subr.bf16.mxu0 0
        %1112 = vmatpush1.bf16.msra.mxu0 %v908
        %1113 = vmatprep.subr.bf16.mxu0 0
        %1114 = vmatpush1.bf16.msra.mxu0 %v909
        %1115 = vmatprep.subr.bf16.mxu0 0
        %1116 = vmatpush1.bf16.msra.mxu0 %v910
        %1117 = vmatprep.subr.bf16.mxu0 0
        %1118 = vmatpush1.bf16.msra.mxu0 %v911
        %1119 = vmatprep.subr.bf16.mxu0 0
        %1120 = vmatpush1.bf16.msra.mxu0 %v912
        %1121 = vmatprep.subr.bf16.mxu0 0
        %1122 = vmatpush1.bf16.msra.mxu0 %v913
        %1123 = vmatprep.subr.bf16.mxu0 0
        %1124 = vmatpush1.bf16.msra.mxu0 %v914
        %1125 = vmatprep.subr.bf16.mxu0 0
        %1126 = vmatpush1.bf16.msra.mxu0 %v915
        %1127 = vmatprep.subr.bf16.mxu0 0
        %1128 = vmatpush1.bf16.msra.mxu0 %v916
        %1129 = vmatprep.subr.bf16.mxu0 0
        %1130 = vmatpush1.bf16.msra.mxu0 %v917
        %1131 = vmatprep.subr.bf16.mxu0 0
        %1132 = vmatpush1.bf16.msra.mxu0 %v918
        %1133 = vmatprep.subr.bf16.mxu0 0
        %1134 = vmatpush1.bf16.msra.mxu0 %v919
        %1135 = vmatprep.subr.bf16.mxu0 0
        %1136 = vmatpush1.bf16.msra.mxu0 %v920
        %1137 = vmatprep.mubr.bf16.mxu0 %v472
        %1138 = vmatmul.mubr.bf16.gmra.mrb[0].mxu0 %v471
        %v1139 = vpop.f32.mrb[0].mxu0
        %v1140 = vadd.f32 %v1100, %v1139
        %v1141 = vpop.f32.mrb[0].mxu0
        %v1142 = vpop.f32.mrb[0].mxu0
        %v1143 = vpop.f32.mrb[0].mxu0
        %1144 = vdwg.mxu0
        %v1145 = vadd.f32 %v427, %v1140
        %v1146 = vpack.c.bf16 %v1145, %v1145
        %v1147 = vld [vmem:[%s6] sm:$0x1]
        %v1148 = vld [vmem:[%s6 + $0x1] sm:$0x1]
        %v1149 = vld [vmem:[%s6 + $0x2] sm:$0x1]
        %v1150 = vld [vmem:[%s6 + $0x3] sm:$0x1]
        %v1151 = vld [vmem:[%s6 + $0x4] sm:$0x1]
        %v1152 = vld [vmem:[%s6 + $0x5] sm:$0x1]
        %v1153 = vld [vmem:[%s6 + $0x6] sm:$0x1]
        %v1154 = vld [vmem:[%s6 + $0x7] sm:$0x1]
        %s1155 = scalar_lea.vmem %s6, 8
        %v1156 = vld [vmem:[%s1155] sm:$0x1]
        %v1157 = vld [vmem:[%s1155 + $0x1] sm:$0x1]
        %v1158 = vld [vmem:[%s1155 + $0x2] sm:$0x1]
        %v1159 = vld [vmem:[%s1155 + $0x3] sm:$0x1]
        %v1160 = vld [vmem:[%s1155 + $0x4] sm:$0x1]
        %v1161 = vld [vmem:[%s1155 + $0x5] sm:$0x1]
        %v1162 = vld [vmem:[%s1155 + $0x6] sm:$0x1]
        %v1163 = vld [vmem:[%s1155 + $0x7] sm:$0x1]
        %s1164 = scalar_lea.vmem %s6, 16
        %v1165 = vld [vmem:[%s1164] sm:$0x1]
        %v1166 = vld [vmem:[%s1164 + $0x1] sm:$0x1]
        %v1167 = vld [vmem:[%s1164 + $0x2] sm:$0x1]
        %v1168 = vld [vmem:[%s1164 + $0x3] sm:$0x1]
        %v1169 = vld [vmem:[%s1164 + $0x4] sm:$0x1]
        %v1170 = vld [vmem:[%s1164 + $0x5] sm:$0x1]
        %v1171 = vld [vmem:[%s1164 + $0x6] sm:$0x1]
        %v1172 = vld [vmem:[%s1164 + $0x7] sm:$0x1]
        %v1173 = vld [vmem:[%s3] sm:$0xf]
        %v1174 = vld [vmem:[%s3 + $0x4] sm:$0xf]
        %v1175 = vld [vmem:[%s3 + $0x8] sm:$0xf]
        %v1176 = vld [vmem:[%s3 + $0xc] sm:$0xf]
        %v1177 = vld [vmem:[%s3 + $0x10] sm:$0xf]
        %v1178 = vld [vmem:[%s3 + $0x14] sm:$0xf]
        %v1179 = vld [vmem:[%s3 + $0x18] sm:$0xf]
        %v1180 = vld [vmem:[%s3 + $0x1c] sm:$0xf]
        %v1181 = vld [vmem:[%s3 + $0x20] sm:$0xf]
        %v1182 = vld [vmem:[%s3 + $0x24] sm:$0xf]
        %v1183 = vld [vmem:[%s3 + $0x28] sm:$0xf]
        %v1184 = vld [vmem:[%s3 + $0x2c] sm:$0xf]
        %v1185 = vld [vmem:[%s3 + $0x30] sm:$0xf]
        %v1186 = vld [vmem:[%s3 + $0x34] sm:$0xf]
        %v1187 = vld [vmem:[%s3 + $0x38] sm:$0xf]
        %v1188 = vld [vmem:[%s3 + $0x3c] sm:$0xf]
        %v1189 = vld [vmem:[%s3 + $0x40] sm:$0xf]
        %v1190 = vld [vmem:[%s3 + $0x44] sm:$0xf]
        %v1191 = vld [vmem:[%s3 + $0x48] sm:$0xf]
        %v1192 = vld [vmem:[%s3 + $0x4c] sm:$0xf]
        %v1193 = vld [vmem:[%s3 + $0x50] sm:$0xf]
        %v1194 = vld [vmem:[%s3 + $0x54] sm:$0xf]
        %v1195 = vld [vmem:[%s3 + $0x58] sm:$0xf]
        %v1196 = vld [vmem:[%s3 + $0x5c] sm:$0xf]
        %v1197 = vld [vmem:[%s3 + $0x60] sm:$0xf]
        %v1198 = vld [vmem:[%s3 + $0x64] sm:$0xf]
        %v1199 = vld [vmem:[%s3 + $0x68] sm:$0xf]
        %v1200 = vld [vmem:[%s3 + $0x6c] sm:$0xf]
        %v1201 = vld [vmem:[%s3 + $0x70] sm:$0xf]
        %v1202 = vld [vmem:[%s3 + $0x74] sm:$0xf]
        %v1203 = vld [vmem:[%s3 + $0x78] sm:$0xf]
        %v1204 = vld [vmem:[%s3 + $0x7c] sm:$0xf]
        %v1205 = vld [vmem:[%s3 + $0x80] sm:$0xf]
        %v1206 = vld [vmem:[%s3 + $0x84] sm:$0xf]
        %v1207 = vld [vmem:[%s3 + $0x88] sm:$0xf]
        %v1208 = vld [vmem:[%s3 + $0x8c] sm:$0xf]
        %v1209 = vld [vmem:[%s3 + $0x90] sm:$0xf]
        %v1210 = vld [vmem:[%s3 + $0x94] sm:$0xf]
        %v1211 = vld [vmem:[%s3 + $0x98] sm:$0xf]
        %v1212 = vld [vmem:[%s3 + $0x9c] sm:$0xf]
        %v1213 = vld [vmem:[%s3 + $0xa0] sm:$0xf]
        %v1214 = vld [vmem:[%s3 + $0xa4] sm:$0xf]
        %v1215 = vld [vmem:[%s3 + $0xa8] sm:$0xf]
        %v1216 = vld [vmem:[%s3 + $0xac] sm:$0xf]
        %v1217 = vld [vmem:[%s3 + $0xb0] sm:$0xf]
        %v1218 = vld [vmem:[%s3 + $0xb4] sm:$0xf]
        %v1219 = vld [vmem:[%s3 + $0xb8] sm:$0xf]
        %v1220 = vld [vmem:[%s3 + $0xbc] sm:$0xf]
        %v1221 = vld [vmem:[%s3 + $0xc0] sm:$0xf]
        %v1222 = vld [vmem:[%s3 + $0xc4] sm:$0xf]
        %v1223 = vld [vmem:[%s3 + $0xc8] sm:$0xf]
        %v1224 = vld [vmem:[%s3 + $0xcc] sm:$0xf]
        %v1225 = vld [vmem:[%s3 + $0xd0] sm:$0xf]
        %v1226 = vld [vmem:[%s3 + $0xd4] sm:$0xf]
        %v1227 = vld [vmem:[%s3 + $0xd8] sm:$0xf]
        %v1228 = vld [vmem:[%s3 + $0xdc] sm:$0xf]
        %v1229 = vld [vmem:[%s3 + $0xe0] sm:$0xf]
        %v1230 = vld [vmem:[%s3 + $0xe4] sm:$0xf]
        %v1231 = vld [vmem:[%s3 + $0xe8] sm:$0xf]
        %v1232 = vld [vmem:[%s3 + $0xec] sm:$0xf]
        %v1233 = vld [vmem:[%s3 + $0xf0] sm:$0xf]
        %v1234 = vld [vmem:[%s3 + $0xf4] sm:$0xf]
        %v1235 = vld [vmem:[%s3 + $0xf8] sm:$0xf]
        %v1236 = vld [vmem:[%s3 + $0xfc] sm:$0xf]
        %v1245 = vlaneseq
        %v1246 = vshrl.u32 %v1245, 7
        %v1247 = vsub.s32 0, %v1246
        %v1248 = vrot.slane %v1147, %v1247
        %v1249 = vlaneseq
        %v1250 = vshrl.u32 %v1249, 7
        %v1251 = vsub.s32 0, %v1250
        %v1252 = vrot.slane %v1148, %v1251
        %v1253 = vlaneseq
        %v1254 = vshrl.u32 %v1253, 7
        %v1255 = vsub.s32 0, %v1254
        %v1256 = vrot.slane %v1149, %v1255
        %v1257 = vlaneseq
        %v1258 = vshrl.u32 %v1257, 7
        %v1259 = vsub.s32 0, %v1258
        %v1260 = vrot.slane %v1150, %v1259
        %v1261 = vlaneseq
        %v1262 = vshrl.u32 %v1261, 7
        %v1263 = vsub.s32 0, %v1262
        %v1264 = vrot.slane %v1151, %v1263
        %v1265 = vlaneseq
        %v1266 = vshrl.u32 %v1265, 7
        %v1267 = vsub.s32 0, %v1266
        %v1268 = vrot.slane %v1152, %v1267
        %v1269 = vlaneseq
        %v1270 = vshrl.u32 %v1269, 7
        %v1271 = vsub.s32 0, %v1270
        %v1272 = vrot.slane %v1153, %v1271
        %v1273 = vlaneseq
        %v1274 = vshrl.u32 %v1273, 7
        %v1275 = vsub.s32 0, %v1274
        %v1276 = vrot.slane %v1154, %v1275
        %v1293 = vunpack.c.l.b16 %v1173
        %v1294 = vunpack.c.l.b16 %v1174
        %v1295 = vunpack.c.l.b16 %v1175
        %v1296 = vunpack.c.l.b16 %v1176
        %v1297 = vunpack.c.l.b16 %v1177
        %v1298 = vunpack.c.l.b16 %v1178
        %v1299 = vunpack.c.l.b16 %v1179
        %v1300 = vunpack.c.l.b16 %v1180
        %v1301 = vpack.c.b16 %v1294, %v1293
        %v1302 = vpack.c.b16 %v1296, %v1295
        %v1303 = vpack.c.b16 %v1298, %v1297
        %v1304 = vpack.c.b16 %v1300, %v1299
        %vm1309 = vcmask 523264
        %v1311 = vsel %vm1309, %v1146, 0
        %1313 = vmatprep.subr.bf16.mxu0 0
        %1314 = vmatpush1.bf16.msra.mxu0 %v1301
        %1315 = vmatprep.subr.bf16.mxu0 0
        %1316 = vmatpush1.bf16.msra.mxu0 %v1302
        %1317 = vmatprep.subr.bf16.mxu0 0
        %1318 = vmatpush1.bf16.msra.mxu0 %v1303
        %1319 = vmatprep.subr.bf16.mxu0 0
        %1320 = vmatpush1.bf16.msra.mxu0 %v1304
        %1321 = vmatprep.subr.bf16.mxu0 0
        %1322 = vmatpush1.bf16.msra.mxu0 0
        %1323 = vmatprep.subr.bf16.mxu0 0
        %1324 = vmatpush1.bf16.msra.mxu0 0
        %1325 = vmatprep.subr.bf16.mxu0 0
        %1326 = vmatpush1.bf16.msra.mxu0 0
        %1327 = vmatprep.subr.bf16.mxu0 0
        %1328 = vmatpush1.bf16.msra.mxu0 0
        %1329 = vmatprep.subr.bf16.mxu0 0
        %1330 = vmatpush1.bf16.msra.mxu0 0
        %1331 = vmatprep.subr.bf16.mxu0 0
        %1332 = vmatpush1.bf16.msra.mxu0 0
        %1333 = vmatprep.subr.bf16.mxu0 0
        %1334 = vmatpush1.bf16.msra.mxu0 0
        %1335 = vmatprep.subr.bf16.mxu0 0
        %1336 = vmatpush1.bf16.msra.mxu0 0
        %1337 = vmatprep.subr.bf16.mxu0 0
        %1338 = vmatpush1.bf16.msra.mxu0 0
        %1339 = vmatprep.subr.bf16.mxu0 0
        %1340 = vmatpush1.bf16.msra.mxu0 0
        %1341 = vmatprep.subr.bf16.mxu0 0
        %1342 = vmatpush1.bf16.msra.mxu0 0
        %1343 = vmatprep.subr.bf16.mxu0 0
        %1344 = vmatpush1.bf16.msra.mxu0 0
        %1345 = vmatprep.mubr.bf16.mxu0 0
        %1346 = vmatmul.mubr.bf16.gmra.mrb[0].mxu0 %v1311
        %v1347 = vpop.f32.mrb[0].mxu0
        %v1348 = vadd.f32 %v1248, %v1347
        %v1349 = vpop.f32.mrb[0].mxu0
        %v1350 = vpop.f32.mrb[0].mxu0
        %v1351 = vpop.f32.mrb[0].mxu0
        %1352 = vdwg.mxu0
        %v1361 = vunpack.c.l.b16 %v1181
        %v1362 = vunpack.c.l.b16 %v1182
        %v1363 = vunpack.c.l.b16 %v1183
        %v1364 = vunpack.c.l.b16 %v1184
        %v1365 = vunpack.c.l.b16 %v1185
        %v1366 = vunpack.c.l.b16 %v1186
        %v1367 = vunpack.c.l.b16 %v1187
        %v1368 = vunpack.c.l.b16 %v1188
        %v1369 = vpack.c.b16 %v1362, %v1361
        %v1370 = vpack.c.b16 %v1364, %v1363
        %v1371 = vpack.c.b16 %v1366, %v1365
        %v1372 = vpack.c.b16 %v1368, %v1367
        %1377 = vmatprep.subr.bf16.mxu0 0
        %1378 = vmatpush1.bf16.msra.mxu0 %v1369
        %1379 = vmatprep.subr.bf16.mxu0 0
        %1380 = vmatpush1.bf16.msra.mxu0 %v1370
        %1381 = vmatprep.subr.bf16.mxu0 0
        %1382 = vmatpush1.bf16.msra.mxu0 %v1371
        %1383 = vmatprep.subr.bf16.mxu0 0
        %1384 = vmatpush1.bf16.msra.mxu0 %v1372
        %1385 = vmatprep.subr.bf16.mxu0 0
        %1386 = vmatpush1.bf16.msra.mxu0 0
        %1387 = vmatprep.subr.bf16.mxu0 0
        %1388 = vmatpush1.bf16.msra.mxu0 0
        %1389 = vmatprep.subr.bf16.mxu0 0
        %1390 = vmatpush1.bf16.msra.mxu0 0
        %1391 = vmatprep.subr.bf16.mxu0 0
        %1392 = vmatpush1.bf16.msra.mxu0 0
        %1393 = vmatprep.subr.bf16.mxu0 0
        %1394 = vmatpush1.bf16.msra.mxu0 0
        %1395 = vmatprep.subr.bf16.mxu0 0
        %1396 = vmatpush1.bf16.msra.mxu0 0
        %1397 = vmatprep.subr.bf16.mxu0 0
        %1398 = vmatpush1.bf16.msra.mxu0 0
        %1399 = vmatprep.subr.bf16.mxu0 0
        %1400 = vmatpush1.bf16.msra.mxu0 0
        %1401 = vmatprep.subr.bf16.mxu0 0
        %1402 = vmatpush1.bf16.msra.mxu0 0
        %1403 = vmatprep.subr.bf16.mxu0 0
        %1404 = vmatpush1.bf16.msra.mxu0 0
        %1405 = vmatprep.subr.bf16.mxu0 0
        %1406 = vmatpush1.bf16.msra.mxu0 0
        %1407 = vmatprep.subr.bf16.mxu0 0
        %1408 = vmatpush1.bf16.msra.mxu0 0
        %1409 = vmatprep.mubr.bf16.mxu0 0
        %1410 = vmatmul.mubr.bf16.gmra.mrb[0].mxu0 %v1311
        %v1411 = vpop.f32.mrb[0].mxu0
        %v1412 = vadd.f32 %v1252, %v1411
        %v1413 = vpop.f32.mrb[0].mxu0
        %v1414 = vpop.f32.mrb[0].mxu0
        %v1415 = vpop.f32.mrb[0].mxu0
        %1416 = vdwg.mxu0
        %v1425 = vunpack.c.l.b16 %v1189
        %v1426 = vunpack.c.l.b16 %v1190
        %v1427 = vunpack.c.l.b16 %v1191
        %v1428 = vunpack.c.l.b16 %v1192
        %v1429 = vunpack.c.l.b16 %v1193
        %v1430 = vunpack.c.l.b16 %v1194
        %v1431 = vunpack.c.l.b16 %v1195
        %v1432 = vunpack.c.l.b16 %v1196
        %v1433 = vpack.c.b16 %v1426, %v1425
        %v1434 = vpack.c.b16 %v1428, %v1427
        %v1435 = vpack.c.b16 %v1430, %v1429
        %v1436 = vpack.c.b16 %v1432, %v1431
        %1441 = vmatprep.subr.bf16.mxu0 0
        %1442 = vmatpush1.bf16.msra.mxu0 %v1433
        %1443 = vmatprep.subr.bf16.mxu0 0
        %1444 = vmatpush1.bf16.msra.mxu0 %v1434
        %1445 = vmatprep.subr.bf16.mxu0 0
        %1446 = vmatpush1.bf16.msra.mxu0 %v1435
        %1447 = vmatprep.subr.bf16.mxu0 0
        %1448 = vmatpush1.bf16.msra.mxu0 %v1436
        %1449 = vmatprep.subr.bf16.mxu0 0
        %1450 = vmatpush1.bf16.msra.mxu0 0
        %1451 = vmatprep.subr.bf16.mxu0 0
        %1452 = vmatpush1.bf16.msra.mxu0 0
        %1453 = vmatprep.subr.bf16.mxu0 0
        %1454 = vmatpush1.bf16.msra.mxu0 0
        %1455 = vmatprep.subr.bf16.mxu0 0
        %1456 = vmatpush1.bf16.msra.mxu0 0
        %1457 = vmatprep.subr.bf16.mxu0 0
        %1458 = vmatpush1.bf16.msra.mxu0 0
        %1459 = vmatprep.subr.bf16.mxu0 0
        %1460 = vmatpush1.bf16.msra.mxu0 0
        %1461 = vmatprep.subr.bf16.mxu0 0
        %1462 = vmatpush1.bf16.msra.mxu0 0
        %1463 = vmatprep.subr.bf16.mxu0 0
        %1464 = vmatpush1.bf16.msra.mxu0 0
        %1465 = vmatprep.subr.bf16.mxu0 0
        %1466 = vmatpush1.bf16.msra.mxu0 0
        %1467 = vmatprep.subr.bf16.mxu0 0
        %1468 = vmatpush1.bf16.msra.mxu0 0
        %1469 = vmatprep.subr.bf16.mxu0 0
        %1470 = vmatpush1.bf16.msra.mxu0 0
        %1471 = vmatprep.subr.bf16.mxu0 0
        %1472 = vmatpush1.bf16.msra.mxu0 0
        %1473 = vmatprep.mubr.bf16.mxu0 0
        %1474 = vmatmul.mubr.bf16.gmra.mrb[0].mxu0 %v1311
        %v1475 = vpop.f32.mrb[0].mxu0
        %v1476 = vadd.f32 %v1256, %v1475
        %v1477 = vpop.f32.mrb[0].mxu0
        %v1478 = vpop.f32.mrb[0].mxu0
        %v1479 = vpop.f32.mrb[0].mxu0
        %1480 = vdwg.mxu0
        %v1489 = vunpack.c.l.b16 %v1197
        %v1490 = vunpack.c.l.b16 %v1198
        %v1491 = vunpack.c.l.b16 %v1199
        %v1492 = vunpack.c.l.b16 %v1200
        %v1493 = vunpack.c.l.b16 %v1201
        %v1494 = vunpack.c.l.b16 %v1202
        %v1495 = vunpack.c.l.b16 %v1203
        %v1496 = vunpack.c.l.b16 %v1204
        %v1497 = vpack.c.b16 %v1490, %v1489
        %v1498 = vpack.c.b16 %v1492, %v1491
        %v1499 = vpack.c.b16 %v1494, %v1493
        %v1500 = vpack.c.b16 %v1496, %v1495
        %1505 = vmatprep.subr.bf16.mxu0 0
        %1506 = vmatpush1.bf16.msra.mxu0 %v1497
        %1507 = vmatprep.subr.bf16.mxu0 0
        %1508 = vmatpush1.bf16.msra.mxu0 %v1498
        %1509 = vmatprep.subr.bf16.mxu0 0
        %1510 = vmatpush1.bf16.msra.mxu0 %v1499
        %1511 = vmatprep.subr.bf16.mxu0 0
        %1512 = vmatpush1.bf16.msra.mxu0 %v1500
        %1513 = vmatprep.subr.bf16.mxu0 0
        %1514 = vmatpush1.bf16.msra.mxu0 0
        %1515 = vmatprep.subr.bf16.mxu0 0
        %1516 = vmatpush1.bf16.msra.mxu0 0
        %1517 = vmatprep.subr.bf16.mxu0 0
        %1518 = vmatpush1.bf16.msra.mxu0 0
        %1519 = vmatprep.subr.bf16.mxu0 0
        %1520 = vmatpush1.bf16.msra.mxu0 0
        %1521 = vmatprep.subr.bf16.mxu0 0
        %1522 = vmatpush1.bf16.msra.mxu0 0
        %1523 = vmatprep.subr.bf16.mxu0 0
        %1524 = vmatpush1.bf16.msra.mxu0 0
        %1525 = vmatprep.subr.bf16.mxu0 0
        %1526 = vmatpush1.bf16.msra.mxu0 0
        %1527 = vmatprep.subr.bf16.mxu0 0
        %1528 = vmatpush1.bf16.msra.mxu0 0
        %1529 = vmatprep.subr.bf16.mxu0 0
        %1530 = vmatpush1.bf16.msra.mxu0 0
        %1531 = vmatprep.subr.bf16.mxu0 0
        %1532 = vmatpush1.bf16.msra.mxu0 0
        %1533 = vmatprep.subr.bf16.mxu0 0
        %1534 = vmatpush1.bf16.msra.mxu0 0
        %1535 = vmatprep.subr.bf16.mxu0 0
        %1536 = vmatpush1.bf16.msra.mxu0 0
        %1537 = vmatprep.mubr.bf16.mxu0 0
        %1538 = vmatmul.mubr.bf16.gmra.mrb[0].mxu0 %v1311
        %v1539 = vpop.f32.mrb[0].mxu0
        %v1540 = vadd.f32 %v1260, %v1539
        %v1541 = vpop.f32.mrb[0].mxu0
        %v1542 = vpop.f32.mrb[0].mxu0
        %v1543 = vpop.f32.mrb[0].mxu0
        %1544 = vdwg.mxu0
        %v1553 = vunpack.c.l.b16 %v1205
        %v1554 = vunpack.c.l.b16 %v1206
        %v1555 = vunpack.c.l.b16 %v1207
        %v1556 = vunpack.c.l.b16 %v1208
        %v1557 = vunpack.c.l.b16 %v1209
        %v1558 = vunpack.c.l.b16 %v1210
        %v1559 = vunpack.c.l.b16 %v1211
        %v1560 = vunpack.c.l.b16 %v1212
        %v1561 = vpack.c.b16 %v1554, %v1553
        %v1562 = vpack.c.b16 %v1556, %v1555
        %v1563 = vpack.c.b16 %v1558, %v1557
        %v1564 = vpack.c.b16 %v1560, %v1559
        %1569 = vmatprep.subr.bf16.mxu0 0
        %1570 = vmatpush1.bf16.msra.mxu0 %v1561
        %1571 = vmatprep.subr.bf16.mxu0 0
        %1572 = vmatpush1.bf16.msra.mxu0 %v1562
        %1573 = vmatprep.subr.bf16.mxu0 0
        %1574 = vmatpush1.bf16.msra.mxu0 %v1563
        %1575 = vmatprep.subr.bf16.mxu0 0
        %1576 = vmatpush1.bf16.msra.mxu0 %v1564
        %1577 = vmatprep.subr.bf16.mxu0 0
        %1578 = vmatpush1.bf16.msra.mxu0 0
        %1579 = vmatprep.subr.bf16.mxu0 0
        %1580 = vmatpush1.bf16.msra.mxu0 0
        %1581 = vmatprep.subr.bf16.mxu0 0
        %1582 = vmatpush1.bf16.msra.mxu0 0
        %1583 = vmatprep.subr.bf16.mxu0 0
        %1584 = vmatpush1.bf16.msra.mxu0 0
        %1585 = vmatprep.subr.bf16.mxu0 0
        %1586 = vmatpush1.bf16.msra.mxu0 0
        %1587 = vmatprep.subr.bf16.mxu0 0
        %1588 = vmatpush1.bf16.msra.mxu0 0
        %1589 = vmatprep.subr.bf16.mxu0 0
        %1590 = vmatpush1.bf16.msra.mxu0 0
        %1591 = vmatprep.subr.bf16.mxu0 0
        %1592 = vmatpush1.bf16.msra.mxu0 0
        %1593 = vmatprep.subr.bf16.mxu0 0
        %1594 = vmatpush1.bf16.msra.mxu0 0
        %1595 = vmatprep.subr.bf16.mxu0 0
        %1596 = vmatpush1.bf16.msra.mxu0 0
        %1597 = vmatprep.subr.bf16.mxu0 0
        %1598 = vmatpush1.bf16.msra.mxu0 0
        %1599 = vmatprep.subr.bf16.mxu0 0
        %1600 = vmatpush1.bf16.msra.mxu0 0
        %1601 = vmatprep.mubr.bf16.mxu0 0
        %1602 = vmatmul.mubr.bf16.gmra.mrb[0].mxu0 %v1311
        %v1603 = vpop.f32.mrb[0].mxu0
        %v1604 = vadd.f32 %v1264, %v1603
        %v1605 = vpop.f32.mrb[0].mxu0
        %v1606 = vpop.f32.mrb[0].mxu0
        %v1607 = vpop.f32.mrb[0].mxu0
        %1608 = vdwg.mxu0
        %v1617 = vunpack.c.l.b16 %v1213
        %v1618 = vunpack.c.l.b16 %v1214
        %v1619 = vunpack.c.l.b16 %v1215
        %v1620 = vunpack.c.l.b16 %v1216
        %v1621 = vunpack.c.l.b16 %v1217
        %v1622 = vunpack.c.l.b16 %v1218
        %v1623 = vunpack.c.l.b16 %v1219
        %v1624 = vunpack.c.l.b16 %v1220
        %v1625 = vpack.c.b16 %v1618, %v1617
        %v1626 = vpack.c.b16 %v1620, %v1619
        %v1627 = vpack.c.b16 %v1622, %v1621
        %v1628 = vpack.c.b16 %v1624, %v1623
        %1633 = vmatprep.subr.bf16.mxu0 0
        %1634 = vmatpush1.bf16.msra.mxu0 %v1625
        %1635 = vmatprep.subr.bf16.mxu0 0
        %1636 = vmatpush1.bf16.msra.mxu0 %v1626
        %1637 = vmatprep.subr.bf16.mxu0 0
        %1638 = vmatpush1.bf16.msra.mxu0 %v1627
        %1639 = vmatprep.subr.bf16.mxu0 0
        %1640 = vmatpush1.bf16.msra.mxu0 %v1628
        %1641 = vmatprep.subr.bf16.mxu0 0
        %1642 = vmatpush1.bf16.msra.mxu0 0
        %1643 = vmatprep.subr.bf16.mxu0 0
        %1644 = vmatpush1.bf16.msra.mxu0 0
        %1645 = vmatprep.subr.bf16.mxu0 0
        %1646 = vmatpush1.bf16.msra.mxu0 0
        %1647 = vmatprep.subr.bf16.mxu0 0
        %1648 = vmatpush1.bf16.msra.mxu0 0
        %1649 = vmatprep.subr.bf16.mxu0 0
        %1650 = vmatpush1.bf16.msra.mxu0 0
        %1651 = vmatprep.subr.bf16.mxu0 0
        %1652 = vmatpush1.bf16.msra.mxu0 0
        %1653 = vmatprep.subr.bf16.mxu0 0
        %1654 = vmatpush1.bf16.msra.mxu0 0
        %1655 = vmatprep.subr.bf16.mxu0 0
        %1656 = vmatpush1.bf16.msra.mxu0 0
        %1657 = vmatprep.subr.bf16.mxu0 0
        %1658 = vmatpush1.bf16.msra.mxu0 0
        %1659 = vmatprep.subr.bf16.mxu0 0
        %1660 = vmatpush1.bf16.msra.mxu0 0
        %1661 = vmatprep.subr.bf16.mxu0 0
        %1662 = vmatpush1.bf16.msra.mxu0 0
        %1663 = vmatprep.subr.bf16.mxu0 0
        %1664 = vmatpush1.bf16.msra.mxu0 0
        %1665 = vmatprep.mubr.bf16.mxu0 0
        %1666 = vmatmul.mubr.bf16.gmra.mrb[0].mxu0 %v1311
        %v1667 = vpop.f32.mrb[0].mxu0
        %v1668 = vadd.f32 %v1268, %v1667
        %v1669 = vpop.f32.mrb[0].mxu0
        %v1670 = vpop.f32.mrb[0].mxu0
        %v1671 = vpop.f32.mrb[0].mxu0
        %1672 = vdwg.mxu0
        %v1681 = vunpack.c.l.b16 %v1221
        %v1682 = vunpack.c.l.b16 %v1222
        %v1683 = vunpack.c.l.b16 %v1223
        %v1684 = vunpack.c.l.b16 %v1224
        %v1685 = vunpack.c.l.b16 %v1225
        %v1686 = vunpack.c.l.b16 %v1226
        %v1687 = vunpack.c.l.b16 %v1227
        %v1688 = vunpack.c.l.b16 %v1228
        %v1689 = vpack.c.b16 %v1682, %v1681
        %v1690 = vpack.c.b16 %v1684, %v1683
        %v1691 = vpack.c.b16 %v1686, %v1685
        %v1692 = vpack.c.b16 %v1688, %v1687
        %1697 = vmatprep.subr.bf16.mxu0 0
        %1698 = vmatpush1.bf16.msra.mxu0 %v1689
        %1699 = vmatprep.subr.bf16.mxu0 0
        %1700 = vmatpush1.bf16.msra.mxu0 %v1690
        %1701 = vmatprep.subr.bf16.mxu0 0
        %1702 = vmatpush1.bf16.msra.mxu0 %v1691
        %1703 = vmatprep.subr.bf16.mxu0 0
        %1704 = vmatpush1.bf16.msra.mxu0 %v1692
        %1705 = vmatprep.subr.bf16.mxu0 0
        %1706 = vmatpush1.bf16.msra.mxu0 0
        %1707 = vmatprep.subr.bf16.mxu0 0
        %1708 = vmatpush1.bf16.msra.mxu0 0
        %1709 = vmatprep.subr.bf16.mxu0 0
        %1710 = vmatpush1.bf16.msra.mxu0 0
        %1711 = vmatprep.subr.bf16.mxu0 0
        %1712 = vmatpush1.bf16.msra.mxu0 0
        %1713 = vmatprep.subr.bf16.mxu0 0
        %1714 = vmatpush1.bf16.msra.mxu0 0
        %1715 = vmatprep.subr.bf16.mxu0 0
        %1716 = vmatpush1.bf16.msra.mxu0 0
        %1717 = vmatprep.subr.bf16.mxu0 0
        %1718 = vmatpush1.bf16.msra.mxu0 0
        %1719 = vmatprep.subr.bf16.mxu0 0
        %1720 = vmatpush1.bf16.msra.mxu0 0
        %1721 = vmatprep.subr.bf16.mxu0 0
        %1722 = vmatpush1.bf16.msra.mxu0 0
        %1723 = vmatprep.subr.bf16.mxu0 0
        %1724 = vmatpush1.bf16.msra.mxu0 0
        %1725 = vmatprep.subr.bf16.mxu0 0
        %1726 = vmatpush1.bf16.msra.mxu0 0
        %1727 = vmatprep.subr.bf16.mxu0 0
        %1728 = vmatpush1.bf16.msra.mxu0 0
        %1729 = vmatprep.mubr.bf16.mxu0 0
        %1730 = vmatmul.mubr.bf16.gmra.mrb[0].mxu0 %v1311
        %v1731 = vpop.f32.mrb[0].mxu0
        %v1732 = vadd.f32 %v1272, %v1731
        %v1733 = vpop.f32.mrb[0].mxu0
        %v1734 = vpop.f32.mrb[0].mxu0
        %v1735 = vpop.f32.mrb[0].mxu0
        %1736 = vdwg.mxu0
        %v1745 = vunpack.c.l.b16 %v1229
        %v1746 = vunpack.c.l.b16 %v1230
        %v1747 = vunpack.c.l.b16 %v1231
        %v1748 = vunpack.c.l.b16 %v1232
        %v1749 = vunpack.c.l.b16 %v1233
        %v1750 = vunpack.c.l.b16 %v1234
        %v1751 = vunpack.c.l.b16 %v1235
        %v1752 = vunpack.c.l.b16 %v1236
        %v1753 = vpack.c.b16 %v1746, %v1745
        %v1754 = vpack.c.b16 %v1748, %v1747
        %v1755 = vpack.c.b16 %v1750, %v1749
        %v1756 = vpack.c.b16 %v1752, %v1751
        %1761 = vmatprep.subr.bf16.mxu0 0
        %1762 = vmatpush1.bf16.msra.mxu0 %v1753
        %1763 = vmatprep.subr.bf16.mxu0 0
        %1764 = vmatpush1.bf16.msra.mxu0 %v1754
        %1765 = vmatprep.subr.bf16.mxu0 0
        %1766 = vmatpush1.bf16.msra.mxu0 %v1755
        %1767 = vmatprep.subr.bf16.mxu0 0
        %1768 = vmatpush1.bf16.msra.mxu0 %v1756
        %1769 = vmatprep.subr.bf16.mxu0 0
        %1770 = vmatpush1.bf16.msra.mxu0 0
        %1771 = vmatprep.subr.bf16.mxu0 0
        %1772 = vmatpush1.bf16.msra.mxu0 0
        %1773 = vmatprep.subr.bf16.mxu0 0
        %1774 = vmatpush1.bf16.msra.mxu0 0
        %1775 = vmatprep.subr.bf16.mxu0 0
        %1776 = vmatpush1.bf16.msra.mxu0 0
        %1777 = vmatprep.subr.bf16.mxu0 0
        %1778 = vmatpush1.bf16.msra.mxu0 0
        %1779 = vmatprep.subr.bf16.mxu0 0
        %1780 = vmatpush1.bf16.msra.mxu0 0
        %1781 = vmatprep.subr.bf16.mxu0 0
        %1782 = vmatpush1.bf16.msra.mxu0 0
        %1783 = vmatprep.subr.bf16.mxu0 0
        %1784 = vmatpush1.bf16.msra.mxu0 0
        %1785 = vmatprep.subr.bf16.mxu0 0
        %1786 = vmatpush1.bf16.msra.mxu0 0
        %1787 = vmatprep.subr.bf16.mxu0 0
        %1788 = vmatpush1.bf16.msra.mxu0 0
        %1789 = vmatprep.subr.bf16.mxu0 0
        %1790 = vmatpush1.bf16.msra.mxu0 0
        %1791 = vmatprep.subr.bf16.mxu0 0
        %1792 = vmatpush1.bf16.msra.mxu0 0
        %1793 = vmatprep.mubr.bf16.mxu0 0
        %1794 = vmatmul.mubr.bf16.gmra.mrb[0].mxu0 %v1311
        %v1795 = vpop.f32.mrb[0].mxu0
        %v1796 = vadd.f32 %v1276, %v1795
        %v1797 = vpop.f32.mrb[0].mxu0
        %v1798 = vpop.f32.mrb[0].mxu0
        %v1799 = vpop.f32.mrb[0].mxu0
        %1800 = vdwg.mxu0
        %v1801 = vld [vmem:[%s4] sm:$0xf]
        %v1802 = vld [vmem:[%s4 + $0x4] sm:$0xf]
        %v1803 = vld [vmem:[%s4 + $0x8] sm:$0xf]
        %v1804 = vld [vmem:[%s4 + $0xc] sm:$0xf]
        %v1805 = vld [vmem:[%s4 + $0x10] sm:$0xf]
        %v1806 = vld [vmem:[%s4 + $0x14] sm:$0xf]
        %v1807 = vld [vmem:[%s4 + $0x18] sm:$0xf]
        %v1808 = vld [vmem:[%s4 + $0x1c] sm:$0xf]
        %v1809 = vld [vmem:[%s4 + $0x20] sm:$0xf]
        %v1810 = vld [vmem:[%s4 + $0x24] sm:$0xf]
        %v1811 = vld [vmem:[%s4 + $0x28] sm:$0xf]
        %v1812 = vld [vmem:[%s4 + $0x2c] sm:$0xf]
        %v1813 = vld [vmem:[%s4 + $0x30] sm:$0xf]
        %v1814 = vld [vmem:[%s4 + $0x34] sm:$0xf]
        %v1815 = vld [vmem:[%s4 + $0x38] sm:$0xf]
        %v1816 = vld [vmem:[%s4 + $0x3c] sm:$0xf]
        %v1817 = vld [vmem:[%s4 + $0x40] sm:$0xf]
        %v1818 = vld [vmem:[%s4 + $0x44] sm:$0xf]
        %v1819 = vld [vmem:[%s4 + $0x48] sm:$0xf]
        %v1820 = vld [vmem:[%s4 + $0x4c] sm:$0xf]
        %v1821 = vld [vmem:[%s4 + $0x50] sm:$0xf]
        %v1822 = vld [vmem:[%s4 + $0x54] sm:$0xf]
        %v1823 = vld [vmem:[%s4 + $0x58] sm:$0xf]
        %v1824 = vld [vmem:[%s4 + $0x5c] sm:$0xf]
        %v1825 = vld [vmem:[%s4 + $0x60] sm:$0xf]
        %v1826 = vld [vmem:[%s4 + $0x64] sm:$0xf]
        %v1827 = vld [vmem:[%s4 + $0x68] sm:$0xf]
        %v1828 = vld [vmem:[%s4 + $0x6c] sm:$0xf]
        %v1829 = vld [vmem:[%s4 + $0x70] sm:$0xf]
        %v1830 = vld [vmem:[%s4 + $0x74] sm:$0xf]
        %v1831 = vld [vmem:[%s4 + $0x78] sm:$0xf]
        %v1832 = vld [vmem:[%s4 + $0x7c] sm:$0xf]
        %v1833 = vld [vmem:[%s4 + $0x80] sm:$0xf]
        %v1834 = vld [vmem:[%s4 + $0x84] sm:$0xf]
        %v1835 = vld [vmem:[%s4 + $0x88] sm:$0xf]
        %v1836 = vld [vmem:[%s4 + $0x8c] sm:$0xf]
        %v1837 = vld [vmem:[%s4 + $0x90] sm:$0xf]
        %v1838 = vld [vmem:[%s4 + $0x94] sm:$0xf]
        %v1839 = vld [vmem:[%s4 + $0x98] sm:$0xf]
        %v1840 = vld [vmem:[%s4 + $0x9c] sm:$0xf]
        %v1841 = vld [vmem:[%s4 + $0xa0] sm:$0xf]
        %v1842 = vld [vmem:[%s4 + $0xa4] sm:$0xf]
        %v1843 = vld [vmem:[%s4 + $0xa8] sm:$0xf]
        %v1844 = vld [vmem:[%s4 + $0xac] sm:$0xf]
        %v1845 = vld [vmem:[%s4 + $0xb0] sm:$0xf]
        %v1846 = vld [vmem:[%s4 + $0xb4] sm:$0xf]
        %v1847 = vld [vmem:[%s4 + $0xb8] sm:$0xf]
        %v1848 = vld [vmem:[%s4 + $0xbc] sm:$0xf]
        %v1849 = vld [vmem:[%s4 + $0xc0] sm:$0xf]
        %v1850 = vld [vmem:[%s4 + $0xc4] sm:$0xf]
        %v1851 = vld [vmem:[%s4 + $0xc8] sm:$0xf]
        %v1852 = vld [vmem:[%s4 + $0xcc] sm:$0xf]
        %v1853 = vld [vmem:[%s4 + $0xd0] sm:$0xf]
        %v1854 = vld [vmem:[%s4 + $0xd4] sm:$0xf]
        %v1855 = vld [vmem:[%s4 + $0xd8] sm:$0xf]
        %v1856 = vld [vmem:[%s4 + $0xdc] sm:$0xf]
        %v1857 = vld [vmem:[%s4 + $0xe0] sm:$0xf]
        %v1858 = vld [vmem:[%s4 + $0xe4] sm:$0xf]
        %v1859 = vld [vmem:[%s4 + $0xe8] sm:$0xf]
        %v1860 = vld [vmem:[%s4 + $0xec] sm:$0xf]
        %v1861 = vld [vmem:[%s4 + $0xf0] sm:$0xf]
        %v1862 = vld [vmem:[%s4 + $0xf4] sm:$0xf]
        %v1863 = vld [vmem:[%s4 + $0xf8] sm:$0xf]
        %v1864 = vld [vmem:[%s4 + $0xfc] sm:$0xf]
        %v1873 = vlaneseq
        %v1874 = vshrl.u32 %v1873, 7
        %v1875 = vsub.s32 0, %v1874
        %v1876 = vrot.slane %v1156, %v1875
        %v1877 = vlaneseq
        %v1878 = vshrl.u32 %v1877, 7
        %v1879 = vsub.s32 0, %v1878
        %v1880 = vrot.slane %v1157, %v1879
        %v1881 = vlaneseq
        %v1882 = vshrl.u32 %v1881, 7
        %v1883 = vsub.s32 0, %v1882
        %v1884 = vrot.slane %v1158, %v1883
        %v1885 = vlaneseq
        %v1886 = vshrl.u32 %v1885, 7
        %v1887 = vsub.s32 0, %v1886
        %v1888 = vrot.slane %v1159, %v1887
        %v1889 = vlaneseq
        %v1890 = vshrl.u32 %v1889, 7
        %v1891 = vsub.s32 0, %v1890
        %v1892 = vrot.slane %v1160, %v1891
        %v1893 = vlaneseq
        %v1894 = vshrl.u32 %v1893, 7
        %v1895 = vsub.s32 0, %v1894
        %v1896 = vrot.slane %v1161, %v1895
        %v1897 = vlaneseq
        %v1898 = vshrl.u32 %v1897, 7
        %v1899 = vsub.s32 0, %v1898
        %v1900 = vrot.slane %v1162, %v1899
        %v1901 = vlaneseq
        %v1902 = vshrl.u32 %v1901, 7
        %v1903 = vsub.s32 0, %v1902
        %v1904 = vrot.slane %v1163, %v1903
        %v1921 = vunpack.c.l.b16 %v1801
        %v1922 = vunpack.c.l.b16 %v1802
        %v1923 = vunpack.c.l.b16 %v1803
        %v1924 = vunpack.c.l.b16 %v1804
        %v1925 = vunpack.c.l.b16 %v1805
        %v1926 = vunpack.c.l.b16 %v1806
        %v1927 = vunpack.c.l.b16 %v1807
        %v1928 = vunpack.c.l.b16 %v1808
        %v1929 = vpack.c.b16 %v1922, %v1921
        %v1930 = vpack.c.b16 %v1924, %v1923
        %v1931 = vpack.c.b16 %v1926, %v1925
        %v1932 = vpack.c.b16 %v1928, %v1927
        %1937 = vmatprep.subr.bf16.mxu0 0
        %1938 = vmatpush1.bf16.msra.mxu0 %v1929
        %1939 = vmatprep.subr.bf16.mxu0 0
        %1940 = vmatpush1.bf16.msra.mxu0 %v1930
        %1941 = vmatprep.subr.bf16.mxu0 0
        %1942 = vmatpush1.bf16.msra.mxu0 %v1931
        %1943 = vmatprep.subr.bf16.mxu0 0
        %1944 = vmatpush1.bf16.msra.mxu0 %v1932
        %1945 = vmatprep.subr.bf16.mxu0 0
        %1946 = vmatpush1.bf16.msra.mxu0 0
        %1947 = vmatprep.subr.bf16.mxu0 0
        %1948 = vmatpush1.bf16.msra.mxu0 0
        %1949 = vmatprep.subr.bf16.mxu0 0
        %1950 = vmatpush1.bf16.msra.mxu0 0
        %1951 = vmatprep.subr.bf16.mxu0 0
        %1952 = vmatpush1.bf16.msra.mxu0 0
        %1953 = vmatprep.subr.bf16.mxu0 0
        %1954 = vmatpush1.bf16.msra.mxu0 0
        %1955 = vmatprep.subr.bf16.mxu0 0
        %1956 = vmatpush1.bf16.msra.mxu0 0
        %1957 = vmatprep.subr.bf16.mxu0 0
        %1958 = vmatpush1.bf16.msra.mxu0 0
        %1959 = vmatprep.subr.bf16.mxu0 0
        %1960 = vmatpush1.bf16.msra.mxu0 0
        %1961 = vmatprep.subr.bf16.mxu0 0
        %1962 = vmatpush1.bf16.msra.mxu0 0
        %1963 = vmatprep.subr.bf16.mxu0 0
        %1964 = vmatpush1.bf16.msra.mxu0 0
        %1965 = vmatprep.subr.bf16.mxu0 0
        %1966 = vmatpush1.bf16.msra.mxu0 0
        %1967 = vmatprep.subr.bf16.mxu0 0
        %1968 = vmatpush1.bf16.msra.mxu0 0
        %1969 = vmatprep.mubr.bf16.mxu0 0
        %1970 = vmatmul.mubr.bf16.gmra.mrb[0].mxu0 %v1311
        %v1971 = vpop.f32.mrb[0].mxu0
        %v1972 = vadd.f32 %v1876, %v1971
        %v1973 = vpop.f32.mrb[0].mxu0
        %v1974 = vpop.f32.mrb[0].mxu0
        %v1975 = vpop.f32.mrb[0].mxu0
        %1976 = vdwg.mxu0
        %v1985 = vunpack.c.l.b16 %v1809
        %v1986 = vunpack.c.l.b16 %v1810
        %v1987 = vunpack.c.l.b16 %v1811
        %v1988 = vunpack.c.l.b16 %v1812
        %v1989 = vunpack.c.l.b16 %v1813
        %v1990 = vunpack.c.l.b16 %v1814
        %v1991 = vunpack.c.l.b16 %v1815
        %v1992 = vunpack.c.l.b16 %v1816
        %v1993 = vpack.c.b16 %v1986, %v1985
        %v1994 = vpack.c.b16 %v1988, %v1987
        %v1995 = vpack.c.b16 %v1990, %v1989
        %v1996 = vpack.c.b16 %v1992, %v1991
        %2001 = vmatprep.subr.bf16.mxu0 0
        %2002 = vmatpush1.bf16.msra.mxu0 %v1993
        %2003 = vmatprep.subr.bf16.mxu0 0
        %2004 = vmatpush1.bf16.msra.mxu0 %v1994
        %2005 = vmatprep.subr.bf16.mxu0 0
        %2006 = vmatpush1.bf16.msra.mxu0 %v1995
        %2007 = vmatprep.subr.bf16.mxu0 0
        %2008 = vmatpush1.bf16.msra.mxu0 %v1996
        %2009 = vmatprep.subr.bf16.mxu0 0
        %2010 = vmatpush1.bf16.msra.mxu0 0
        %2011 = vmatprep.subr.bf16.mxu0 0
        %2012 = vmatpush1.bf16.msra.mxu0 0
        %2013 = vmatprep.subr.bf16.mxu0 0
        %2014 = vmatpush1.bf16.msra.mxu0 0
        %2015 = vmatprep.subr.bf16.mxu0 0
        %2016 = vmatpush1.bf16.msra.mxu0 0
        %2017 = vmatprep.subr.bf16.mxu0 0
        %2018 = vmatpush1.bf16.msra.mxu0 0
        %2019 = vmatprep.subr.bf16.mxu0 0
        %2020 = vmatpush1.bf16.msra.mxu0 0
        %2021 = vmatprep.subr.bf16.mxu0 0
        %2022 = vmatpush1.bf16.msra.mxu0 0
        %2023 = vmatprep.subr.bf16.mxu0 0
        %2024 = vmatpush1.bf16.msra.mxu0 0
        %2025 = vmatprep.subr.bf16.mxu0 0
        %2026 = vmatpush1.bf16.msra.mxu0 0
        %2027 = vmatprep.subr.bf16.mxu0 0
        %2028 = vmatpush1.bf16.msra.mxu0 0
        %2029 = vmatprep.subr.bf16.mxu0 0
        %2030 = vmatpush1.bf16.msra.mxu0 0
        %2031 = vmatprep.subr.bf16.mxu0 0
        %2032 = vmatpush1.bf16.msra.mxu0 0
        %2033 = vmatprep.mubr.bf16.mxu0 0
        %2034 = vmatmul.mubr.bf16.gmra.mrb[0].mxu0 %v1311
        %v2035 = vpop.f32.mrb[0].mxu0
        %v2036 = vadd.f32 %v1880, %v2035
        %v2037 = vpop.f32.mrb[0].mxu0
        %v2038 = vpop.f32.mrb[0].mxu0
        %v2039 = vpop.f32.mrb[0].mxu0
        %2040 = vdwg.mxu0
        %v2049 = vunpack.c.l.b16 %v1817
        %v2050 = vunpack.c.l.b16 %v1818
        %v2051 = vunpack.c.l.b16 %v1819
        %v2052 = vunpack.c.l.b16 %v1820
        %v2053 = vunpack.c.l.b16 %v1821
        %v2054 = vunpack.c.l.b16 %v1822
        %v2055 = vunpack.c.l.b16 %v1823
        %v2056 = vunpack.c.l.b16 %v1824
        %v2057 = vpack.c.b16 %v2050, %v2049
        %v2058 = vpack.c.b16 %v2052, %v2051
        %v2059 = vpack.c.b16 %v2054, %v2053
        %v2060 = vpack.c.b16 %v2056, %v2055
        %2065 = vmatprep.subr.bf16.mxu0 0
        %2066 = vmatpush1.bf16.msra.mxu0 %v2057
        %2067 = vmatprep.subr.bf16.mxu0 0
        %2068 = vmatpush1.bf16.msra.mxu0 %v2058
        %2069 = vmatprep.subr.bf16.mxu0 0
        %2070 = vmatpush1.bf16.msra.mxu0 %v2059
        %2071 = vmatprep.subr.bf16.mxu0 0
        %2072 = vmatpush1.bf16.msra.mxu0 %v2060
        %2073 = vmatprep.subr.bf16.mxu0 0
        %2074 = vmatpush1.bf16.msra.mxu0 0
        %2075 = vmatprep.subr.bf16.mxu0 0
        %2076 = vmatpush1.bf16.msra.mxu0 0
        %2077 = vmatprep.subr.bf16.mxu0 0
        %2078 = vmatpush1.bf16.msra.mxu0 0
        %2079 = vmatprep.subr.bf16.mxu0 0
        %2080 = vmatpush1.bf16.msra.mxu0 0
        %2081 = vmatprep.subr.bf16.mxu0 0
        %2082 = vmatpush1.bf16.msra.mxu0 0
        %2083 = vmatprep.subr.bf16.mxu0 0
        %2084 = vmatpush1.bf16.msra.mxu0 0
        %2085 = vmatprep.subr.bf16.mxu0 0
        %2086 = vmatpush1.bf16.msra.mxu0 0
        %2087 = vmatprep.subr.bf16.mxu0 0
        %2088 = vmatpush1.bf16.msra.mxu0 0
        %2089 = vmatprep.subr.bf16.mxu0 0
        %2090 = vmatpush1.bf16.msra.mxu0 0
        %2091 = vmatprep.subr.bf16.mxu0 0
        %2092 = vmatpush1.bf16.msra.mxu0 0
        %2093 = vmatprep.subr.bf16.mxu0 0
        %2094 = vmatpush1.bf16.msra.mxu0 0
        %2095 = vmatprep.subr.bf16.mxu0 0
        %2096 = vmatpush1.bf16.msra.mxu0 0
        %2097 = vmatprep.mubr.bf16.mxu0 0
        %2098 = vmatmul.mubr.bf16.gmra.mrb[0].mxu0 %v1311
        %v2099 = vpop.f32.mrb[0].mxu0
        %v2100 = vadd.f32 %v1884, %v2099
        %v2101 = vpop.f32.mrb[0].mxu0
        %v2102 = vpop.f32.mrb[0].mxu0
        %v2103 = vpop.f32.mrb[0].mxu0
        %2104 = vdwg.mxu0
        %v2113 = vunpack.c.l.b16 %v1825
        %v2114 = vunpack.c.l.b16 %v1826
        %v2115 = vunpack.c.l.b16 %v1827
        %v2116 = vunpack.c.l.b16 %v1828
        %v2117 = vunpack.c.l.b16 %v1829
        %v2118 = vunpack.c.l.b16 %v1830
        %v2119 = vunpack.c.l.b16 %v1831
        %v2120 = vunpack.c.l.b16 %v1832
        %v2121 = vpack.c.b16 %v2114, %v2113
        %v2122 = vpack.c.b16 %v2116, %v2115
        %v2123 = vpack.c.b16 %v2118, %v2117
        %v2124 = vpack.c.b16 %v2120, %v2119
        %2129 = vmatprep.subr.bf16.mxu0 0
        %2130 = vmatpush1.bf16.msra.mxu0 %v2121
        %2131 = vmatprep.subr.bf16.mxu0 0
        %2132 = vmatpush1.bf16.msra.mxu0 %v2122
        %2133 = vmatprep.subr.bf16.mxu0 0
        %2134 = vmatpush1.bf16.msra.mxu0 %v2123
        %2135 = vmatprep.subr.bf16.mxu0 0
        %2136 = vmatpush1.bf16.msra.mxu0 %v2124
        %2137 = vmatprep.subr.bf16.mxu0 0
        %2138 = vmatpush1.bf16.msra.mxu0 0
        %2139 = vmatprep.subr.bf16.mxu0 0
        %2140 = vmatpush1.bf16.msra.mxu0 0
        %2141 = vmatprep.subr.bf16.mxu0 0
        %2142 = vmatpush1.bf16.msra.mxu0 0
        %2143 = vmatprep.subr.bf16.mxu0 0
        %2144 = vmatpush1.bf16.msra.mxu0 0
        %2145 = vmatprep.subr.bf16.mxu0 0
        %2146 = vmatpush1.bf16.msra.mxu0 0
        %2147 = vmatprep.subr.bf16.mxu0 0
        %2148 = vmatpush1.bf16.msra.mxu0 0
        %2149 = vmatprep.subr.bf16.mxu0 0
        %2150 = vmatpush1.bf16.msra.mxu0 0
        %2151 = vmatprep.subr.bf16.mxu0 0
        %2152 = vmatpush1.bf16.msra.mxu0 0
        %2153 = vmatprep.subr.bf16.mxu0 0
        %2154 = vmatpush1.bf16.msra.mxu0 0
        %2155 = vmatprep.subr.bf16.mxu0 0
        %2156 = vmatpush1.bf16.msra.mxu0 0
        %2157 = vmatprep.subr.bf16.mxu0 0
        %2158 = vmatpush1.bf16.msra.mxu0 0
        %2159 = vmatprep.subr.bf16.mxu0 0
        %2160 = vmatpush1.bf16.msra.mxu0 0
        %2161 = vmatprep.mubr.bf16.mxu0 0
        %2162 = vmatmul.mubr.bf16.gmra.mrb[0].mxu0 %v1311
        %v2163 = vpop.f32.mrb[0].mxu0
        %v2164 = vadd.f32 %v1888, %v2163
        %v2165 = vpop.f32.mrb[0].mxu0
        %v2166 = vpop.f32.mrb[0].mxu0
        %v2167 = vpop.f32.mrb[0].mxu0
        %2168 = vdwg.mxu0
        %v2177 = vunpack.c.l.b16 %v1833
        %v2178 = vunpack.c.l.b16 %v1834
        %v2179 = vunpack.c.l.b16 %v1835
        %v2180 = vunpack.c.l.b16 %v1836
        %v2181 = vunpack.c.l.b16 %v1837
        %v2182 = vunpack.c.l.b16 %v1838
        %v2183 = vunpack.c.l.b16 %v1839
        %v2184 = vunpack.c.l.b16 %v1840
        %v2185 = vpack.c.b16 %v2178, %v2177
        %v2186 = vpack.c.b16 %v2180, %v2179
        %v2187 = vpack.c.b16 %v2182, %v2181
        %v2188 = vpack.c.b16 %v2184, %v2183
        %2193 = vmatprep.subr.bf16.mxu0 0
        %2194 = vmatpush1.bf16.msra.mxu0 %v2185
        %2195 = vmatprep.subr.bf16.mxu0 0
        %2196 = vmatpush1.bf16.msra.mxu0 %v2186
        %2197 = vmatprep.subr.bf16.mxu0 0
        %2198 = vmatpush1.bf16.msra.mxu0 %v2187
        %2199 = vmatprep.subr.bf16.mxu0 0
        %2200 = vmatpush1.bf16.msra.mxu0 %v2188
        %2201 = vmatprep.subr.bf16.mxu0 0
        %2202 = vmatpush1.bf16.msra.mxu0 0
        %2203 = vmatprep.subr.bf16.mxu0 0
        %2204 = vmatpush1.bf16.msra.mxu0 0
        %2205 = vmatprep.subr.bf16.mxu0 0
        %2206 = vmatpush1.bf16.msra.mxu0 0
        %2207 = vmatprep.subr.bf16.mxu0 0
        %2208 = vmatpush1.bf16.msra.mxu0 0
        %2209 = vmatprep.subr.bf16.mxu0 0
        %2210 = vmatpush1.bf16.msra.mxu0 0
        %2211 = vmatprep.subr.bf16.mxu0 0
        %2212 = vmatpush1.bf16.msra.mxu0 0
        %2213 = vmatprep.subr.bf16.mxu0 0
        %2214 = vmatpush1.bf16.msra.mxu0 0
        %2215 = vmatprep.subr.bf16.mxu0 0
        %2216 = vmatpush1.bf16.msra.mxu0 0
        %2217 = vmatprep.subr.bf16.mxu0 0
        %2218 = vmatpush1.bf16.msra.mxu0 0
        %2219 = vmatprep.subr.bf16.mxu0 0
        %2220 = vmatpush1.bf16.msra.mxu0 0
        %2221 = vmatprep.subr.bf16.mxu0 0
        %2222 = vmatpush1.bf16.msra.mxu0 0
        %2223 = vmatprep.subr.bf16.mxu0 0
        %2224 = vmatpush1.bf16.msra.mxu0 0
        %2225 = vmatprep.mubr.bf16.mxu0 0
        %2226 = vmatmul.mubr.bf16.gmra.mrb[0].mxu0 %v1311
        %v2227 = vpop.f32.mrb[0].mxu0
        %v2228 = vadd.f32 %v1892, %v2227
        %v2229 = vpop.f32.mrb[0].mxu0
        %v2230 = vpop.f32.mrb[0].mxu0
        %v2231 = vpop.f32.mrb[0].mxu0
        %2232 = vdwg.mxu0
        %v2241 = vunpack.c.l.b16 %v1841
        %v2242 = vunpack.c.l.b16 %v1842
        %v2243 = vunpack.c.l.b16 %v1843
        %v2244 = vunpack.c.l.b16 %v1844
        %v2245 = vunpack.c.l.b16 %v1845
        %v2246 = vunpack.c.l.b16 %v1846
        %v2247 = vunpack.c.l.b16 %v1847
        %v2248 = vunpack.c.l.b16 %v1848
        %v2249 = vpack.c.b16 %v2242, %v2241
        %v2250 = vpack.c.b16 %v2244, %v2243
        %v2251 = vpack.c.b16 %v2246, %v2245
        %v2252 = vpack.c.b16 %v2248, %v2247
        %2257 = vmatprep.subr.bf16.mxu0 0
        %2258 = vmatpush1.bf16.msra.mxu0 %v2249
        %2259 = vmatprep.subr.bf16.mxu0 0
        %2260 = vmatpush1.bf16.msra.mxu0 %v2250
        %2261 = vmatprep.subr.bf16.mxu0 0
        %2262 = vmatpush1.bf16.msra.mxu0 %v2251
        %2263 = vmatprep.subr.bf16.mxu0 0
        %2264 = vmatpush1.bf16.msra.mxu0 %v2252
        %2265 = vmatprep.subr.bf16.mxu0 0
        %2266 = vmatpush1.bf16.msra.mxu0 0
        %2267 = vmatprep.subr.bf16.mxu0 0
        %2268 = vmatpush1.bf16.msra.mxu0 0
        %2269 = vmatprep.subr.bf16.mxu0 0
        %2270 = vmatpush1.bf16.msra.mxu0 0
        %2271 = vmatprep.subr.bf16.mxu0 0
        %2272 = vmatpush1.bf16.msra.mxu0 0
        %2273 = vmatprep.subr.bf16.mxu0 0
        %2274 = vmatpush1.bf16.msra.mxu0 0
        %2275 = vmatprep.subr.bf16.mxu0 0
        %2276 = vmatpush1.bf16.msra.mxu0 0
        %2277 = vmatprep.subr.bf16.mxu0 0
        %2278 = vmatpush1.bf16.msra.mxu0 0
        %2279 = vmatprep.subr.bf16.mxu0 0
        %2280 = vmatpush1.bf16.msra.mxu0 0
        %2281 = vmatprep.subr.bf16.mxu0 0
        %2282 = vmatpush1.bf16.msra.mxu0 0
        %2283 = vmatprep.subr.bf16.mxu0 0
        %2284 = vmatpush1.bf16.msra.mxu0 0
        %2285 = vmatprep.subr.bf16.mxu0 0
        %2286 = vmatpush1.bf16.msra.mxu0 0
        %2287 = vmatprep.subr.bf16.mxu0 0
        %2288 = vmatpush1.bf16.msra.mxu0 0
        %2289 = vmatprep.mubr.bf16.mxu0 0
        %2290 = vmatmul.mubr.bf16.gmra.mrb[0].mxu0 %v1311
        %v2291 = vpop.f32.mrb[0].mxu0
        %v2292 = vadd.f32 %v1896, %v2291
        %v2293 = vpop.f32.mrb[0].mxu0
        %v2294 = vpop.f32.mrb[0].mxu0
        %v2295 = vpop.f32.mrb[0].mxu0
        %2296 = vdwg.mxu0
        %v2305 = vunpack.c.l.b16 %v1849
        %v2306 = vunpack.c.l.b16 %v1850
        %v2307 = vunpack.c.l.b16 %v1851
        %v2308 = vunpack.c.l.b16 %v1852
        %v2309 = vunpack.c.l.b16 %v1853
        %v2310 = vunpack.c.l.b16 %v1854
        %v2311 = vunpack.c.l.b16 %v1855
        %v2312 = vunpack.c.l.b16 %v1856
        %v2313 = vpack.c.b16 %v2306, %v2305
        %v2314 = vpack.c.b16 %v2308, %v2307
        %v2315 = vpack.c.b16 %v2310, %v2309
        %v2316 = vpack.c.b16 %v2312, %v2311
        %2321 = vmatprep.subr.bf16.mxu0 0
        %2322 = vmatpush1.bf16.msra.mxu0 %v2313
        %2323 = vmatprep.subr.bf16.mxu0 0
        %2324 = vmatpush1.bf16.msra.mxu0 %v2314
        %2325 = vmatprep.subr.bf16.mxu0 0
        %2326 = vmatpush1.bf16.msra.mxu0 %v2315
        %2327 = vmatprep.subr.bf16.mxu0 0
        %2328 = vmatpush1.bf16.msra.mxu0 %v2316
        %2329 = vmatprep.subr.bf16.mxu0 0
        %2330 = vmatpush1.bf16.msra.mxu0 0
        %2331 = vmatprep.subr.bf16.mxu0 0
        %2332 = vmatpush1.bf16.msra.mxu0 0
        %2333 = vmatprep.subr.bf16.mxu0 0
        %2334 = vmatpush1.bf16.msra.mxu0 0
        %2335 = vmatprep.subr.bf16.mxu0 0
        %2336 = vmatpush1.bf16.msra.mxu0 0
        %2337 = vmatprep.subr.bf16.mxu0 0
        %2338 = vmatpush1.bf16.msra.mxu0 0
        %2339 = vmatprep.subr.bf16.mxu0 0
        %2340 = vmatpush1.bf16.msra.mxu0 0
        %2341 = vmatprep.subr.bf16.mxu0 0
        %2342 = vmatpush1.bf16.msra.mxu0 0
        %2343 = vmatprep.subr.bf16.mxu0 0
        %2344 = vmatpush1.bf16.msra.mxu0 0
        %2345 = vmatprep.subr.bf16.mxu0 0
        %2346 = vmatpush1.bf16.msra.mxu0 0
        %2347 = vmatprep.subr.bf16.mxu0 0
        %2348 = vmatpush1.bf16.msra.mxu0 0
        %2349 = vmatprep.subr.bf16.mxu0 0
        %2350 = vmatpush1.bf16.msra.mxu0 0
        %2351 = vmatprep.subr.bf16.mxu0 0
        %2352 = vmatpush1.bf16.msra.mxu0 0
        %2353 = vmatprep.mubr.bf16.mxu0 0
        %2354 = vmatmul.mubr.bf16.gmra.mrb[0].mxu0 %v1311
        %v2355 = vpop.f32.mrb[0].mxu0
        %v2356 = vadd.f32 %v1900, %v2355
        %v2357 = vpop.f32.mrb[0].mxu0
        %v2358 = vpop.f32.mrb[0].mxu0
        %v2359 = vpop.f32.mrb[0].mxu0
        %2360 = vdwg.mxu0
        %v2369 = vunpack.c.l.b16 %v1857
        %v2370 = vunpack.c.l.b16 %v1858
        %v2371 = vunpack.c.l.b16 %v1859
        %v2372 = vunpack.c.l.b16 %v1860
        %v2373 = vunpack.c.l.b16 %v1861
        %v2374 = vunpack.c.l.b16 %v1862
        %v2375 = vunpack.c.l.b16 %v1863
        %v2376 = vunpack.c.l.b16 %v1864
        %v2377 = vpack.c.b16 %v2370, %v2369
        %v2378 = vpack.c.b16 %v2372, %v2371
        %v2379 = vpack.c.b16 %v2374, %v2373
        %v2380 = vpack.c.b16 %v2376, %v2375
        %2385 = vmatprep.subr.bf16.mxu0 0
        %2386 = vmatpush1.bf16.msra.mxu0 %v2377
        %2387 = vmatprep.subr.bf16.mxu0 0
        %2388 = vmatpush1.bf16.msra.mxu0 %v2378
        %2389 = vmatprep.subr.bf16.mxu0 0
        %2390 = vmatpush1.bf16.msra.mxu0 %v2379
        %2391 = vmatprep.subr.bf16.mxu0 0
        %2392 = vmatpush1.bf16.msra.mxu0 %v2380
        %2393 = vmatprep.subr.bf16.mxu0 0
        %2394 = vmatpush1.bf16.msra.mxu0 0
        %2395 = vmatprep.subr.bf16.mxu0 0
        %2396 = vmatpush1.bf16.msra.mxu0 0
        %2397 = vmatprep.subr.bf16.mxu0 0
        %2398 = vmatpush1.bf16.msra.mxu0 0
        %2399 = vmatprep.subr.bf16.mxu0 0
        %2400 = vmatpush1.bf16.msra.mxu0 0
        %2401 = vmatprep.subr.bf16.mxu0 0
        %2402 = vmatpush1.bf16.msra.mxu0 0
        %2403 = vmatprep.subr.bf16.mxu0 0
        %2404 = vmatpush1.bf16.msra.mxu0 0
        %2405 = vmatprep.subr.bf16.mxu0 0
        %2406 = vmatpush1.bf16.msra.mxu0 0
        %2407 = vmatprep.subr.bf16.mxu0 0
        %2408 = vmatpush1.bf16.msra.mxu0 0
        %2409 = vmatprep.subr.bf16.mxu0 0
        %2410 = vmatpush1.bf16.msra.mxu0 0
        %2411 = vmatprep.subr.bf16.mxu0 0
        %2412 = vmatpush1.bf16.msra.mxu0 0
        %2413 = vmatprep.subr.bf16.mxu0 0
        %2414 = vmatpush1.bf16.msra.mxu0 0
        %2415 = vmatprep.subr.bf16.mxu0 0
        %2416 = vmatpush1.bf16.msra.mxu0 0
        %2417 = vmatprep.mubr.bf16.mxu0 0
        %2418 = vmatmul.mubr.bf16.gmra.mrb[0].mxu0 %v1311
        %v2419 = vpop.f32.mrb[0].mxu0
        %v2420 = vadd.f32 %v1904, %v2419
        %v2421 = vpop.f32.mrb[0].mxu0
        %v2422 = vpop.f32.mrb[0].mxu0
        %v2423 = vpop.f32.mrb[0].mxu0
        %2424 = vdwg.mxu0
        %v2425 = vld [vmem:[%s5] sm:$0xf]
        %v2426 = vld [vmem:[%s5 + $0x4] sm:$0xf]
        %v2427 = vld [vmem:[%s5 + $0x8] sm:$0xf]
        %v2428 = vld [vmem:[%s5 + $0xc] sm:$0xf]
        %v2429 = vld [vmem:[%s5 + $0x10] sm:$0xf]
        %v2430 = vld [vmem:[%s5 + $0x14] sm:$0xf]
        %v2431 = vld [vmem:[%s5 + $0x18] sm:$0xf]
        %v2432 = vld [vmem:[%s5 + $0x1c] sm:$0xf]
        %v2433 = vld [vmem:[%s5 + $0x20] sm:$0xf]
        %v2434 = vld [vmem:[%s5 + $0x24] sm:$0xf]
        %v2435 = vld [vmem:[%s5 + $0x28] sm:$0xf]
        %v2436 = vld [vmem:[%s5 + $0x2c] sm:$0xf]
        %v2437 = vld [vmem:[%s5 + $0x30] sm:$0xf]
        %v2438 = vld [vmem:[%s5 + $0x34] sm:$0xf]
        %v2439 = vld [vmem:[%s5 + $0x38] sm:$0xf]
        %v2440 = vld [vmem:[%s5 + $0x3c] sm:$0xf]
        %v2441 = vld [vmem:[%s5 + $0x40] sm:$0xf]
        %v2442 = vld [vmem:[%s5 + $0x44] sm:$0xf]
        %v2443 = vld [vmem:[%s5 + $0x48] sm:$0xf]
        %v2444 = vld [vmem:[%s5 + $0x4c] sm:$0xf]
        %v2445 = vld [vmem:[%s5 + $0x50] sm:$0xf]
        %v2446 = vld [vmem:[%s5 + $0x54] sm:$0xf]
        %v2447 = vld [vmem:[%s5 + $0x58] sm:$0xf]
        %v2448 = vld [vmem:[%s5 + $0x5c] sm:$0xf]
        %v2449 = vld [vmem:[%s5 + $0x60] sm:$0xf]
        %v2450 = vld [vmem:[%s5 + $0x64] sm:$0xf]
        %v2451 = vld [vmem:[%s5 + $0x68] sm:$0xf]
        %v2452 = vld [vmem:[%s5 + $0x6c] sm:$0xf]
        %v2453 = vld [vmem:[%s5 + $0x70] sm:$0xf]
        %v2454 = vld [vmem:[%s5 + $0x74] sm:$0xf]
        %v2455 = vld [vmem:[%s5 + $0x78] sm:$0xf]
        %v2456 = vld [vmem:[%s5 + $0x7c] sm:$0xf]
        %v2457 = vld [vmem:[%s5 + $0x80] sm:$0xf]
        %v2458 = vld [vmem:[%s5 + $0x84] sm:$0xf]
        %v2459 = vld [vmem:[%s5 + $0x88] sm:$0xf]
        %v2460 = vld [vmem:[%s5 + $0x8c] sm:$0xf]
        %v2461 = vld [vmem:[%s5 + $0x90] sm:$0xf]
        %v2462 = vld [vmem:[%s5 + $0x94] sm:$0xf]
        %v2463 = vld [vmem:[%s5 + $0x98] sm:$0xf]
        %v2464 = vld [vmem:[%s5 + $0x9c] sm:$0xf]
        %v2465 = vld [vmem:[%s5 + $0xa0] sm:$0xf]
        %v2466 = vld [vmem:[%s5 + $0xa4] sm:$0xf]
        %v2467 = vld [vmem:[%s5 + $0xa8] sm:$0xf]
        %v2468 = vld [vmem:[%s5 + $0xac] sm:$0xf]
        %v2469 = vld [vmem:[%s5 + $0xb0] sm:$0xf]
        %v2470 = vld [vmem:[%s5 + $0xb4] sm:$0xf]
        %v2471 = vld [vmem:[%s5 + $0xb8] sm:$0xf]
        %v2472 = vld [vmem:[%s5 + $0xbc] sm:$0xf]
        %v2473 = vld [vmem:[%s5 + $0xc0] sm:$0xf]
        %v2474 = vld [vmem:[%s5 + $0xc4] sm:$0xf]
        %v2475 = vld [vmem:[%s5 + $0xc8] sm:$0xf]
        %v2476 = vld [vmem:[%s5 + $0xcc] sm:$0xf]
        %v2477 = vld [vmem:[%s5 + $0xd0] sm:$0xf]
        %v2478 = vld [vmem:[%s5 + $0xd4] sm:$0xf]
        %v2479 = vld [vmem:[%s5 + $0xd8] sm:$0xf]
        %v2480 = vld [vmem:[%s5 + $0xdc] sm:$0xf]
        %v2481 = vld [vmem:[%s5 + $0xe0] sm:$0xf]
        %v2482 = vld [vmem:[%s5 + $0xe4] sm:$0xf]
        %v2483 = vld [vmem:[%s5 + $0xe8] sm:$0xf]
        %v2484 = vld [vmem:[%s5 + $0xec] sm:$0xf]
        %v2485 = vld [vmem:[%s5 + $0xf0] sm:$0xf]
        %v2486 = vld [vmem:[%s5 + $0xf4] sm:$0xf]
        %v2487 = vld [vmem:[%s5 + $0xf8] sm:$0xf]
        %v2488 = vld [vmem:[%s5 + $0xfc] sm:$0xf]
        %v2497 = vlaneseq
        %v2498 = vshrl.u32 %v2497, 7
        %v2499 = vsub.s32 0, %v2498
        %v2500 = vrot.slane %v1165, %v2499
        %v2501 = vlaneseq
        %v2502 = vshrl.u32 %v2501, 7
        %v2503 = vsub.s32 0, %v2502
        %v2504 = vrot.slane %v1166, %v2503
        %v2505 = vlaneseq
        %v2506 = vshrl.u32 %v2505, 7
        %v2507 = vsub.s32 0, %v2506
        %v2508 = vrot.slane %v1167, %v2507
        %v2509 = vlaneseq
        %v2510 = vshrl.u32 %v2509, 7
        %v2511 = vsub.s32 0, %v2510
        %v2512 = vrot.slane %v1168, %v2511
        %v2513 = vlaneseq
        %v2514 = vshrl.u32 %v2513, 7
        %v2515 = vsub.s32 0, %v2514
        %v2516 = vrot.slane %v1169, %v2515
        %v2517 = vlaneseq
        %v2518 = vshrl.u32 %v2517, 7
        %v2519 = vsub.s32 0, %v2518
        %v2520 = vrot.slane %v1170, %v2519
        %v2521 = vlaneseq
        %v2522 = vshrl.u32 %v2521, 7
        %v2523 = vsub.s32 0, %v2522
        %v2524 = vrot.slane %v1171, %v2523
        %v2525 = vlaneseq
        %v2526 = vshrl.u32 %v2525, 7
        %v2527 = vsub.s32 0, %v2526
        %v2528 = vrot.slane %v1172, %v2527
        %v2545 = vunpack.c.l.b16 %v2425
        %v2546 = vunpack.c.l.b16 %v2426
        %v2547 = vunpack.c.l.b16 %v2427
        %v2548 = vunpack.c.l.b16 %v2428
        %v2549 = vunpack.c.l.b16 %v2429
        %v2550 = vunpack.c.l.b16 %v2430
        %v2551 = vunpack.c.l.b16 %v2431
        %v2552 = vunpack.c.l.b16 %v2432
        %v2553 = vpack.c.b16 %v2546, %v2545
        %v2554 = vpack.c.b16 %v2548, %v2547
        %v2555 = vpack.c.b16 %v2550, %v2549
        %v2556 = vpack.c.b16 %v2552, %v2551
        %2561 = vmatprep.subr.bf16.mxu0 0
        %2562 = vmatpush1.bf16.msra.mxu0 %v2553
        %2563 = vmatprep.subr.bf16.mxu0 0
        %2564 = vmatpush1.bf16.msra.mxu0 %v2554
        %2565 = vmatprep.subr.bf16.mxu0 0
        %2566 = vmatpush1.bf16.msra.mxu0 %v2555
        %2567 = vmatprep.subr.bf16.mxu0 0
        %2568 = vmatpush1.bf16.msra.mxu0 %v2556
        %2569 = vmatprep.subr.bf16.mxu0 0
        %2570 = vmatpush1.bf16.msra.mxu0 0
        %2571 = vmatprep.subr.bf16.mxu0 0
        %2572 = vmatpush1.bf16.msra.mxu0 0
        %2573 = vmatprep.subr.bf16.mxu0 0
        %2574 = vmatpush1.bf16.msra.mxu0 0
        %2575 = vmatprep.subr.bf16.mxu0 0
        %2576 = vmatpush1.bf16.msra.mxu0 0
        %2577 = vmatprep.subr.bf16.mxu0 0
        %2578 = vmatpush1.bf16.msra.mxu0 0
        %2579 = vmatprep.subr.bf16.mxu0 0
        %2580 = vmatpush1.bf16.msra.mxu0 0
        %2581 = vmatprep.subr.bf16.mxu0 0
        %2582 = vmatpush1.bf16.msra.mxu0 0
        %2583 = vmatprep.subr.bf16.mxu0 0
        %2584 = vmatpush1.bf16.msra.mxu0 0
        %2585 = vmatprep.subr.bf16.mxu0 0
        %2586 = vmatpush1.bf16.msra.mxu0 0
        %2587 = vmatprep.subr.bf16.mxu0 0
        %2588 = vmatpush1.bf16.msra.mxu0 0
        %2589 = vmatprep.subr.bf16.mxu0 0
        %2590 = vmatpush1.bf16.msra.mxu0 0
        %2591 = vmatprep.subr.bf16.mxu0 0
        %2592 = vmatpush1.bf16.msra.mxu0 0
        %2593 = vmatprep.mubr.bf16.mxu0 0
        %2594 = vmatmul.mubr.bf16.gmra.mrb[0].mxu0 %v1311
        %v2595 = vpop.f32.mrb[0].mxu0
        %v2596 = vadd.f32 %v2500, %v2595
        %v2597 = vpop.f32.mrb[0].mxu0
        %v2598 = vpop.f32.mrb[0].mxu0
        %v2599 = vpop.f32.mrb[0].mxu0
        %2600 = vdwg.mxu0
        %v2609 = vunpack.c.l.b16 %v2433
        %v2610 = vunpack.c.l.b16 %v2434
        %v2611 = vunpack.c.l.b16 %v2435
        %v2612 = vunpack.c.l.b16 %v2436
        %v2613 = vunpack.c.l.b16 %v2437
        %v2614 = vunpack.c.l.b16 %v2438
        %v2615 = vunpack.c.l.b16 %v2439
        %v2616 = vunpack.c.l.b16 %v2440
        %v2617 = vpack.c.b16 %v2610, %v2609
        %v2618 = vpack.c.b16 %v2612, %v2611
        %v2619 = vpack.c.b16 %v2614, %v2613
        %v2620 = vpack.c.b16 %v2616, %v2615
        %2625 = vmatprep.subr.bf16.mxu0 0
        %2626 = vmatpush1.bf16.msra.mxu0 %v2617
        %2627 = vmatprep.subr.bf16.mxu0 0
        %2628 = vmatpush1.bf16.msra.mxu0 %v2618
        %2629 = vmatprep.subr.bf16.mxu0 0
        %2630 = vmatpush1.bf16.msra.mxu0 %v2619
        %2631 = vmatprep.subr.bf16.mxu0 0
        %2632 = vmatpush1.bf16.msra.mxu0 %v2620
        %2633 = vmatprep.subr.bf16.mxu0 0
        %2634 = vmatpush1.bf16.msra.mxu0 0
        %2635 = vmatprep.subr.bf16.mxu0 0
        %2636 = vmatpush1.bf16.msra.mxu0 0
        %2637 = vmatprep.subr.bf16.mxu0 0
        %2638 = vmatpush1.bf16.msra.mxu0 0
        %2639 = vmatprep.subr.bf16.mxu0 0
        %2640 = vmatpush1.bf16.msra.mxu0 0
        %2641 = vmatprep.subr.bf16.mxu0 0
        %2642 = vmatpush1.bf16.msra.mxu0 0
        %2643 = vmatprep.subr.bf16.mxu0 0
        %2644 = vmatpush1.bf16.msra.mxu0 0
        %2645 = vmatprep.subr.bf16.mxu0 0
        %2646 = vmatpush1.bf16.msra.mxu0 0
        %2647 = vmatprep.subr.bf16.mxu0 0
        %2648 = vmatpush1.bf16.msra.mxu0 0
        %2649 = vmatprep.subr.bf16.mxu0 0
        %2650 = vmatpush1.bf16.msra.mxu0 0
        %2651 = vmatprep.subr.bf16.mxu0 0
        %2652 = vmatpush1.bf16.msra.mxu0 0
        %2653 = vmatprep.subr.bf16.mxu0 0
        %2654 = vmatpush1.bf16.msra.mxu0 0
        %2655 = vmatprep.subr.bf16.mxu0 0
        %2656 = vmatpush1.bf16.msra.mxu0 0
        %2657 = vmatprep.mubr.bf16.mxu0 0
        %2658 = vmatmul.mubr.bf16.gmra.mrb[0].mxu0 %v1311
        %v2659 = vpop.f32.mrb[0].mxu0
        %v2660 = vadd.f32 %v2504, %v2659
        %v2661 = vpop.f32.mrb[0].mxu0
        %v2662 = vpop.f32.mrb[0].mxu0
        %v2663 = vpop.f32.mrb[0].mxu0
        %2664 = vdwg.mxu0
        %v2673 = vunpack.c.l.b16 %v2441
        %v2674 = vunpack.c.l.b16 %v2442
        %v2675 = vunpack.c.l.b16 %v2443
        %v2676 = vunpack.c.l.b16 %v2444
        %v2677 = vunpack.c.l.b16 %v2445
        %v2678 = vunpack.c.l.b16 %v2446
        %v2679 = vunpack.c.l.b16 %v2447
        %v2680 = vunpack.c.l.b16 %v2448
        %v2681 = vpack.c.b16 %v2674, %v2673
        %v2682 = vpack.c.b16 %v2676, %v2675
        %v2683 = vpack.c.b16 %v2678, %v2677
        %v2684 = vpack.c.b16 %v2680, %v2679
        %2689 = vmatprep.subr.bf16.mxu0 0
        %2690 = vmatpush1.bf16.msra.mxu0 %v2681
        %2691 = vmatprep.subr.bf16.mxu0 0
        %2692 = vmatpush1.bf16.msra.mxu0 %v2682
        %2693 = vmatprep.subr.bf16.mxu0 0
        %2694 = vmatpush1.bf16.msra.mxu0 %v2683
        %2695 = vmatprep.subr.bf16.mxu0 0
        %2696 = vmatpush1.bf16.msra.mxu0 %v2684
        %2697 = vmatprep.subr.bf16.mxu0 0
        %2698 = vmatpush1.bf16.msra.mxu0 0
        %2699 = vmatprep.subr.bf16.mxu0 0
        %2700 = vmatpush1.bf16.msra.mxu0 0
        %2701 = vmatprep.subr.bf16.mxu0 0
        %2702 = vmatpush1.bf16.msra.mxu0 0
        %2703 = vmatprep.subr.bf16.mxu0 0
        %2704 = vmatpush1.bf16.msra.mxu0 0
        %2705 = vmatprep.subr.bf16.mxu0 0
        %2706 = vmatpush1.bf16.msra.mxu0 0
        %2707 = vmatprep.subr.bf16.mxu0 0
        %2708 = vmatpush1.bf16.msra.mxu0 0
        %2709 = vmatprep.subr.bf16.mxu0 0
        %2710 = vmatpush1.bf16.msra.mxu0 0
        %2711 = vmatprep.subr.bf16.mxu0 0
        %2712 = vmatpush1.bf16.msra.mxu0 0
        %2713 = vmatprep.subr.bf16.mxu0 0
        %2714 = vmatpush1.bf16.msra.mxu0 0
        %2715 = vmatprep.subr.bf16.mxu0 0
        %2716 = vmatpush1.bf16.msra.mxu0 0
        %2717 = vmatprep.subr.bf16.mxu0 0
        %2718 = vmatpush1.bf16.msra.mxu0 0
        %2719 = vmatprep.subr.bf16.mxu0 0
        %2720 = vmatpush1.bf16.msra.mxu0 0
        %2721 = vmatprep.mubr.bf16.mxu0 0
        %2722 = vmatmul.mubr.bf16.gmra.mrb[0].mxu0 %v1311
        %v2723 = vpop.f32.mrb[0].mxu0
        %v2724 = vadd.f32 %v2508, %v2723
        %v2725 = vpop.f32.mrb[0].mxu0
        %v2726 = vpop.f32.mrb[0].mxu0
        %v2727 = vpop.f32.mrb[0].mxu0
        %2728 = vdwg.mxu0
        %v2737 = vunpack.c.l.b16 %v2449
        %v2738 = vunpack.c.l.b16 %v2450
        %v2739 = vunpack.c.l.b16 %v2451
        %v2740 = vunpack.c.l.b16 %v2452
        %v2741 = vunpack.c.l.b16 %v2453
        %v2742 = vunpack.c.l.b16 %v2454
        %v2743 = vunpack.c.l.b16 %v2455
        %v2744 = vunpack.c.l.b16 %v2456
        %v2745 = vpack.c.b16 %v2738, %v2737
        %v2746 = vpack.c.b16 %v2740, %v2739
        %v2747 = vpack.c.b16 %v2742, %v2741
        %v2748 = vpack.c.b16 %v2744, %v2743
        %2753 = vmatprep.subr.bf16.mxu0 0
        %2754 = vmatpush1.bf16.msra.mxu0 %v2745
        %2755 = vmatprep.subr.bf16.mxu0 0
        %2756 = vmatpush1.bf16.msra.mxu0 %v2746
        %2757 = vmatprep.subr.bf16.mxu0 0
        %2758 = vmatpush1.bf16.msra.mxu0 %v2747
        %2759 = vmatprep.subr.bf16.mxu0 0
        %2760 = vmatpush1.bf16.msra.mxu0 %v2748
        %2761 = vmatprep.subr.bf16.mxu0 0
        %2762 = vmatpush1.bf16.msra.mxu0 0
        %2763 = vmatprep.subr.bf16.mxu0 0
        %2764 = vmatpush1.bf16.msra.mxu0 0
        %2765 = vmatprep.subr.bf16.mxu0 0
        %2766 = vmatpush1.bf16.msra.mxu0 0
        %2767 = vmatprep.subr.bf16.mxu0 0
        %2768 = vmatpush1.bf16.msra.mxu0 0
        %2769 = vmatprep.subr.bf16.mxu0 0
        %2770 = vmatpush1.bf16.msra.mxu0 0
        %2771 = vmatprep.subr.bf16.mxu0 0
        %2772 = vmatpush1.bf16.msra.mxu0 0
        %2773 = vmatprep.subr.bf16.mxu0 0
        %2774 = vmatpush1.bf16.msra.mxu0 0
        %2775 = vmatprep.subr.bf16.mxu0 0
        %2776 = vmatpush1.bf16.msra.mxu0 0
        %2777 = vmatprep.subr.bf16.mxu0 0
        %2778 = vmatpush1.bf16.msra.mxu0 0
        %2779 = vmatprep.subr.bf16.mxu0 0
        %2780 = vmatpush1.bf16.msra.mxu0 0
        %2781 = vmatprep.subr.bf16.mxu0 0
        %2782 = vmatpush1.bf16.msra.mxu0 0
        %2783 = vmatprep.subr.bf16.mxu0 0
        %2784 = vmatpush1.bf16.msra.mxu0 0
        %2785 = vmatprep.mubr.bf16.mxu0 0
        %2786 = vmatmul.mubr.bf16.gmra.mrb[0].mxu0 %v1311
        %v2787 = vpop.f32.mrb[0].mxu0
        %v2788 = vadd.f32 %v2512, %v2787
        %v2789 = vpop.f32.mrb[0].mxu0
        %v2790 = vpop.f32.mrb[0].mxu0
        %v2791 = vpop.f32.mrb[0].mxu0
        %2792 = vdwg.mxu0
        %v2801 = vunpack.c.l.b16 %v2457
        %v2802 = vunpack.c.l.b16 %v2458
        %v2803 = vunpack.c.l.b16 %v2459
        %v2804 = vunpack.c.l.b16 %v2460
        %v2805 = vunpack.c.l.b16 %v2461
        %v2806 = vunpack.c.l.b16 %v2462
        %v2807 = vunpack.c.l.b16 %v2463
        %v2808 = vunpack.c.l.b16 %v2464
        %v2809 = vpack.c.b16 %v2802, %v2801
        %v2810 = vpack.c.b16 %v2804, %v2803
        %v2811 = vpack.c.b16 %v2806, %v2805
        %v2812 = vpack.c.b16 %v2808, %v2807
        %2817 = vmatprep.subr.bf16.mxu0 0
        %2818 = vmatpush1.bf16.msra.mxu0 %v2809
        %2819 = vmatprep.subr.bf16.mxu0 0
        %2820 = vmatpush1.bf16.msra.mxu0 %v2810
        %2821 = vmatprep.subr.bf16.mxu0 0
        %2822 = vmatpush1.bf16.msra.mxu0 %v2811
        %2823 = vmatprep.subr.bf16.mxu0 0
        %2824 = vmatpush1.bf16.msra.mxu0 %v2812
        %2825 = vmatprep.subr.bf16.mxu0 0
        %2826 = vmatpush1.bf16.msra.mxu0 0
        %2827 = vmatprep.subr.bf16.mxu0 0
        %2828 = vmatpush1.bf16.msra.mxu0 0
        %2829 = vmatprep.subr.bf16.mxu0 0
        %2830 = vmatpush1.bf16.msra.mxu0 0
        %2831 = vmatprep.subr.bf16.mxu0 0
        %2832 = vmatpush1.bf16.msra.mxu0 0
        %2833 = vmatprep.subr.bf16.mxu0 0
        %2834 = vmatpush1.bf16.msra.mxu0 0
        %2835 = vmatprep.subr.bf16.mxu0 0
        %2836 = vmatpush1.bf16.msra.mxu0 0
        %2837 = vmatprep.subr.bf16.mxu0 0
        %2838 = vmatpush1.bf16.msra.mxu0 0
        %2839 = vmatprep.subr.bf16.mxu0 0
        %2840 = vmatpush1.bf16.msra.mxu0 0
        %2841 = vmatprep.subr.bf16.mxu0 0
        %2842 = vmatpush1.bf16.msra.mxu0 0
        %2843 = vmatprep.subr.bf16.mxu0 0
        %2844 = vmatpush1.bf16.msra.mxu0 0
        %2845 = vmatprep.subr.bf16.mxu0 0
        %2846 = vmatpush1.bf16.msra.mxu0 0
        %2847 = vmatprep.subr.bf16.mxu0 0
        %2848 = vmatpush1.bf16.msra.mxu0 0
        %2849 = vmatprep.mubr.bf16.mxu0 0
        %2850 = vmatmul.mubr.bf16.gmra.mrb[0].mxu0 %v1311
        %v2851 = vpop.f32.mrb[0].mxu0
        %v2852 = vadd.f32 %v2516, %v2851
        %v2853 = vpop.f32.mrb[0].mxu0
        %v2854 = vpop.f32.mrb[0].mxu0
        %v2855 = vpop.f32.mrb[0].mxu0
        %2856 = vdwg.mxu0
        %v2865 = vunpack.c.l.b16 %v2465
        %v2866 = vunpack.c.l.b16 %v2466
        %v2867 = vunpack.c.l.b16 %v2467
        %v2868 = vunpack.c.l.b16 %v2468
        %v2869 = vunpack.c.l.b16 %v2469
        %v2870 = vunpack.c.l.b16 %v2470
        %v2871 = vunpack.c.l.b16 %v2471
        %v2872 = vunpack.c.l.b16 %v2472
        %v2873 = vpack.c.b16 %v2866, %v2865
        %v2874 = vpack.c.b16 %v2868, %v2867
        %v2875 = vpack.c.b16 %v2870, %v2869
        %v2876 = vpack.c.b16 %v2872, %v2871
        %2881 = vmatprep.subr.bf16.mxu0 0
        %2882 = vmatpush1.bf16.msra.mxu0 %v2873
        %2883 = vmatprep.subr.bf16.mxu0 0
        %2884 = vmatpush1.bf16.msra.mxu0 %v2874
        %2885 = vmatprep.subr.bf16.mxu0 0
        %2886 = vmatpush1.bf16.msra.mxu0 %v2875
        %2887 = vmatprep.subr.bf16.mxu0 0
        %2888 = vmatpush1.bf16.msra.mxu0 %v2876
        %2889 = vmatprep.subr.bf16.mxu0 0
        %2890 = vmatpush1.bf16.msra.mxu0 0
        %2891 = vmatprep.subr.bf16.mxu0 0
        %2892 = vmatpush1.bf16.msra.mxu0 0
        %2893 = vmatprep.subr.bf16.mxu0 0
        %2894 = vmatpush1.bf16.msra.mxu0 0
        %2895 = vmatprep.subr.bf16.mxu0 0
        %2896 = vmatpush1.bf16.msra.mxu0 0
        %2897 = vmatprep.subr.bf16.mxu0 0
        %2898 = vmatpush1.bf16.msra.mxu0 0
        %2899 = vmatprep.subr.bf16.mxu0 0
        %2900 = vmatpush1.bf16.msra.mxu0 0
        %2901 = vmatprep.subr.bf16.mxu0 0
        %2902 = vmatpush1.bf16.msra.mxu0 0
        %2903 = vmatprep.subr.bf16.mxu0 0
        %2904 = vmatpush1.bf16.msra.mxu0 0
        %2905 = vmatprep.subr.bf16.mxu0 0
        %2906 = vmatpush1.bf16.msra.mxu0 0
        %2907 = vmatprep.subr.bf16.mxu0 0
        %2908 = vmatpush1.bf16.msra.mxu0 0
        %2909 = vmatprep.subr.bf16.mxu0 0
        %2910 = vmatpush1.bf16.msra.mxu0 0
        %2911 = vmatprep.subr.bf16.mxu0 0
        %2912 = vmatpush1.bf16.msra.mxu0 0
        %2913 = vmatprep.mubr.bf16.mxu0 0
        %2914 = vmatmul.mubr.bf16.gmra.mrb[0].mxu0 %v1311
        %v2915 = vpop.f32.mrb[0].mxu0
        %v2916 = vadd.f32 %v2520, %v2915
        %v2917 = vpop.f32.mrb[0].mxu0
        %v2918 = vpop.f32.mrb[0].mxu0
        %v2919 = vpop.f32.mrb[0].mxu0
        %2920 = vdwg.mxu0
        %v2929 = vunpack.c.l.b16 %v2473
        %v2930 = vunpack.c.l.b16 %v2474
        %v2931 = vunpack.c.l.b16 %v2475
        %v2932 = vunpack.c.l.b16 %v2476
        %v2933 = vunpack.c.l.b16 %v2477
        %v2934 = vunpack.c.l.b16 %v2478
        %v2935 = vunpack.c.l.b16 %v2479
        %v2936 = vunpack.c.l.b16 %v2480
        %v2937 = vpack.c.b16 %v2930, %v2929
        %v2938 = vpack.c.b16 %v2932, %v2931
        %v2939 = vpack.c.b16 %v2934, %v2933
        %v2940 = vpack.c.b16 %v2936, %v2935
        %2945 = vmatprep.subr.bf16.mxu0 0
        %2946 = vmatpush1.bf16.msra.mxu0 %v2937
        %2947 = vmatprep.subr.bf16.mxu0 0
        %2948 = vmatpush1.bf16.msra.mxu0 %v2938
        %2949 = vmatprep.subr.bf16.mxu0 0
        %2950 = vmatpush1.bf16.msra.mxu0 %v2939
        %2951 = vmatprep.subr.bf16.mxu0 0
        %2952 = vmatpush1.bf16.msra.mxu0 %v2940
        %2953 = vmatprep.subr.bf16.mxu0 0
        %2954 = vmatpush1.bf16.msra.mxu0 0
        %2955 = vmatprep.subr.bf16.mxu0 0
        %2956 = vmatpush1.bf16.msra.mxu0 0
        %2957 = vmatprep.subr.bf16.mxu0 0
        %2958 = vmatpush1.bf16.msra.mxu0 0
        %2959 = vmatprep.subr.bf16.mxu0 0
        %2960 = vmatpush1.bf16.msra.mxu0 0
        %2961 = vmatprep.subr.bf16.mxu0 0
        %2962 = vmatpush1.bf16.msra.mxu0 0
        %2963 = vmatprep.subr.bf16.mxu0 0
        %2964 = vmatpush1.bf16.msra.mxu0 0
        %2965 = vmatprep.subr.bf16.mxu0 0
        %2966 = vmatpush1.bf16.msra.mxu0 0
        %2967 = vmatprep.subr.bf16.mxu0 0
        %2968 = vmatpush1.bf16.msra.mxu0 0
        %2969 = vmatprep.subr.bf16.mxu0 0
        %2970 = vmatpush1.bf16.msra.mxu0 0
        %2971 = vmatprep.subr.bf16.mxu0 0
        %2972 = vmatpush1.bf16.msra.mxu0 0
        %2973 = vmatprep.subr.bf16.mxu0 0
        %2974 = vmatpush1.bf16.msra.mxu0 0
        %2975 = vmatprep.subr.bf16.mxu0 0
        %2976 = vmatpush1.bf16.msra.mxu0 0
        %2977 = vmatprep.mubr.bf16.mxu0 0
        %2978 = vmatmul.mubr.bf16.gmra.mrb[0].mxu0 %v1311
        %v2979 = vpop.f32.mrb[0].mxu0
        %v2980 = vadd.f32 %v2524, %v2979
        %v2981 = vpop.f32.mrb[0].mxu0
        %v2982 = vpop.f32.mrb[0].mxu0
        %v2983 = vpop.f32.mrb[0].mxu0
        %2984 = vdwg.mxu0
        %v2993 = vunpack.c.l.b16 %v2481
        %v2994 = vunpack.c.l.b16 %v2482
        %v2995 = vunpack.c.l.b16 %v2483
        %v2996 = vunpack.c.l.b16 %v2484
        %v2997 = vunpack.c.l.b16 %v2485
        %v2998 = vunpack.c.l.b16 %v2486
        %v2999 = vunpack.c.l.b16 %v2487
        %v3000 = vunpack.c.l.b16 %v2488
        %v3001 = vpack.c.b16 %v2994, %v2993
        %v3002 = vpack.c.b16 %v2996, %v2995
        %v3003 = vpack.c.b16 %v2998, %v2997
        %v3004 = vpack.c.b16 %v3000, %v2999
        %3009 = vmatprep.subr.bf16.mxu0 0
        %3010 = vmatpush1.bf16.msra.mxu0 %v3001
        %3011 = vmatprep.subr.bf16.mxu0 0
        %3012 = vmatpush1.bf16.msra.mxu0 %v3002
        %3013 = vmatprep.subr.bf16.mxu0 0
        %3014 = vmatpush1.bf16.msra.mxu0 %v3003
        %3015 = vmatprep.subr.bf16.mxu0 0
        %3016 = vmatpush1.bf16.msra.mxu0 %v3004
        %3017 = vmatprep.subr.bf16.mxu0 0
        %3018 = vmatpush1.bf16.msra.mxu0 0
        %3019 = vmatprep.subr.bf16.mxu0 0
        %3020 = vmatpush1.bf16.msra.mxu0 0
        %3021 = vmatprep.subr.bf16.mxu0 0
        %3022 = vmatpush1.bf16.msra.mxu0 0
        %3023 = vmatprep.subr.bf16.mxu0 0
        %3024 = vmatpush1.bf16.msra.mxu0 0
        %3025 = vmatprep.subr.bf16.mxu0 0
        %3026 = vmatpush1.bf16.msra.mxu0 0
        %3027 = vmatprep.subr.bf16.mxu0 0
        %3028 = vmatpush1.bf16.msra.mxu0 0
        %3029 = vmatprep.subr.bf16.mxu0 0
        %3030 = vmatpush1.bf16.msra.mxu0 0
        %3031 = vmatprep.subr.bf16.mxu0 0
        %3032 = vmatpush1.bf16.msra.mxu0 0
        %3033 = vmatprep.subr.bf16.mxu0 0
        %3034 = vmatpush1.bf16.msra.mxu0 0
        %3035 = vmatprep.subr.bf16.mxu0 0
        %3036 = vmatpush1.bf16.msra.mxu0 0
        %3037 = vmatprep.subr.bf16.mxu0 0
        %3038 = vmatpush1.bf16.msra.mxu0 0
        %3039 = vmatprep.subr.bf16.mxu0 0
        %3040 = vmatpush1.bf16.msra.mxu0 0
        %3041 = vmatprep.mubr.bf16.mxu0 0
        %3042 = vmatmul.mubr.bf16.gmra.mrb[0].mxu0 %v1311
        %v3043 = vpop.f32.mrb[0].mxu0
        %v3044 = vadd.f32 %v2528, %v3043
        %v3045 = vpop.f32.mrb[0].mxu0
        %v3046 = vpop.f32.mrb[0].mxu0
        %v3047 = vpop.f32.mrb[0].mxu0
        %3048 = vdwg.mxu0
        %v3049 = vpack.c.bf16 %v1348, %v1348
        %v3050 = vpack.c.bf16 %v1412, %v1412
        %v3051 = vpack.c.bf16 %v1476, %v1476
        %v3052 = vpack.c.bf16 %v1540, %v1540
        %v3053 = vpack.c.bf16 %v1604, %v1604
        %v3054 = vpack.c.bf16 %v1668, %v1668
        %v3055 = vpack.c.bf16 %v1732, %v1732
        %v3056 = vpack.c.bf16 %v1796, %v1796
        %v3057 = vpack.c.bf16 %v1972, %v1972
        %v3058 = vpack.c.bf16 %v2036, %v2036
        %v3059 = vpack.c.bf16 %v2100, %v2100
        %v3060 = vpack.c.bf16 %v2164, %v2164
        %v3061 = vpack.c.bf16 %v2228, %v2228
        %v3062 = vpack.c.bf16 %v2292, %v2292
        %v3063 = vpack.c.bf16 %v2356, %v2356
        %v3064 = vpack.c.bf16 %v2420, %v2420
        %v3065 = vpack.c.bf16 %v2596, %v2596
        %v3066 = vpack.c.bf16 %v2660, %v2660
        %v3067 = vpack.c.bf16 %v2724, %v2724
        %v3068 = vpack.c.bf16 %v2788, %v2788
        %v3069 = vpack.c.bf16 %v2852, %v2852
        %v3070 = vpack.c.bf16 %v2916, %v2916
        %v3071 = vpack.c.bf16 %v2980, %v2980
        %v3072 = vpack.c.bf16 %v3044, %v3044
        %vm3073 = vcmask 64512
        %v3075 = vsel %vm3073, %v3049, 0
        %v3078 = vsel %vm3073, %v3057, 0
        %3080 = vmatprep.subr.bf16.mxu0 0
        %3081 = vmatpush1.bf16.xpose.msra.mxu0 %v3078
        %3082 = vmatprep.subr.bf16.mxu0 0
        %3083 = vmatpush1.bf16.xpose.msra.mxu0 0
        %3084 = vmatprep.subr.bf16.mxu0 0
        %3085 = vmatpush1.bf16.xpose.msra.mxu0 0
        %3086 = vmatprep.subr.bf16.mxu0 0
        %3087 = vmatpush1.bf16.xpose.msra.mxu0 0
        %3088 = vmatprep.subr.bf16.mxu0 0
        %3089 = vmatpush1.bf16.xpose.msra.mxu0 0
        %3090 = vmatprep.subr.bf16.mxu0 0
        %3091 = vmatpush1.bf16.xpose.msra.mxu0 0
        %3092 = vmatprep.subr.bf16.mxu0 0
        %3093 = vmatpush1.bf16.xpose.msra.mxu0 0
        %3094 = vmatprep.subr.bf16.mxu0 0
        %3095 = vmatpush1.bf16.xpose.msra.mxu0 0
        %3096 = vmatprep.subr.bf16.mxu0 0
        %3097 = vmatpush1.bf16.xpose.msra.mxu0 0
        %3098 = vmatprep.subr.bf16.mxu0 0
        %3099 = vmatpush1.bf16.xpose.msra.mxu0 0
        %3100 = vmatprep.subr.bf16.mxu0 0
        %3101 = vmatpush1.bf16.xpose.msra.mxu0 0
        %3102 = vmatprep.subr.bf16.mxu0 0
        %3103 = vmatpush1.bf16.xpose.msra.mxu0 0
        %3104 = vmatprep.subr.bf16.mxu0 0
        %3105 = vmatpush1.bf16.xpose.msra.mxu0 0
        %3106 = vmatprep.subr.bf16.mxu0 0
        %3107 = vmatpush1.bf16.xpose.msra.mxu0 0
        %3108 = vmatprep.subr.bf16.mxu0 0
        %3109 = vmatpush1.bf16.xpose.msra.mxu0 0
        %3110 = vmatprep.subr.bf16.mxu0 0
        %3111 = vmatpush1.bf16.xpose.msra.mxu0 0
        %3112 = vmatprep.mubr.bf16.mxu0 0
        %3113 = vmatmul.mubr.bf16.gmra.mrb[0].mxu0 %v3075
        %v3114 = vpop.f32.mrb[0].mxu0
        %v3115 = vadd.f32 0.0, %v3114
        %v3116 = vpop.f32.mrb[0].mxu0
        %v3117 = vpop.f32.mrb[0].mxu0
        %v3118 = vpop.f32.mrb[0].mxu0
        %3119 = vdwg.mxu0
        %v3121 = vsel %vm3073, %v3050, 0
        %v3124 = vsel %vm3073, %v3058, 0
        %3126 = vmatprep.subr.bf16.mxu0 0
        %3127 = vmatpush1.bf16.xpose.msra.mxu0 %v3124
        %3128 = vmatprep.subr.bf16.mxu0 0
        %3129 = vmatpush1.bf16.xpose.msra.mxu0 0
        %3130 = vmatprep.subr.bf16.mxu0 0
        %3131 = vmatpush1.bf16.xpose.msra.mxu0 0
        %3132 = vmatprep.subr.bf16.mxu0 0
        %3133 = vmatpush1.bf16.xpose.msra.mxu0 0
        %3134 = vmatprep.subr.bf16.mxu0 0
        %3135 = vmatpush1.bf16.xpose.msra.mxu0 0
        %3136 = vmatprep.subr.bf16.mxu0 0
        %3137 = vmatpush1.bf16.xpose.msra.mxu0 0
        %3138 = vmatprep.subr.bf16.mxu0 0
        %3139 = vmatpush1.bf16.xpose.msra.mxu0 0
        %3140 = vmatprep.subr.bf16.mxu0 0
        %3141 = vmatpush1.bf16.xpose.msra.mxu0 0
        %3142 = vmatprep.subr.bf16.mxu0 0
        %3143 = vmatpush1.bf16.xpose.msra.mxu0 0
        %3144 = vmatprep.subr.bf16.mxu0 0
        %3145 = vmatpush1.bf16.xpose.msra.mxu0 0
        %3146 = vmatprep.subr.bf16.mxu0 0
        %3147 = vmatpush1.bf16.xpose.msra.mxu0 0
        %3148 = vmatprep.subr.bf16.mxu0 0
        %3149 = vmatpush1.bf16.xpose.msra.mxu0 0
        %3150 = vmatprep.subr.bf16.mxu0 0
        %3151 = vmatpush1.bf16.xpose.msra.mxu0 0
        %3152 = vmatprep.subr.bf16.mxu0 0
        %3153 = vmatpush1.bf16.xpose.msra.mxu0 0
        %3154 = vmatprep.subr.bf16.mxu0 0
        %3155 = vmatpush1.bf16.xpose.msra.mxu0 0
        %3156 = vmatprep.subr.bf16.mxu0 0
        %3157 = vmatpush1.bf16.xpose.msra.mxu0 0
        %3158 = vmatprep.mubr.bf16.mxu0 0
        %3159 = vmatmul.mubr.bf16.gmra.mrb[0].mxu0 %v3121
        %v3160 = vpop.f32.mrb[0].mxu0
        %v3161 = vadd.f32 0.0, %v3160
        %v3162 = vpop.f32.mrb[0].mxu0
        %v3163 = vpop.f32.mrb[0].mxu0
        %v3164 = vpop.f32.mrb[0].mxu0
        %3165 = vdwg.mxu0
        %v3167 = vsel %vm3073, %v3051, 0
        %v3170 = vsel %vm3073, %v3059, 0
        %3172 = vmatprep.subr.bf16.mxu0 0
        %3173 = vmatpush1.bf16.xpose.msra.mxu0 %v3170
        %3174 = vmatprep.subr.bf16.mxu0 0
        %3175 = vmatpush1.bf16.xpose.msra.mxu0 0
        %3176 = vmatprep.subr.bf16.mxu0 0
        %3177 = vmatpush1.bf16.xpose.msra.mxu0 0
        %3178 = vmatprep.subr.bf16.mxu0 0
        %3179 = vmatpush1.bf16.xpose.msra.mxu0 0
        %3180 = vmatprep.subr.bf16.mxu0 0
        %3181 = vmatpush1.bf16.xpose.msra.mxu0 0
        %3182 = vmatprep.subr.bf16.mxu0 0
        %3183 = vmatpush1.bf16.xpose.msra.mxu0 0
        %3184 = vmatprep.subr.bf16.mxu0 0
        %3185 = vmatpush1.bf16.xpose.msra.mxu0 0
        %3186 = vmatprep.subr.bf16.mxu0 0
        %3187 = vmatpush1.bf16.xpose.msra.mxu0 0
        %3188 = vmatprep.subr.bf16.mxu0 0
        %3189 = vmatpush1.bf16.xpose.msra.mxu0 0
        %3190 = vmatprep.subr.bf16.mxu0 0
        %3191 = vmatpush1.bf16.xpose.msra.mxu0 0
        %3192 = vmatprep.subr.bf16.mxu0 0
        %3193 = vmatpush1.bf16.xpose.msra.mxu0 0
        %3194 = vmatprep.subr.bf16.mxu0 0
        %3195 = vmatpush1.bf16.xpose.msra.mxu0 0
        %3196 = vmatprep.subr.bf16.mxu0 0
        %3197 = vmatpush1.bf16.xpose.msra.mxu0 0
        %3198 = vmatprep.subr.bf16.mxu0 0
        %3199 = vmatpush1.bf16.xpose.msra.mxu0 0
        %3200 = vmatprep.subr.bf16.mxu0 0
        %3201 = vmatpush1.bf16.xpose.msra.mxu0 0
        %3202 = vmatprep.subr.bf16.mxu0 0
        %3203 = vmatpush1.bf16.xpose.msra.mxu0 0
        %3204 = vmatprep.mubr.bf16.mxu0 0
        %3205 = vmatmul.mubr.bf16.gmra.mrb[0].mxu0 %v3167
        %v3206 = vpop.f32.mrb[0].mxu0
        %v3207 = vadd.f32 0.0, %v3206
        %v3208 = vpop.f32.mrb[0].mxu0
        %v3209 = vpop.f32.mrb[0].mxu0
        %v3210 = vpop.f32.mrb[0].mxu0
        %3211 = vdwg.mxu0
        %v3213 = vsel %vm3073, %v3052, 0
        %v3216 = vsel %vm3073, %v3060, 0
        %3218 = vmatprep.subr.bf16.mxu0 0
        %3219 = vmatpush1.bf16.xpose.msra.mxu0 %v3216
        %3220 = vmatprep.subr.bf16.mxu0 0
        %3221 = vmatpush1.bf16.xpose.msra.mxu0 0
        %3222 = vmatprep.subr.bf16.mxu0 0
        %3223 = vmatpush1.bf16.xpose.msra.mxu0 0
        %3224 = vmatprep.subr.bf16.mxu0 0
        %3225 = vmatpush1.bf16.xpose.msra.mxu0 0
        %3226 = vmatprep.subr.bf16.mxu0 0
        %3227 = vmatpush1.bf16.xpose.msra.mxu0 0
        %3228 = vmatprep.subr.bf16.mxu0 0
        %3229 = vmatpush1.bf16.xpose.msra.mxu0 0
        %3230 = vmatprep.subr.bf16.mxu0 0
        %3231 = vmatpush1.bf16.xpose.msra.mxu0 0
        %3232 = vmatprep.subr.bf16.mxu0 0
        %3233 = vmatpush1.bf16.xpose.msra.mxu0 0
        %3234 = vmatprep.subr.bf16.mxu0 0
        %3235 = vmatpush1.bf16.xpose.msra.mxu0 0
        %3236 = vmatprep.subr.bf16.mxu0 0
        %3237 = vmatpush1.bf16.xpose.msra.mxu0 0
        %3238 = vmatprep.subr.bf16.mxu0 0
        %3239 = vmatpush1.bf16.xpose.msra.mxu0 0
        %3240 = vmatprep.subr.bf16.mxu0 0
        %3241 = vmatpush1.bf16.xpose.msra.mxu0 0
        %3242 = vmatprep.subr.bf16.mxu0 0
        %3243 = vmatpush1.bf16.xpose.msra.mxu0 0
        %3244 = vmatprep.subr.bf16.mxu0 0
        %3245 = vmatpush1.bf16.xpose.msra.mxu0 0
        %3246 = vmatprep.subr.bf16.mxu0 0
        %3247 = vmatpush1.bf16.xpose.msra.mxu0 0
        %3248 = vmatprep.subr.bf16.mxu0 0
        %3249 = vmatpush1.bf16.xpose.msra.mxu0 0
        %3250 = vmatprep.mubr.bf16.mxu0 0
        %3251 = vmatmul.mubr.bf16.gmra.mrb[0].mxu0 %v3213
        %v3252 = vpop.f32.mrb[0].mxu0
        %v3253 = vadd.f32 0.0, %v3252
        %v3254 = vpop.f32.mrb[0].mxu0
        %v3255 = vpop.f32.mrb[0].mxu0
        %v3256 = vpop.f32.mrb[0].mxu0
        %3257 = vdwg.mxu0
        %v3259 = vsel %vm3073, %v3053, 0
        %v3262 = vsel %vm3073, %v3061, 0
        %3264 = vmatprep.subr.bf16.mxu0 0
        %3265 = vmatpush1.bf16.xpose.msra.mxu0 %v3262
        %3266 = vmatprep.subr.bf16.mxu0 0
        %3267 = vmatpush1.bf16.xpose.msra.mxu0 0
        %3268 = vmatprep.subr.bf16.mxu0 0
        %3269 = vmatpush1.bf16.xpose.msra.mxu0 0
        %3270 = vmatprep.subr.bf16.mxu0 0
        %3271 = vmatpush1.bf16.xpose.msra.mxu0 0
        %3272 = vmatprep.subr.bf16.mxu0 0
        %3273 = vmatpush1.bf16.xpose.msra.mxu0 0
        %3274 = vmatprep.subr.bf16.mxu0 0
        %3275 = vmatpush1.bf16.xpose.msra.mxu0 0
        %3276 = vmatprep.subr.bf16.mxu0 0
        %3277 = vmatpush1.bf16.xpose.msra.mxu0 0
        %3278 = vmatprep.subr.bf16.mxu0 0
        %3279 = vmatpush1.bf16.xpose.msra.mxu0 0
        %3280 = vmatprep.subr.bf16.mxu0 0
        %3281 = vmatpush1.bf16.xpose.msra.mxu0 0
        %3282 = vmatprep.subr.bf16.mxu0 0
        %3283 = vmatpush1.bf16.xpose.msra.mxu0 0
        %3284 = vmatprep.subr.bf16.mxu0 0
        %3285 = vmatpush1.bf16.xpose.msra.mxu0 0
        %3286 = vmatprep.subr.bf16.mxu0 0
        %3287 = vmatpush1.bf16.xpose.msra.mxu0 0
        %3288 = vmatprep.subr.bf16.mxu0 0
        %3289 = vmatpush1.bf16.xpose.msra.mxu0 0
        %3290 = vmatprep.subr.bf16.mxu0 0
        %3291 = vmatpush1.bf16.xpose.msra.mxu0 0
        %3292 = vmatprep.subr.bf16.mxu0 0
        %3293 = vmatpush1.bf16.xpose.msra.mxu0 0
        %3294 = vmatprep.subr.bf16.mxu0 0
        %3295 = vmatpush1.bf16.xpose.msra.mxu0 0
        %3296 = vmatprep.mubr.bf16.mxu0 0
        %3297 = vmatmul.mubr.bf16.gmra.mrb[0].mxu0 %v3259
        %v3298 = vpop.f32.mrb[0].mxu0
        %v3299 = vadd.f32 0.0, %v3298
        %v3300 = vpop.f32.mrb[0].mxu0
        %v3301 = vpop.f32.mrb[0].mxu0
        %v3302 = vpop.f32.mrb[0].mxu0
        %3303 = vdwg.mxu0
        %v3305 = vsel %vm3073, %v3054, 0
        %v3308 = vsel %vm3073, %v3062, 0
        %3310 = vmatprep.subr.bf16.mxu0 0
        %3311 = vmatpush1.bf16.xpose.msra.mxu0 %v3308
        %3312 = vmatprep.subr.bf16.mxu0 0
        %3313 = vmatpush1.bf16.xpose.msra.mxu0 0
        %3314 = vmatprep.subr.bf16.mxu0 0
        %3315 = vmatpush1.bf16.xpose.msra.mxu0 0
        %3316 = vmatprep.subr.bf16.mxu0 0
        %3317 = vmatpush1.bf16.xpose.msra.mxu0 0
        %3318 = vmatprep.subr.bf16.mxu0 0
        %3319 = vmatpush1.bf16.xpose.msra.mxu0 0
        %3320 = vmatprep.subr.bf16.mxu0 0
        %3321 = vmatpush1.bf16.xpose.msra.mxu0 0
        %3322 = vmatprep.subr.bf16.mxu0 0
        %3323 = vmatpush1.bf16.xpose.msra.mxu0 0
        %3324 = vmatprep.subr.bf16.mxu0 0
        %3325 = vmatpush1.bf16.xpose.msra.mxu0 0
        %3326 = vmatprep.subr.bf16.mxu0 0
        %3327 = vmatpush1.bf16.xpose.msra.mxu0 0
        %3328 = vmatprep.subr.bf16.mxu0 0
        %3329 = vmatpush1.bf16.xpose.msra.mxu0 0
        %3330 = vmatprep.subr.bf16.mxu0 0
        %3331 = vmatpush1.bf16.xpose.msra.mxu0 0
        %3332 = vmatprep.subr.bf16.mxu0 0
        %3333 = vmatpush1.bf16.xpose.msra.mxu0 0
        %3334 = vmatprep.subr.bf16.mxu0 0
        %3335 = vmatpush1.bf16.xpose.msra.mxu0 0
        %3336 = vmatprep.subr.bf16.mxu0 0
        %3337 = vmatpush1.bf16.xpose.msra.mxu0 0
        %3338 = vmatprep.subr.bf16.mxu0 0
        %3339 = vmatpush1.bf16.xpose.msra.mxu0 0
        %3340 = vmatprep.subr.bf16.mxu0 0
        %3341 = vmatpush1.bf16.xpose.msra.mxu0 0
        %3342 = vmatprep.mubr.bf16.mxu0 0
        %3343 = vmatmul.mubr.bf16.gmra.mrb[0].mxu0 %v3305
        %v3344 = vpop.f32.mrb[0].mxu0
        %v3345 = vadd.f32 0.0, %v3344
        %v3346 = vpop.f32.mrb[0].mxu0
        %v3347 = vpop.f32.mrb[0].mxu0
        %v3348 = vpop.f32.mrb[0].mxu0
        %3349 = vdwg.mxu0
        %v3351 = vsel %vm3073, %v3055, 0
        %v3354 = vsel %vm3073, %v3063, 0
        %3356 = vmatprep.subr.bf16.mxu0 0
        %3357 = vmatpush1.bf16.xpose.msra.mxu0 %v3354
        %3358 = vmatprep.subr.bf16.mxu0 0
        %3359 = vmatpush1.bf16.xpose.msra.mxu0 0
        %3360 = vmatprep.subr.bf16.mxu0 0
        %3361 = vmatpush1.bf16.xpose.msra.mxu0 0
        %3362 = vmatprep.subr.bf16.mxu0 0
        %3363 = vmatpush1.bf16.xpose.msra.mxu0 0
        %3364 = vmatprep.subr.bf16.mxu0 0
        %3365 = vmatpush1.bf16.xpose.msra.mxu0 0
        %3366 = vmatprep.subr.bf16.mxu0 0
        %3367 = vmatpush1.bf16.xpose.msra.mxu0 0
        %3368 = vmatprep.subr.bf16.mxu0 0
        %3369 = vmatpush1.bf16.xpose.msra.mxu0 0
        %3370 = vmatprep.subr.bf16.mxu0 0
        %3371 = vmatpush1.bf16.xpose.msra.mxu0 0
        %3372 = vmatprep.subr.bf16.mxu0 0
        %3373 = vmatpush1.bf16.xpose.msra.mxu0 0
        %3374 = vmatprep.subr.bf16.mxu0 0
        %3375 = vmatpush1.bf16.xpose.msra.mxu0 0
        %3376 = vmatprep.subr.bf16.mxu0 0
        %3377 = vmatpush1.bf16.xpose.msra.mxu0 0
        %3378 = vmatprep.subr.bf16.mxu0 0
        %3379 = vmatpush1.bf16.xpose.msra.mxu0 0
        %3380 = vmatprep.subr.bf16.mxu0 0
        %3381 = vmatpush1.bf16.xpose.msra.mxu0 0
        %3382 = vmatprep.subr.bf16.mxu0 0
        %3383 = vmatpush1.bf16.xpose.msra.mxu0 0
        %3384 = vmatprep.subr.bf16.mxu0 0
        %3385 = vmatpush1.bf16.xpose.msra.mxu0 0
        %3386 = vmatprep.subr.bf16.mxu0 0
        %3387 = vmatpush1.bf16.xpose.msra.mxu0 0
        %3388 = vmatprep.mubr.bf16.mxu0 0
        %3389 = vmatmul.mubr.bf16.gmra.mrb[0].mxu0 %v3351
        %v3390 = vpop.f32.mrb[0].mxu0
        %v3391 = vadd.f32 0.0, %v3390
        %v3392 = vpop.f32.mrb[0].mxu0
        %v3393 = vpop.f32.mrb[0].mxu0
        %v3394 = vpop.f32.mrb[0].mxu0
        %3395 = vdwg.mxu0
        %v3397 = vsel %vm3073, %v3056, 0
        %v3400 = vsel %vm3073, %v3064, 0
        %3402 = vmatprep.subr.bf16.mxu0 0
        %3403 = vmatpush1.bf16.xpose.msra.mxu0 %v3400
        %3404 = vmatprep.subr.bf16.mxu0 0
        %3405 = vmatpush1.bf16.xpose.msra.mxu0 0
        %3406 = vmatprep.subr.bf16.mxu0 0
        %3407 = vmatpush1.bf16.xpose.msra.mxu0 0
        %3408 = vmatprep.subr.bf16.mxu0 0
        %3409 = vmatpush1.bf16.xpose.msra.mxu0 0
        %3410 = vmatprep.subr.bf16.mxu0 0
        %3411 = vmatpush1.bf16.xpose.msra.mxu0 0
        %3412 = vmatprep.subr.bf16.mxu0 0
        %3413 = vmatpush1.bf16.xpose.msra.mxu0 0
        %3414 = vmatprep.subr.bf16.mxu0 0
        %3415 = vmatpush1.bf16.xpose.msra.mxu0 0
        %3416 = vmatprep.subr.bf16.mxu0 0
        %3417 = vmatpush1.bf16.xpose.msra.mxu0 0
        %3418 = vmatprep.subr.bf16.mxu0 0
        %3419 = vmatpush1.bf16.xpose.msra.mxu0 0
        %3420 = vmatprep.subr.bf16.mxu0 0
        %3421 = vmatpush1.bf16.xpose.msra.mxu0 0
        %3422 = vmatprep.subr.bf16.mxu0 0
        %3423 = vmatpush1.bf16.xpose.msra.mxu0 0
        %3424 = vmatprep.subr.bf16.mxu0 0
        %3425 = vmatpush1.bf16.xpose.msra.mxu0 0
        %3426 = vmatprep.subr.bf16.mxu0 0
        %3427 = vmatpush1.bf16.xpose.msra.mxu0 0
        %3428 = vmatprep.subr.bf16.mxu0 0
        %3429 = vmatpush1.bf16.xpose.msra.mxu0 0
        %3430 = vmatprep.subr.bf16.mxu0 0
        %3431 = vmatpush1.bf16.xpose.msra.mxu0 0
        %3432 = vmatprep.subr.bf16.mxu0 0
        %3433 = vmatpush1.bf16.xpose.msra.mxu0 0
        %3434 = vmatprep.mubr.bf16.mxu0 0
        %3435 = vmatmul.mubr.bf16.gmra.mrb[0].mxu0 %v3397
        %v3436 = vpop.f32.mrb[0].mxu0
        %v3437 = vadd.f32 0.0, %v3436
        %v3438 = vpop.f32.mrb[0].mxu0
        %v3439 = vpop.f32.mrb[0].mxu0
        %v3440 = vpop.f32.mrb[0].mxu0
        %3441 = vdwg.mxu0
        %v3442 = vmul.f32 %v3115, 0.35355338
        %v3443 = vmul.f32 %v3161, 0.35355338
        %v3444 = vmul.f32 %v3207, 0.35355338
        %v3445 = vmul.f32 %v3253, 0.35355338
        %v3446 = vmul.f32 %v3299, 0.35355338
        %v3447 = vmul.f32 %v3345, 0.35355338
        %v3448 = vmul.f32 %v3391, 0.35355338
        %v3449 = vmul.f32 %v3437, 0.35355338
        %v3450 = vsel %vm3073, %v3442, -inf
        %3451 = vmax.xlane.f32.xlu0 %v3450
        %v3452 = vpop.xlane.xlu0 %3451
        %v3453 = vsel %vm3073, %v3443, -inf
        %3454 = vmax.xlane.f32.xlu0 %v3453
        %v3455 = vpop.xlane.xlu0 %3454
        %v3456 = vsel %vm3073, %v3444, -inf
        %3457 = vmax.xlane.f32.xlu0 %v3456
        %v3458 = vpop.xlane.xlu0 %3457
        %v3459 = vsel %vm3073, %v3445, -inf
        %3460 = vmax.xlane.f32.xlu0 %v3459
        %v3461 = vpop.xlane.xlu0 %3460
        %v3462 = vsel %vm3073, %v3446, -inf
        %3463 = vmax.xlane.f32.xlu0 %v3462
        %v3464 = vpop.xlane.xlu0 %3463
        %v3465 = vsel %vm3073, %v3447, -inf
        %3466 = vmax.xlane.f32.xlu0 %v3465
        %v3467 = vpop.xlane.xlu0 %3466
        %v3468 = vsel %vm3073, %v3448, -inf
        %3469 = vmax.xlane.f32.xlu0 %v3468
        %v3470 = vpop.xlane.xlu0 %3469
        %v3471 = vsel %vm3073, %v3449, -inf
        %3472 = vmax.xlane.f32.xlu0 %v3471
        %v3473 = vpop.xlane.xlu0 %3472
        %v3474 = vsub.f32 %v3442, %v3452
        %v3475 = vsub.f32 %v3443, %v3455
        %v3476 = vsub.f32 %v3444, %v3458
        %v3477 = vsub.f32 %v3445, %v3461
        %v3478 = vsub.f32 %v3446, %v3464
        %v3479 = vsub.f32 %v3447, %v3467
        %v3480 = vsub.f32 %v3448, %v3470
        %v3481 = vsub.f32 %v3449, %v3473
        %v3482 = vmul.f32 %v3474, 1.442695
        %v3483 = vpow.pop %v3482
        %v3484 = vmul.f32 %v3475, 1.442695
        %v3485 = vpow.pop %v3484
        %v3486 = vmul.f32 %v3476, 1.442695
        %v3487 = vpow.pop %v3486
        %v3488 = vmul.f32 %v3477, 1.442695
        %v3489 = vpow.pop %v3488
        %v3490 = vmul.f32 %v3478, 1.442695
        %v3491 = vpow.pop %v3490
        %v3492 = vmul.f32 %v3479, 1.442695
        %v3493 = vpow.pop %v3492
        %v3494 = vmul.f32 %v3480, 1.442695
        %v3495 = vpow.pop %v3494
        %v3496 = vmul.f32 %v3481, 1.442695
        %v3497 = vpow.pop %v3496
        %v3498 = vsel %vm3073, %v3483, 0.0
        %3499 = vadd.xlane.f32.xlu0 %v3498
        %v3500 = vpop.xlane.xlu0 %3499
        %v3501 = vsel %vm3073, %v3485, 0.0
        %3502 = vadd.xlane.f32.xlu0 %v3501
        %v3503 = vpop.xlane.xlu0 %3502
        %v3504 = vsel %vm3073, %v3487, 0.0
        %3505 = vadd.xlane.f32.xlu0 %v3504
        %v3506 = vpop.xlane.xlu0 %3505
        %v3507 = vsel %vm3073, %v3489, 0.0
        %3508 = vadd.xlane.f32.xlu0 %v3507
        %v3509 = vpop.xlane.xlu0 %3508
        %v3510 = vsel %vm3073, %v3491, 0.0
        %3511 = vadd.xlane.f32.xlu0 %v3510
        %v3512 = vpop.xlane.xlu0 %3511
        %v3513 = vsel %vm3073, %v3493, 0.0
        %3514 = vadd.xlane.f32.xlu0 %v3513
        %v3515 = vpop.xlane.xlu0 %3514
        %v3516 = vsel %vm3073, %v3495, 0.0
        %3517 = vadd.xlane.f32.xlu0 %v3516
        %v3518 = vpop.xlane.xlu0 %3517
        %v3519 = vsel %vm3073, %v3497, 0.0
        %3520 = vadd.xlane.f32.xlu0 %v3519
        %v3521 = vpop.xlane.xlu0 %3520
        %v3522 = vrcp.pop %v3500
        %v3523 = vrcp.pop %v3503
        %v3524 = vrcp.pop %v3506
        %v3525 = vrcp.pop %v3509
        %v3526 = vrcp.pop %v3512
        %v3527 = vrcp.pop %v3515
        %v3528 = vrcp.pop %v3518
        %v3529 = vrcp.pop %v3521
        %v3530 = vmul.f32 %v3483, %v3522
        %v3531 = vmul.f32 %v3485, %v3523
        %v3532 = vmul.f32 %v3487, %v3524
        %v3533 = vmul.f32 %v3489, %v3525
        %v3534 = vmul.f32 %v3491, %v3526
        %v3535 = vmul.f32 %v3493, %v3527
        %v3536 = vmul.f32 %v3495, %v3528
        %v3537 = vmul.f32 %v3497, %v3529
        %v3538 = vpack.c.bf16 %v3530, %v3530
        %v3539 = vpack.c.bf16 %v3531, %v3531
        %v3540 = vpack.c.bf16 %v3532, %v3532
        %v3541 = vpack.c.bf16 %v3533, %v3533
        %v3542 = vpack.c.bf16 %v3534, %v3534
        %v3543 = vpack.c.bf16 %v3535, %v3535
        %v3544 = vpack.c.bf16 %v3536, %v3536
        %v3545 = vpack.c.bf16 %v3537, %v3537
        %v3547 = vsel %vm3073, %v3538, 0
        %vm3549 = vcmask 1043456
        %v3551 = vsel %vm3549, %v3065, 0
        %3553 = vmatprep.subr.bf16.mxu0 0
        %3554 = vmatpush1.bf16.msra.mxu0 %v3551
        %3555 = vmatprep.subr.bf16.mxu0 0
        %3556 = vmatpush1.bf16.msra.mxu0 0
        %3557 = vmatprep.subr.bf16.mxu0 0
        %3558 = vmatpush1.bf16.msra.mxu0 0
        %3559 = vmatprep.subr.bf16.mxu0 0
        %3560 = vmatpush1.bf16.msra.mxu0 0
        %3561 = vmatprep.subr.bf16.mxu0 0
        %3562 = vmatpush1.bf16.msra.mxu0 0
        %3563 = vmatprep.subr.bf16.mxu0 0
        %3564 = vmatpush1.bf16.msra.mxu0 0
        %3565 = vmatprep.subr.bf16.mxu0 0
        %3566 = vmatpush1.bf16.msra.mxu0 0
        %3567 = vmatprep.subr.bf16.mxu0 0
        %3568 = vmatpush1.bf16.msra.mxu0 0
        %3569 = vmatprep.subr.bf16.mxu0 0
        %3570 = vmatpush1.bf16.msra.mxu0 0
        %3571 = vmatprep.subr.bf16.mxu0 0
        %3572 = vmatpush1.bf16.msra.mxu0 0
        %3573 = vmatprep.subr.bf16.mxu0 0
        %3574 = vmatpush1.bf16.msra.mxu0 0
        %3575 = vmatprep.subr.bf16.mxu0 0
        %3576 = vmatpush1.bf16.msra.mxu0 0
        %3577 = vmatprep.subr.bf16.mxu0 0
        %3578 = vmatpush1.bf16.msra.mxu0 0
        %3579 = vmatprep.subr.bf16.mxu0 0
        %3580 = vmatpush1.bf16.msra.mxu0 0
        %3581 = vmatprep.subr.bf16.mxu0 0
        %3582 = vmatpush1.bf16.msra.mxu0 0
        %3583 = vmatprep.subr.bf16.mxu0 0
        %3584 = vmatpush1.bf16.msra.mxu0 0
        %3585 = vmatprep.mubr.bf16.mxu0 0
        %3586 = vmatmul.mubr.bf16.gmra.mrb[0].mxu0 %v3547
        %v3587 = vpop.f32.mrb[0].mxu0
        %v3588 = vadd.f32 0.0, %v3587
        %v3589 = vpop.f32.mrb[0].mxu0
        %v3590 = vpop.f32.mrb[0].mxu0
        %v3591 = vpop.f32.mrb[0].mxu0
        %3592 = vdwg.mxu0
        %v3594 = vsel %vm3073, %v3539, 0
        %v3597 = vsel %vm3549, %v3066, 0
        %3599 = vmatprep.subr.bf16.mxu0 0
        %3600 = vmatpush1.bf16.msra.mxu0 %v3597
        %3601 = vmatprep.subr.bf16.mxu0 0
        %3602 = vmatpush1.bf16.msra.mxu0 0
        %3603 = vmatprep.subr.bf16.mxu0 0
        %3604 = vmatpush1.bf16.msra.mxu0 0
        %3605 = vmatprep.subr.bf16.mxu0 0
        %3606 = vmatpush1.bf16.msra.mxu0 0
        %3607 = vmatprep.subr.bf16.mxu0 0
        %3608 = vmatpush1.bf16.msra.mxu0 0
        %3609 = vmatprep.subr.bf16.mxu0 0
        %3610 = vmatpush1.bf16.msra.mxu0 0
        %3611 = vmatprep.subr.bf16.mxu0 0
        %3612 = vmatpush1.bf16.msra.mxu0 0
        %3613 = vmatprep.subr.bf16.mxu0 0
        %3614 = vmatpush1.bf16.msra.mxu0 0
        %3615 = vmatprep.subr.bf16.mxu0 0
        %3616 = vmatpush1.bf16.msra.mxu0 0
        %3617 = vmatprep.subr.bf16.mxu0 0
        %3618 = vmatpush1.bf16.msra.mxu0 0
        %3619 = vmatprep.subr.bf16.mxu0 0
        %3620 = vmatpush1.bf16.msra.mxu0 0
        %3621 = vmatprep.subr.bf16.mxu0 0
        %3622 = vmatpush1.bf16.msra.mxu0 0
        %3623 = vmatprep.subr.bf16.mxu0 0
        %3624 = vmatpush1.bf16.msra.mxu0 0
        %3625 = vmatprep.subr.bf16.mxu0 0
        %3626 = vmatpush1.bf16.msra.mxu0 0
        %3627 = vmatprep.subr.bf16.mxu0 0
        %3628 = vmatpush1.bf16.msra.mxu0 0
        %3629 = vmatprep.subr.bf16.mxu0 0
        %3630 = vmatpush1.bf16.msra.mxu0 0
        %3631 = vmatprep.mubr.bf16.mxu0 0
        %3632 = vmatmul.mubr.bf16.gmra.mrb[0].mxu0 %v3594
        %v3633 = vpop.f32.mrb[0].mxu0
        %v3634 = vadd.f32 0.0, %v3633
        %v3635 = vpop.f32.mrb[0].mxu0
        %v3636 = vpop.f32.mrb[0].mxu0
        %v3637 = vpop.f32.mrb[0].mxu0
        %3638 = vdwg.mxu0
        %v3640 = vsel %vm3073, %v3540, 0
        %v3643 = vsel %vm3549, %v3067, 0
        %3645 = vmatprep.subr.bf16.mxu0 0
        %3646 = vmatpush1.bf16.msra.mxu0 %v3643
        %3647 = vmatprep.subr.bf16.mxu0 0
        %3648 = vmatpush1.bf16.msra.mxu0 0
        %3649 = vmatprep.subr.bf16.mxu0 0
        %3650 = vmatpush1.bf16.msra.mxu0 0
        %3651 = vmatprep.subr.bf16.mxu0 0
        %3652 = vmatpush1.bf16.msra.mxu0 0
        %3653 = vmatprep.subr.bf16.mxu0 0
        %3654 = vmatpush1.bf16.msra.mxu0 0
        %3655 = vmatprep.subr.bf16.mxu0 0
        %3656 = vmatpush1.bf16.msra.mxu0 0
        %3657 = vmatprep.subr.bf16.mxu0 0
        %3658 = vmatpush1.bf16.msra.mxu0 0
        %3659 = vmatprep.subr.bf16.mxu0 0
        %3660 = vmatpush1.bf16.msra.mxu0 0
        %3661 = vmatprep.subr.bf16.mxu0 0
        %3662 = vmatpush1.bf16.msra.mxu0 0
        %3663 = vmatprep.subr.bf16.mxu0 0
        %3664 = vmatpush1.bf16.msra.mxu0 0
        %3665 = vmatprep.subr.bf16.mxu0 0
        %3666 = vmatpush1.bf16.msra.mxu0 0
        %3667 = vmatprep.subr.bf16.mxu0 0
        %3668 = vmatpush1.bf16.msra.mxu0 0
        %3669 = vmatprep.subr.bf16.mxu0 0
        %3670 = vmatpush1.bf16.msra.mxu0 0
        %3671 = vmatprep.subr.bf16.mxu0 0
        %3672 = vmatpush1.bf16.msra.mxu0 0
        %3673 = vmatprep.subr.bf16.mxu0 0
        %3674 = vmatpush1.bf16.msra.mxu0 0
        %3675 = vmatprep.subr.bf16.mxu0 0
        %3676 = vmatpush1.bf16.msra.mxu0 0
        %3677 = vmatprep.mubr.bf16.mxu0 0
        %3678 = vmatmul.mubr.bf16.gmra.mrb[0].mxu0 %v3640
        %v3679 = vpop.f32.mrb[0].mxu0
        %v3680 = vadd.f32 0.0, %v3679
        %v3681 = vpop.f32.mrb[0].mxu0
        %v3682 = vpop.f32.mrb[0].mxu0
        %v3683 = vpop.f32.mrb[0].mxu0
        %3684 = vdwg.mxu0
        %v3686 = vsel %vm3073, %v3541, 0
        %v3689 = vsel %vm3549, %v3068, 0
        %3691 = vmatprep.subr.bf16.mxu0 0
        %3692 = vmatpush1.bf16.msra.mxu0 %v3689
        %3693 = vmatprep.subr.bf16.mxu0 0
        %3694 = vmatpush1.bf16.msra.mxu0 0
        %3695 = vmatprep.subr.bf16.mxu0 0
        %3696 = vmatpush1.bf16.msra.mxu0 0
        %3697 = vmatprep.subr.bf16.mxu0 0
        %3698 = vmatpush1.bf16.msra.mxu0 0
        %3699 = vmatprep.subr.bf16.mxu0 0
        %3700 = vmatpush1.bf16.msra.mxu0 0
        %3701 = vmatprep.subr.bf16.mxu0 0
        %3702 = vmatpush1.bf16.msra.mxu0 0
        %3703 = vmatprep.subr.bf16.mxu0 0
        %3704 = vmatpush1.bf16.msra.mxu0 0
        %3705 = vmatprep.subr.bf16.mxu0 0
        %3706 = vmatpush1.bf16.msra.mxu0 0
        %3707 = vmatprep.subr.bf16.mxu0 0
        %3708 = vmatpush1.bf16.msra.mxu0 0
        %3709 = vmatprep.subr.bf16.mxu0 0
        %3710 = vmatpush1.bf16.msra.mxu0 0
        %3711 = vmatprep.subr.bf16.mxu0 0
        %3712 = vmatpush1.bf16.msra.mxu0 0
        %3713 = vmatprep.subr.bf16.mxu0 0
        %3714 = vmatpush1.bf16.msra.mxu0 0
        %3715 = vmatprep.subr.bf16.mxu0 0
        %3716 = vmatpush1.bf16.msra.mxu0 0
        %3717 = vmatprep.subr.bf16.mxu0 0
        %3718 = vmatpush1.bf16.msra.mxu0 0
        %3719 = vmatprep.subr.bf16.mxu0 0
        %3720 = vmatpush1.bf16.msra.mxu0 0
        %3721 = vmatprep.subr.bf16.mxu0 0
        %3722 = vmatpush1.bf16.msra.mxu0 0
        %3723 = vmatprep.mubr.bf16.mxu0 0
        %3724 = vmatmul.mubr.bf16.gmra.mrb[0].mxu0 %v3686
        %v3725 = vpop.f32.mrb[0].mxu0
        %v3726 = vadd.f32 0.0, %v3725
        %v3727 = vpop.f32.mrb[0].mxu0
        %v3728 = vpop.f32.mrb[0].mxu0
        %v3729 = vpop.f32.mrb[0].mxu0
        %3730 = vdwg.mxu0
        %v3732 = vsel %vm3073, %v3542, 0
        %v3735 = vsel %vm3549, %v3069, 0
        %3737 = vmatprep.subr.bf16.mxu0 0
        %3738 = vmatpush1.bf16.msra.mxu0 %v3735
        %3739 = vmatprep.subr.bf16.mxu0 0
        %3740 = vmatpush1.bf16.msra.mxu0 0
        %3741 = vmatprep.subr.bf16.mxu0 0
        %3742 = vmatpush1.bf16.msra.mxu0 0
        %3743 = vmatprep.subr.bf16.mxu0 0
        %3744 = vmatpush1.bf16.msra.mxu0 0
        %3745 = vmatprep.subr.bf16.mxu0 0
        %3746 = vmatpush1.bf16.msra.mxu0 0
        %3747 = vmatprep.subr.bf16.mxu0 0
        %3748 = vmatpush1.bf16.msra.mxu0 0
        %3749 = vmatprep.subr.bf16.mxu0 0
        %3750 = vmatpush1.bf16.msra.mxu0 0
        %3751 = vmatprep.subr.bf16.mxu0 0
        %3752 = vmatpush1.bf16.msra.mxu0 0
        %3753 = vmatprep.subr.bf16.mxu0 0
        %3754 = vmatpush1.bf16.msra.mxu0 0
        %3755 = vmatprep.subr.bf16.mxu0 0
        %3756 = vmatpush1.bf16.msra.mxu0 0
        %3757 = vmatprep.subr.bf16.mxu0 0
        %3758 = vmatpush1.bf16.msra.mxu0 0
        %3759 = vmatprep.subr.bf16.mxu0 0
        %3760 = vmatpush1.bf16.msra.mxu0 0
        %3761 = vmatprep.subr.bf16.mxu0 0
        %3762 = vmatpush1.bf16.msra.mxu0 0
        %3763 = vmatprep.subr.bf16.mxu0 0
        %3764 = vmatpush1.bf16.msra.mxu0 0
        %3765 = vmatprep.subr.bf16.mxu0 0
        %3766 = vmatpush1.bf16.msra.mxu0 0
        %3767 = vmatprep.subr.bf16.mxu0 0
        %3768 = vmatpush1.bf16.msra.mxu0 0
        %3769 = vmatprep.mubr.bf16.mxu0 0
        %3770 = vmatmul.mubr.bf16.gmra.mrb[0].mxu0 %v3732
        %v3771 = vpop.f32.mrb[0].mxu0
        %v3772 = vadd.f32 0.0, %v3771
        %v3773 = vpop.f32.mrb[0].mxu0
        %v3774 = vpop.f32.mrb[0].mxu0
        %v3775 = vpop.f32.mrb[0].mxu0
        %3776 = vdwg.mxu0
        %v3778 = vsel %vm3073, %v3543, 0
        %v3781 = vsel %vm3549, %v3070, 0
        %3783 = vmatprep.subr.bf16.mxu0 0
        %3784 = vmatpush1.bf16.msra.mxu0 %v3781
        %3785 = vmatprep.subr.bf16.mxu0 0
        %3786 = vmatpush1.bf16.msra.mxu0 0
        %3787 = vmatprep.subr.bf16.mxu0 0
        %3788 = vmatpush1.bf16.msra.mxu0 0
        %3789 = vmatprep.subr.bf16.mxu0 0
        %3790 = vmatpush1.bf16.msra.mxu0 0
        %3791 = vmatprep.subr.bf16.mxu0 0
        %3792 = vmatpush1.bf16.msra.mxu0 0
        %3793 = vmatprep.subr.bf16.mxu0 0
        %3794 = vmatpush1.bf16.msra.mxu0 0
        %3795 = vmatprep.subr.bf16.mxu0 0
        %3796 = vmatpush1.bf16.msra.mxu0 0
        %3797 = vmatprep.subr.bf16.mxu0 0
        %3798 = vmatpush1.bf16.msra.mxu0 0
        %3799 = vmatprep.subr.bf16.mxu0 0
        %3800 = vmatpush1.bf16.msra.mxu0 0
        %3801 = vmatprep.subr.bf16.mxu0 0
        %3802 = vmatpush1.bf16.msra.mxu0 0
        %3803 = vmatprep.subr.bf16.mxu0 0
        %3804 = vmatpush1.bf16.msra.mxu0 0
        %3805 = vmatprep.subr.bf16.mxu0 0
        %3806 = vmatpush1.bf16.msra.mxu0 0
        %3807 = vmatprep.subr.bf16.mxu0 0
        %3808 = vmatpush1.bf16.msra.mxu0 0
        %3809 = vmatprep.subr.bf16.mxu0 0
        %3810 = vmatpush1.bf16.msra.mxu0 0
        %3811 = vmatprep.subr.bf16.mxu0 0
        %3812 = vmatpush1.bf16.msra.mxu0 0
        %3813 = vmatprep.subr.bf16.mxu0 0
        %3814 = vmatpush1.bf16.msra.mxu0 0
        %3815 = vmatprep.mubr.bf16.mxu0 0
        %3816 = vmatmul.mubr.bf16.gmra.mrb[0].mxu0 %v3778
        %v3817 = vpop.f32.mrb[0].mxu0
        %v3818 = vadd.f32 0.0, %v3817
        %v3819 = vpop.f32.mrb[0].mxu0
        %v3820 = vpop.f32.mrb[0].mxu0
        %v3821 = vpop.f32.mrb[0].mxu0
        %3822 = vdwg.mxu0
        %v3824 = vsel %vm3073, %v3544, 0
        %v3827 = vsel %vm3549, %v3071, 0
        %3829 = vmatprep.subr.bf16.mxu0 0
        %3830 = vmatpush1.bf16.msra.mxu0 %v3827
        %3831 = vmatprep.subr.bf16.mxu0 0
        %3832 = vmatpush1.bf16.msra.mxu0 0
        %3833 = vmatprep.subr.bf16.mxu0 0
        %3834 = vmatpush1.bf16.msra.mxu0 0
        %3835 = vmatprep.subr.bf16.mxu0 0
        %3836 = vmatpush1.bf16.msra.mxu0 0
        %3837 = vmatprep.subr.bf16.mxu0 0
        %3838 = vmatpush1.bf16.msra.mxu0 0
        %3839 = vmatprep.subr.bf16.mxu0 0
        %3840 = vmatpush1.bf16.msra.mxu0 0
        %3841 = vmatprep.subr.bf16.mxu0 0
        %3842 = vmatpush1.bf16.msra.mxu0 0
        %3843 = vmatprep.subr.bf16.mxu0 0
        %3844 = vmatpush1.bf16.msra.mxu0 0
        %3845 = vmatprep.subr.bf16.mxu0 0
        %3846 = vmatpush1.bf16.msra.mxu0 0
        %3847 = vmatprep.subr.bf16.mxu0 0
        %3848 = vmatpush1.bf16.msra.mxu0 0
        %3849 = vmatprep.subr.bf16.mxu0 0
        %3850 = vmatpush1.bf16.msra.mxu0 0
        %3851 = vmatprep.subr.bf16.mxu0 0
        %3852 = vmatpush1.bf16.msra.mxu0 0
        %3853 = vmatprep.subr.bf16.mxu0 0
        %3854 = vmatpush1.bf16.msra.mxu0 0
        %3855 = vmatprep.subr.bf16.mxu0 0
        %3856 = vmatpush1.bf16.msra.mxu0 0
        %3857 = vmatprep.subr.bf16.mxu0 0
        %3858 = vmatpush1.bf16.msra.mxu0 0
        %3859 = vmatprep.subr.bf16.mxu0 0
        %3860 = vmatpush1.bf16.msra.mxu0 0
        %3861 = vmatprep.mubr.bf16.mxu0 0
        %3862 = vmatmul.mubr.bf16.gmra.mrb[0].mxu0 %v3824
        %v3863 = vpop.f32.mrb[0].mxu0
        %v3864 = vadd.f32 0.0, %v3863
        %v3865 = vpop.f32.mrb[0].mxu0
        %v3866 = vpop.f32.mrb[0].mxu0
        %v3867 = vpop.f32.mrb[0].mxu0
        %3868 = vdwg.mxu0
        %v3870 = vsel %vm3073, %v3545, 0
        %v3873 = vsel %vm3549, %v3072, 0
        %3875 = vmatprep.subr.bf16.mxu0 0
        %3876 = vmatpush1.bf16.msra.mxu0 %v3873
        %3877 = vmatprep.subr.bf16.mxu0 0
        %3878 = vmatpush1.bf16.msra.mxu0 0
        %3879 = vmatprep.subr.bf16.mxu0 0
        %3880 = vmatpush1.bf16.msra.mxu0 0
        %3881 = vmatprep.subr.bf16.mxu0 0
        %3882 = vmatpush1.bf16.msra.mxu0 0
        %3883 = vmatprep.subr.bf16.mxu0 0
        %3884 = vmatpush1.bf16.msra.mxu0 0
        %3885 = vmatprep.subr.bf16.mxu0 0
        %3886 = vmatpush1.bf16.msra.mxu0 0
        %3887 = vmatprep.subr.bf16.mxu0 0
        %3888 = vmatpush1.bf16.msra.mxu0 0
        %3889 = vmatprep.subr.bf16.mxu0 0
        %3890 = vmatpush1.bf16.msra.mxu0 0
        %3891 = vmatprep.subr.bf16.mxu0 0
        %3892 = vmatpush1.bf16.msra.mxu0 0
        %3893 = vmatprep.subr.bf16.mxu0 0
        %3894 = vmatpush1.bf16.msra.mxu0 0
        %3895 = vmatprep.subr.bf16.mxu0 0
        %3896 = vmatpush1.bf16.msra.mxu0 0
        %3897 = vmatprep.subr.bf16.mxu0 0
        %3898 = vmatpush1.bf16.msra.mxu0 0
        %3899 = vmatprep.subr.bf16.mxu0 0
        %3900 = vmatpush1.bf16.msra.mxu0 0
        %3901 = vmatprep.subr.bf16.mxu0 0
        %3902 = vmatpush1.bf16.msra.mxu0 0
        %3903 = vmatprep.subr.bf16.mxu0 0
        %3904 = vmatpush1.bf16.msra.mxu0 0
        %3905 = vmatprep.subr.bf16.mxu0 0
        %3906 = vmatpush1.bf16.msra.mxu0 0
        %3907 = vmatprep.mubr.bf16.mxu0 0
        %3908 = vmatmul.mubr.bf16.gmra.mrb[0].mxu0 %v3870
        %v3909 = vpop.f32.mrb[0].mxu0
        %v3910 = vadd.f32 0.0, %v3909
        %v3911 = vpop.f32.mrb[0].mxu0
        %v3912 = vpop.f32.mrb[0].mxu0
        %v3913 = vpop.f32.mrb[0].mxu0
        %3914 = vdwg.mxu0
        %v3915 = vld [vmem:[%s11] sm:$0xff]
        %v3916 = vpack.c.bf16 %v3588, %v3588
        %v3917 = vpack.c.bf16 %v3634, %v3634
        %v3918 = vpack.c.bf16 %v3680, %v3680
        %v3919 = vpack.c.bf16 %v3726, %v3726
        %v3920 = vpack.c.bf16 %v3772, %v3772
        %v3921 = vpack.c.bf16 %v3818, %v3818
        %v3922 = vpack.c.bf16 %v3864, %v3864
        %v3923 = vpack.c.bf16 %v3910, %v3910
        %v3924 = vld [vmem:[%s7] sm:$0xf]
        %v3925 = vld [vmem:[%s7 + $0x4] sm:$0xf]
        %v3926 = vld [vmem:[%s7 + $0x8] sm:$0xf]
        %v3927 = vld [vmem:[%s7 + $0xc] sm:$0xf]
        %v3928 = vld [vmem:[%s7 + $0x10] sm:$0xf]
        %v3929 = vld [vmem:[%s7 + $0x14] sm:$0xf]
        %v3930 = vld [vmem:[%s7 + $0x18] sm:$0xf]
        %v3931 = vld [vmem:[%s7 + $0x1c] sm:$0xf]
        %v3933 = vsel %vm3073, %v3916, 0
        %v3936 = vsel %vm3549, %v3924, 0
        %3938 = vmatprep.subr.bf16.mxu0 0
        %3939 = vmatpush1.bf16.msra.mxu0 %v3936
        %3940 = vmatprep.subr.bf16.mxu0 0
        %3941 = vmatpush1.bf16.msra.mxu0 0
        %3942 = vmatprep.subr.bf16.mxu0 0
        %3943 = vmatpush1.bf16.msra.mxu0 0
        %3944 = vmatprep.subr.bf16.mxu0 0
        %3945 = vmatpush1.bf16.msra.mxu0 0
        %3946 = vmatprep.subr.bf16.mxu0 0
        %3947 = vmatpush1.bf16.msra.mxu0 0
        %3948 = vmatprep.subr.bf16.mxu0 0
        %3949 = vmatpush1.bf16.msra.mxu0 0
        %3950 = vmatprep.subr.bf16.mxu0 0
        %3951 = vmatpush1.bf16.msra.mxu0 0
        %3952 = vmatprep.subr.bf16.mxu0 0
        %3953 = vmatpush1.bf16.msra.mxu0 0
        %3954 = vmatprep.subr.bf16.mxu0 0
        %3955 = vmatpush1.bf16.msra.mxu0 0
        %3956 = vmatprep.subr.bf16.mxu0 0
        %3957 = vmatpush1.bf16.msra.mxu0 0
        %3958 = vmatprep.subr.bf16.mxu0 0
        %3959 = vmatpush1.bf16.msra.mxu0 0
        %3960 = vmatprep.subr.bf16.mxu0 0
        %3961 = vmatpush1.bf16.msra.mxu0 0
        %3962 = vmatprep.subr.bf16.mxu0 0
        %3963 = vmatpush1.bf16.msra.mxu0 0
        %3964 = vmatprep.subr.bf16.mxu0 0
        %3965 = vmatpush1.bf16.msra.mxu0 0
        %3966 = vmatprep.subr.bf16.mxu0 0
        %3967 = vmatpush1.bf16.msra.mxu0 0
        %3968 = vmatprep.subr.bf16.mxu0 0
        %3969 = vmatpush1.bf16.msra.mxu0 0
        %3970 = vmatprep.mubr.bf16.mxu0 0
        %3971 = vmatmul.mubr.bf16.gmra.mrb[0].mxu0 %v3933
        %v3972 = vpop.f32.mrb[0].mxu0
        %v3973 = vadd.f32 0.0, %v3972
        %v3974 = vpop.f32.mrb[0].mxu0
        %v3975 = vpop.f32.mrb[0].mxu0
        %v3976 = vpop.f32.mrb[0].mxu0
        %3977 = vdwg.mxu0
        %v3979 = vsel %vm3073, %v3917, 0
        %v3982 = vsel %vm3549, %v3925, 0
        %3984 = vmatprep.subr.bf16.mxu0 0
        %3985 = vmatpush1.bf16.msra.mxu0 %v3982
        %3986 = vmatprep.subr.bf16.mxu0 0
        %3987 = vmatpush1.bf16.msra.mxu0 0
        %3988 = vmatprep.subr.bf16.mxu0 0
        %3989 = vmatpush1.bf16.msra.mxu0 0
        %3990 = vmatprep.subr.bf16.mxu0 0
        %3991 = vmatpush1.bf16.msra.mxu0 0
        %3992 = vmatprep.subr.bf16.mxu0 0
        %3993 = vmatpush1.bf16.msra.mxu0 0
        %3994 = vmatprep.subr.bf16.mxu0 0
        %3995 = vmatpush1.bf16.msra.mxu0 0
        %3996 = vmatprep.subr.bf16.mxu0 0
        %3997 = vmatpush1.bf16.msra.mxu0 0
        %3998 = vmatprep.subr.bf16.mxu0 0
        %3999 = vmatpush1.bf16.msra.mxu0 0
        %4000 = vmatprep.subr.bf16.mxu0 0
        %4001 = vmatpush1.bf16.msra.mxu0 0
        %4002 = vmatprep.subr.bf16.mxu0 0
        %4003 = vmatpush1.bf16.msra.mxu0 0
        %4004 = vmatprep.subr.bf16.mxu0 0
        %4005 = vmatpush1.bf16.msra.mxu0 0
        %4006 = vmatprep.subr.bf16.mxu0 0
        %4007 = vmatpush1.bf16.msra.mxu0 0
        %4008 = vmatprep.subr.bf16.mxu0 0
        %4009 = vmatpush1.bf16.msra.mxu0 0
        %4010 = vmatprep.subr.bf16.mxu0 0
        %4011 = vmatpush1.bf16.msra.mxu0 0
        %4012 = vmatprep.subr.bf16.mxu0 0
        %4013 = vmatpush1.bf16.msra.mxu0 0
        %4014 = vmatprep.subr.bf16.mxu0 0
        %4015 = vmatpush1.bf16.msra.mxu0 0
        %4016 = vmatprep.mubr.bf16.mxu0 0
        %4017 = vmatmul.mubr.bf16.gmra.mrb[0].mxu0 %v3979
        %v4018 = vpop.f32.mrb[0].mxu0
        %v4019 = vadd.f32 0.0, %v4018
        %v4020 = vpop.f32.mrb[0].mxu0
        %v4021 = vpop.f32.mrb[0].mxu0
        %v4022 = vpop.f32.mrb[0].mxu0
        %4023 = vdwg.mxu0
        %v4025 = vsel %vm3073, %v3918, 0
        %v4028 = vsel %vm3549, %v3926, 0
        %4030 = vmatprep.subr.bf16.mxu0 0
        %4031 = vmatpush1.bf16.msra.mxu0 %v4028
        %4032 = vmatprep.subr.bf16.mxu0 0
        %4033 = vmatpush1.bf16.msra.mxu0 0
        %4034 = vmatprep.subr.bf16.mxu0 0
        %4035 = vmatpush1.bf16.msra.mxu0 0
        %4036 = vmatprep.subr.bf16.mxu0 0
        %4037 = vmatpush1.bf16.msra.mxu0 0
        %4038 = vmatprep.subr.bf16.mxu0 0
        %4039 = vmatpush1.bf16.msra.mxu0 0
        %4040 = vmatprep.subr.bf16.mxu0 0
        %4041 = vmatpush1.bf16.msra.mxu0 0
        %4042 = vmatprep.subr.bf16.mxu0 0
        %4043 = vmatpush1.bf16.msra.mxu0 0
        %4044 = vmatprep.subr.bf16.mxu0 0
        %4045 = vmatpush1.bf16.msra.mxu0 0
        %4046 = vmatprep.subr.bf16.mxu0 0
        %4047 = vmatpush1.bf16.msra.mxu0 0
        %4048 = vmatprep.subr.bf16.mxu0 0
        %4049 = vmatpush1.bf16.msra.mxu0 0
        %4050 = vmatprep.subr.bf16.mxu0 0
        %4051 = vmatpush1.bf16.msra.mxu0 0
        %4052 = vmatprep.subr.bf16.mxu0 0
        %4053 = vmatpush1.bf16.msra.mxu0 0
        %4054 = vmatprep.subr.bf16.mxu0 0
        %4055 = vmatpush1.bf16.msra.mxu0 0
        %4056 = vmatprep.subr.bf16.mxu0 0
        %4057 = vmatpush1.bf16.msra.mxu0 0
        %4058 = vmatprep.subr.bf16.mxu0 0
        %4059 = vmatpush1.bf16.msra.mxu0 0
        %4060 = vmatprep.subr.bf16.mxu0 0
        %4061 = vmatpush1.bf16.msra.mxu0 0
        %4062 = vmatprep.mubr.bf16.mxu0 0
        %4063 = vmatmul.mubr.bf16.gmra.mrb[0].mxu0 %v4025
        %v4064 = vpop.f32.mrb[0].mxu0
        %v4065 = vadd.f32 0.0, %v4064
        %v4066 = vpop.f32.mrb[0].mxu0
        %v4067 = vpop.f32.mrb[0].mxu0
        %v4068 = vpop.f32.mrb[0].mxu0
        %4069 = vdwg.mxu0
        %v4071 = vsel %vm3073, %v3919, 0
        %v4074 = vsel %vm3549, %v3927, 0
        %4076 = vmatprep.subr.bf16.mxu0 0
        %4077 = vmatpush1.bf16.msra.mxu0 %v4074
        %4078 = vmatprep.subr.bf16.mxu0 0
        %4079 = vmatpush1.bf16.msra.mxu0 0
        %4080 = vmatprep.subr.bf16.mxu0 0
        %4081 = vmatpush1.bf16.msra.mxu0 0
        %4082 = vmatprep.subr.bf16.mxu0 0
        %4083 = vmatpush1.bf16.msra.mxu0 0
        %4084 = vmatprep.subr.bf16.mxu0 0
        %4085 = vmatpush1.bf16.msra.mxu0 0
        %4086 = vmatprep.subr.bf16.mxu0 0
        %4087 = vmatpush1.bf16.msra.mxu0 0
        %4088 = vmatprep.subr.bf16.mxu0 0
        %4089 = vmatpush1.bf16.msra.mxu0 0
        %4090 = vmatprep.subr.bf16.mxu0 0
        %4091 = vmatpush1.bf16.msra.mxu0 0
        %4092 = vmatprep.subr.bf16.mxu0 0
        %4093 = vmatpush1.bf16.msra.mxu0 0
        %4094 = vmatprep.subr.bf16.mxu0 0
        %4095 = vmatpush1.bf16.msra.mxu0 0
        %4096 = vmatprep.subr.bf16.mxu0 0
        %4097 = vmatpush1.bf16.msra.mxu0 0
        %4098 = vmatprep.subr.bf16.mxu0 0
        %4099 = vmatpush1.bf16.msra.mxu0 0
        %4100 = vmatprep.subr.bf16.mxu0 0
        %4101 = vmatpush1.bf16.msra.mxu0 0
        %4102 = vmatprep.subr.bf16.mxu0 0
        %4103 = vmatpush1.bf16.msra.mxu0 0
        %4104 = vmatprep.subr.bf16.mxu0 0
        %4105 = vmatpush1.bf16.msra.mxu0 0
        %4106 = vmatprep.subr.bf16.mxu0 0
        %4107 = vmatpush1.bf16.msra.mxu0 0
        %4108 = vmatprep.mubr.bf16.mxu0 0
        %4109 = vmatmul.mubr.bf16.gmra.mrb[0].mxu0 %v4071
        %v4110 = vpop.f32.mrb[0].mxu0
        %v4111 = vadd.f32 0.0, %v4110
        %v4112 = vpop.f32.mrb[0].mxu0
        %v4113 = vpop.f32.mrb[0].mxu0
        %v4114 = vpop.f32.mrb[0].mxu0
        %4115 = vdwg.mxu0
        %v4117 = vsel %vm3073, %v3920, 0
        %v4120 = vsel %vm3549, %v3928, 0
        %4122 = vmatprep.subr.bf16.mxu0 0
        %4123 = vmatpush1.bf16.msra.mxu0 %v4120
        %4124 = vmatprep.subr.bf16.mxu0 0
        %4125 = vmatpush1.bf16.msra.mxu0 0
        %4126 = vmatprep.subr.bf16.mxu0 0
        %4127 = vmatpush1.bf16.msra.mxu0 0
        %4128 = vmatprep.subr.bf16.mxu0 0
        %4129 = vmatpush1.bf16.msra.mxu0 0
        %4130 = vmatprep.subr.bf16.mxu0 0
        %4131 = vmatpush1.bf16.msra.mxu0 0
        %4132 = vmatprep.subr.bf16.mxu0 0
        %4133 = vmatpush1.bf16.msra.mxu0 0
        %4134 = vmatprep.subr.bf16.mxu0 0
        %4135 = vmatpush1.bf16.msra.mxu0 0
        %4136 = vmatprep.subr.bf16.mxu0 0
        %4137 = vmatpush1.bf16.msra.mxu0 0
        %4138 = vmatprep.subr.bf16.mxu0 0
        %4139 = vmatpush1.bf16.msra.mxu0 0
        %4140 = vmatprep.subr.bf16.mxu0 0
        %4141 = vmatpush1.bf16.msra.mxu0 0
        %4142 = vmatprep.subr.bf16.mxu0 0
        %4143 = vmatpush1.bf16.msra.mxu0 0
        %4144 = vmatprep.subr.bf16.mxu0 0
        %4145 = vmatpush1.bf16.msra.mxu0 0
        %4146 = vmatprep.subr.bf16.mxu0 0
        %4147 = vmatpush1.bf16.msra.mxu0 0
        %4148 = vmatprep.subr.bf16.mxu0 0
        %4149 = vmatpush1.bf16.msra.mxu0 0
        %4150 = vmatprep.subr.bf16.mxu0 0
        %4151 = vmatpush1.bf16.msra.mxu0 0
        %4152 = vmatprep.subr.bf16.mxu0 0
        %4153 = vmatpush1.bf16.msra.mxu0 0
        %4154 = vmatprep.mubr.bf16.mxu0 0
        %4155 = vmatmul.mubr.bf16.gmra.mrb[0].mxu0 %v4117
        %v4156 = vpop.f32.mrb[0].mxu0
        %v4157 = vadd.f32 0.0, %v4156
        %v4158 = vpop.f32.mrb[0].mxu0
        %v4159 = vpop.f32.mrb[0].mxu0
        %v4160 = vpop.f32.mrb[0].mxu0
        %4161 = vdwg.mxu0
        %v4163 = vsel %vm3073, %v3921, 0
        %v4166 = vsel %vm3549, %v3929, 0
        %4168 = vmatprep.subr.bf16.mxu0 0
        %4169 = vmatpush1.bf16.msra.mxu0 %v4166
        %4170 = vmatprep.subr.bf16.mxu0 0
        %4171 = vmatpush1.bf16.msra.mxu0 0
        %4172 = vmatprep.subr.bf16.mxu0 0
        %4173 = vmatpush1.bf16.msra.mxu0 0
        %4174 = vmatprep.subr.bf16.mxu0 0
        %4175 = vmatpush1.bf16.msra.mxu0 0
        %4176 = vmatprep.subr.bf16.mxu0 0
        %4177 = vmatpush1.bf16.msra.mxu0 0
        %4178 = vmatprep.subr.bf16.mxu0 0
        %4179 = vmatpush1.bf16.msra.mxu0 0
        %4180 = vmatprep.subr.bf16.mxu0 0
        %4181 = vmatpush1.bf16.msra.mxu0 0
        %4182 = vmatprep.subr.bf16.mxu0 0
        %4183 = vmatpush1.bf16.msra.mxu0 0
        %4184 = vmatprep.subr.bf16.mxu0 0
        %4185 = vmatpush1.bf16.msra.mxu0 0
        %4186 = vmatprep.subr.bf16.mxu0 0
        %4187 = vmatpush1.bf16.msra.mxu0 0
        %4188 = vmatprep.subr.bf16.mxu0 0
        %4189 = vmatpush1.bf16.msra.mxu0 0
        %4190 = vmatprep.subr.bf16.mxu0 0
        %4191 = vmatpush1.bf16.msra.mxu0 0
        %4192 = vmatprep.subr.bf16.mxu0 0
        %4193 = vmatpush1.bf16.msra.mxu0 0
        %4194 = vmatprep.subr.bf16.mxu0 0
        %4195 = vmatpush1.bf16.msra.mxu0 0
        %4196 = vmatprep.subr.bf16.mxu0 0
        %4197 = vmatpush1.bf16.msra.mxu0 0
        %4198 = vmatprep.subr.bf16.mxu0 0
        %4199 = vmatpush1.bf16.msra.mxu0 0
        %4200 = vmatprep.mubr.bf16.mxu0 0
        %4201 = vmatmul.mubr.bf16.gmra.mrb[0].mxu0 %v4163
        %v4202 = vpop.f32.mrb[0].mxu0
        %v4203 = vadd.f32 0.0, %v4202
        %v4204 = vpop.f32.mrb[0].mxu0
        %v4205 = vpop.f32.mrb[0].mxu0
        %v4206 = vpop.f32.mrb[0].mxu0
        %4207 = vdwg.mxu0
        %v4209 = vsel %vm3073, %v3922, 0
        %v4212 = vsel %vm3549, %v3930, 0
        %4214 = vmatprep.subr.bf16.mxu0 0
        %4215 = vmatpush1.bf16.msra.mxu0 %v4212
        %4216 = vmatprep.subr.bf16.mxu0 0
        %4217 = vmatpush1.bf16.msra.mxu0 0
        %4218 = vmatprep.subr.bf16.mxu0 0
        %4219 = vmatpush1.bf16.msra.mxu0 0
        %4220 = vmatprep.subr.bf16.mxu0 0
        %4221 = vmatpush1.bf16.msra.mxu0 0
        %4222 = vmatprep.subr.bf16.mxu0 0
        %4223 = vmatpush1.bf16.msra.mxu0 0
        %4224 = vmatprep.subr.bf16.mxu0 0
        %4225 = vmatpush1.bf16.msra.mxu0 0
        %4226 = vmatprep.subr.bf16.mxu0 0
        %4227 = vmatpush1.bf16.msra.mxu0 0
        %4228 = vmatprep.subr.bf16.mxu0 0
        %4229 = vmatpush1.bf16.msra.mxu0 0
        %4230 = vmatprep.subr.bf16.mxu0 0
        %4231 = vmatpush1.bf16.msra.mxu0 0
        %4232 = vmatprep.subr.bf16.mxu0 0
        %4233 = vmatpush1.bf16.msra.mxu0 0
        %4234 = vmatprep.subr.bf16.mxu0 0
        %4235 = vmatpush1.bf16.msra.mxu0 0
        %4236 = vmatprep.subr.bf16.mxu0 0
        %4237 = vmatpush1.bf16.msra.mxu0 0
        %4238 = vmatprep.subr.bf16.mxu0 0
        %4239 = vmatpush1.bf16.msra.mxu0 0
        %4240 = vmatprep.subr.bf16.mxu0 0
        %4241 = vmatpush1.bf16.msra.mxu0 0
        %4242 = vmatprep.subr.bf16.mxu0 0
        %4243 = vmatpush1.bf16.msra.mxu0 0
        %4244 = vmatprep.subr.bf16.mxu0 0
        %4245 = vmatpush1.bf16.msra.mxu0 0
        %4246 = vmatprep.mubr.bf16.mxu0 0
        %4247 = vmatmul.mubr.bf16.gmra.mrb[0].mxu0 %v4209
        %v4248 = vpop.f32.mrb[0].mxu0
        %v4249 = vadd.f32 0.0, %v4248
        %v4250 = vpop.f32.mrb[0].mxu0
        %v4251 = vpop.f32.mrb[0].mxu0
        %v4252 = vpop.f32.mrb[0].mxu0
        %4253 = vdwg.mxu0
        %v4255 = vsel %vm3073, %v3923, 0
        %v4258 = vsel %vm3549, %v3931, 0
        %4260 = vmatprep.subr.bf16.mxu0 0
        %4261 = vmatpush1.bf16.msra.mxu0 %v4258
        %4262 = vmatprep.subr.bf16.mxu0 0
        %4263 = vmatpush1.bf16.msra.mxu0 0
        %4264 = vmatprep.subr.bf16.mxu0 0
        %4265 = vmatpush1.bf16.msra.mxu0 0
        %4266 = vmatprep.subr.bf16.mxu0 0
        %4267 = vmatpush1.bf16.msra.mxu0 0
        %4268 = vmatprep.subr.bf16.mxu0 0
        %4269 = vmatpush1.bf16.msra.mxu0 0
        %4270 = vmatprep.subr.bf16.mxu0 0
        %4271 = vmatpush1.bf16.msra.mxu0 0
        %4272 = vmatprep.subr.bf16.mxu0 0
        %4273 = vmatpush1.bf16.msra.mxu0 0
        %4274 = vmatprep.subr.bf16.mxu0 0
        %4275 = vmatpush1.bf16.msra.mxu0 0
        %4276 = vmatprep.subr.bf16.mxu0 0
        %4277 = vmatpush1.bf16.msra.mxu0 0
        %4278 = vmatprep.subr.bf16.mxu0 0
        %4279 = vmatpush1.bf16.msra.mxu0 0
        %4280 = vmatprep.subr.bf16.mxu0 0
        %4281 = vmatpush1.bf16.msra.mxu0 0
        %4282 = vmatprep.subr.bf16.mxu0 0
        %4283 = vmatpush1.bf16.msra.mxu0 0
        %4284 = vmatprep.subr.bf16.mxu0 0
        %4285 = vmatpush1.bf16.msra.mxu0 0
        %4286 = vmatprep.subr.bf16.mxu0 0
        %4287 = vmatpush1.bf16.msra.mxu0 0
        %4288 = vmatprep.subr.bf16.mxu0 0
        %4289 = vmatpush1.bf16.msra.mxu0 0
        %4290 = vmatprep.subr.bf16.mxu0 0
        %4291 = vmatpush1.bf16.msra.mxu0 0
        %4292 = vmatprep.mubr.bf16.mxu0 0
        %4293 = vmatmul.mubr.bf16.gmra.mrb[0].mxu0 %v4255
        %v4294 = vpop.f32.mrb[0].mxu0
        %v4295 = vadd.f32 0.0, %v4294
        %v4296 = vpop.f32.mrb[0].mxu0
        %v4297 = vpop.f32.mrb[0].mxu0
        %v4298 = vpop.f32.mrb[0].mxu0
        %4299 = vdwg.mxu0
        %v4300 = vsel %vm1309, %v3973, 0.0
        %v4301 = vsel %vm1309, %v4019, 0.0
        %v4302 = vadd.f32 %v4300, %v4301
        %v4303 = vsel %vm1309, %v4065, 0.0
        %v4304 = vadd.f32 %v4302, %v4303
        %v4305 = vsel %vm1309, %v4111, 0.0
        %v4306 = vadd.f32 %v4304, %v4305
        %v4307 = vsel %vm1309, %v4157, 0.0
        %v4308 = vadd.f32 %v4306, %v4307
        %v4309 = vsel %vm1309, %v4203, 0.0
        %v4310 = vadd.f32 %v4308, %v4309
        %v4311 = vsel %vm1309, %v4249, 0.0
        %v4312 = vadd.f32 %v4310, %v4311
        %v4313 = vsel %vm1309, %v4295, 0.0
        %v4314 = vadd.f32 %v4312, %v4313
        %v4315 = vlaneseq
        %v4316 = vshrl.u32 %v4315, 7
        %v4317 = vsub.s32 0, %v4316
        %v4318 = vrot.slane %v3915, %v4317
        %v4319 = vadd.f32 %v4314, %v4318
        %v4320 = vadd.f32 %v427, %v4319
        %v4321 = vsel %vm1309, %v4320, 0.0
        %4322 = vadd.xlane.f32.xlu0 %v4321
        %v4323 = vpop.xlane.xlu0 %4322
        %v4324 = vrcp.pop 64.0
        %v4325 = vmul.f32 %v4323, %v4324
        %v4326 = vsub.f32 %v4320, %v4325
        %v4327 = vmul.f32 %v4326, %v4326
        %v4328 = vsel %vm1309, %v4327, 0.0
        %4329 = vadd.xlane.f32.xlu0 %v4328
        %v4330 = vpop.xlane.xlu0 %4329
        %v4331 = vmul.f32 %v4330, %v4324
        %v4332 = vadd.f32 %v4331, 1e-05
        %v4333 = vrsqrt.pop %v4332
        %v4334 = vmul.f32 %v4326, %v4333
        %v4335 = vlaneseq
        %v4336 = vshrl.u32 %v4335, 7
        %v4337 = vsub.s32 2, %v4336
        %v4338 = vrot.slane %v3915, %v4337
        %v4339 = vmul.f32 %v4334, %v4338
        %v4340 = vlaneseq
        %v4341 = vshrl.u32 %v4340, 7
        %v4342 = vsub.s32 3, %v4341
        %v4343 = vrot.slane %v3915, %v4342
        %v4344 = vadd.f32 %v4339, %v4343
        %v4345 = vpack.c.bf16 %v4344, %v4344
        %v4346 = vld [vmem:[%s8] sm:$0xff]
        %v4347 = vld [vmem:[%s8 + $0x8] sm:$0xff]
        %v4348 = vld [vmem:[%s8 + $0x10] sm:$0xff]
        %v4349 = vld [vmem:[%s8 + $0x18] sm:$0xff]
        %v4350 = vld [vmem:[%s8 + $0x20] sm:$0xff]
        %v4351 = vld [vmem:[%s8 + $0x28] sm:$0xff]
        %v4352 = vld [vmem:[%s8 + $0x30] sm:$0xff]
        %v4353 = vld [vmem:[%s8 + $0x38] sm:$0xff]
        %v4354 = vld [vmem:[%s9] sm:$0x3]
        %v4356 = vlaneseq
        %v4357 = vshrl.u32 %v4356, 7
        %v4358 = vsub.s32 0, %v4357
        %v4359 = vrot.slane %v4354, %v4358
        %v4360 = vlaneseq
        %v4361 = vshrl.u32 %v4360, 7
        %v4362 = vsub.s32 1, %v4361
        %v4363 = vrot.slane %v4354, %v4362
        %v4374 = vunpack.c.l.b16 %v4346
        %v4375 = vunpack.c.h.b16 %v4346
        %v4376 = vunpack.c.l.b16 %v4347
        %v4377 = vunpack.c.h.b16 %v4347
        %v4378 = vunpack.c.l.b16 %v4348
        %v4379 = vunpack.c.h.b16 %v4348
        %v4380 = vunpack.c.l.b16 %v4349
        %v4381 = vunpack.c.h.b16 %v4349
        %v4382 = vunpack.c.l.b16 %v4350
        %v4383 = vunpack.c.h.b16 %v4350
        %v4384 = vunpack.c.l.b16 %v4351
        %v4385 = vunpack.c.h.b16 %v4351
        %v4386 = vunpack.c.l.b16 %v4352
        %v4387 = vunpack.c.h.b16 %v4352
        %v4388 = vunpack.c.l.b16 %v4353
        %v4389 = vunpack.c.h.b16 %v4353
        %v4390 = vpack.c.b16 %v4376, %v4374
        %v4391 = vpack.c.b16 %v4377, %v4375
        %v4392 = vpack.c.b16 %v4380, %v4378
        %v4393 = vpack.c.b16 %v4381, %v4379
        %v4394 = vpack.c.b16 %v4384, %v4382
        %v4395 = vpack.c.b16 %v4385, %v4383
        %v4396 = vpack.c.b16 %v4388, %v4386
        %v4397 = vpack.c.b16 %v4389, %v4387
        %v4407 = vsel %vm1309, %v4345, 0
        %4409 = vmatprep.subr.bf16.mxu0 %v4391
        %4410 = vmatpush1.bf16.msra.mxu0 %v4390
        %4411 = vmatprep.subr.bf16.mxu0 %v4393
        %4412 = vmatpush1.bf16.msra.mxu0 %v4392
        %4413 = vmatprep.subr.bf16.mxu0 %v4395
        %4414 = vmatpush1.bf16.msra.mxu0 %v4394
        %4415 = vmatprep.subr.bf16.mxu0 %v4397
        %4416 = vmatpush1.bf16.msra.mxu0 %v4396
        %4417 = vmatprep.subr.bf16.mxu0 0
        %4418 = vmatpush1.bf16.msra.mxu0 0
        %4419 = vmatprep.subr.bf16.mxu0 0
        %4420 = vmatpush1.bf16.msra.mxu0 0
        %4421 = vmatprep.subr.bf16.mxu0 0
        %4422 = vmatpush1.bf16.msra.mxu0 0
        %4423 = vmatprep.subr.bf16.mxu0 0
        %4424 = vmatpush1.bf16.msra.mxu0 0
        %4425 = vmatprep.subr.bf16.mxu0 0
        %4426 = vmatpush1.bf16.msra.mxu0 0
        %4427 = vmatprep.subr.bf16.mxu0 0
        %4428 = vmatpush1.bf16.msra.mxu0 0
        %4429 = vmatprep.subr.bf16.mxu0 0
        %4430 = vmatpush1.bf16.msra.mxu0 0
        %4431 = vmatprep.subr.bf16.mxu0 0
        %4432 = vmatpush1.bf16.msra.mxu0 0
        %4433 = vmatprep.subr.bf16.mxu0 0
        %4434 = vmatpush1.bf16.msra.mxu0 0
        %4435 = vmatprep.subr.bf16.mxu0 0
        %4436 = vmatpush1.bf16.msra.mxu0 0
        %4437 = vmatprep.subr.bf16.mxu0 0
        %4438 = vmatpush1.bf16.msra.mxu0 0
        %4439 = vmatprep.subr.bf16.mxu0 0
        %4440 = vmatpush1.bf16.msra.mxu0 0
        %4441 = vmatprep.mubr.bf16.mxu0 0
        %4442 = vmatmul.mubr.bf16.gmra.mrb[0].mxu0 %v4407
        %v4443 = vpop.f32.mrb[0].mxu0
        %v4444 = vadd.f32 %v4359, %v4443
        %v4445 = vpop.f32.mrb[0].mxu0
        %v4446 = vadd.f32 %v4363, %v4445
        %v4447 = vpop.f32.mrb[0].mxu0
        %v4448 = vpop.f32.mrb[0].mxu0
        %4449 = vdwg.mxu0
        %v4450 = vmul.f32 %v4444, 0.5
        %v4451 = vmul.f32 %v4446, 0.5
        %v4452 = vmul.f32 %v4444, 0.70710677
        %v4453 = vmul.f32 %v4446, 0.70710677
        %v4454 = verf.f32.pop %v4452
        %v4455 = verf.f32.pop %v4453
        %v4456 = vadd.f32 %v4454, 1.0
        %v4457 = vadd.f32 %v4455, 1.0
        %v4458 = vmul.f32 %v4450, %v4456
        %v4459 = vmul.f32 %v4451, %v4457
        %v4460 = vpack.c.bf16 %v4458, %v4458
        %v4461 = vpack.c.bf16 %v4459, %v4459
        %v4462 = vld [vmem:[%s10] sm:$0xf]
        %v4463 = vld [vmem:[%s10 + $0x4] sm:$0xf]
        %v4464 = vld [vmem:[%s10 + $0x8] sm:$0xf]
        %v4465 = vld [vmem:[%s10 + $0xc] sm:$0xf]
        %v4466 = vld [vmem:[%s10 + $0x10] sm:$0xf]
        %v4467 = vld [vmem:[%s10 + $0x14] sm:$0xf]
        %v4468 = vld [vmem:[%s10 + $0x18] sm:$0xf]
        %v4469 = vld [vmem:[%s10 + $0x1c] sm:$0xf]
        %v4470 = vld [vmem:[%s10 + $0x20] sm:$0xf]
        %v4471 = vld [vmem:[%s10 + $0x24] sm:$0xf]
        %v4472 = vld [vmem:[%s10 + $0x28] sm:$0xf]
        %v4473 = vld [vmem:[%s10 + $0x2c] sm:$0xf]
        %v4474 = vld [vmem:[%s10 + $0x30] sm:$0xf]
        %v4475 = vld [vmem:[%s10 + $0x34] sm:$0xf]
        %v4476 = vld [vmem:[%s10 + $0x38] sm:$0xf]
        %v4477 = vld [vmem:[%s10 + $0x3c] sm:$0xf]
        %v4478 = vld [vmem:[%s10 + $0x40] sm:$0xf]
        %v4479 = vld [vmem:[%s10 + $0x44] sm:$0xf]
        %v4480 = vld [vmem:[%s10 + $0x48] sm:$0xf]
        %v4481 = vld [vmem:[%s10 + $0x4c] sm:$0xf]
        %v4482 = vld [vmem:[%s10 + $0x50] sm:$0xf]
        %v4483 = vld [vmem:[%s10 + $0x54] sm:$0xf]
        %v4484 = vld [vmem:[%s10 + $0x58] sm:$0xf]
        %v4485 = vld [vmem:[%s10 + $0x5c] sm:$0xf]
        %v4486 = vld [vmem:[%s10 + $0x60] sm:$0xf]
        %v4487 = vld [vmem:[%s10 + $0x64] sm:$0xf]
        %v4488 = vld [vmem:[%s10 + $0x68] sm:$0xf]
        %v4489 = vld [vmem:[%s10 + $0x6c] sm:$0xf]
        %v4490 = vld [vmem:[%s10 + $0x70] sm:$0xf]
        %v4491 = vld [vmem:[%s10 + $0x74] sm:$0xf]
        %v4492 = vld [vmem:[%s10 + $0x78] sm:$0xf]
        %v4493 = vld [vmem:[%s10 + $0x7c] sm:$0xf]
        %v4494 = vlaneseq
        %v4495 = vshrl.u32 %v4494, 7
        %v4496 = vsub.s32 1, %v4495
        %v4497 = vrot.slane %v3915, %v4496
        %v4530 = vunpack.c.l.b16 %v4462
        %v4531 = vunpack.c.l.b16 %v4463
        %v4532 = vunpack.c.l.b16 %v4464
        %v4533 = vunpack.c.l.b16 %v4465
        %v4534 = vunpack.c.l.b16 %v4466
        %v4535 = vunpack.c.l.b16 %v4467
        %v4536 = vunpack.c.l.b16 %v4468
        %v4537 = vunpack.c.l.b16 %v4469
        %v4538 = vunpack.c.l.b16 %v4470
        %v4539 = vunpack.c.l.b16 %v4471
        %v4540 = vunpack.c.l.b16 %v4472
        %v4541 = vunpack.c.l.b16 %v4473
        %v4542 = vunpack.c.l.b16 %v4474
        %v4543 = vunpack.c.l.b16 %v4475
        %v4544 = vunpack.c.l.b16 %v4476
        %v4545 = vunpack.c.l.b16 %v4477
        %v4546 = vunpack.c.l.b16 %v4478
        %v4547 = vunpack.c.l.b16 %v4479
        %v4548 = vunpack.c.l.b16 %v4480
        %v4549 = vunpack.c.l.b16 %v4481
        %v4550 = vunpack.c.l.b16 %v4482
        %v4551 = vunpack.c.l.b16 %v4483
        %v4552 = vunpack.c.l.b16 %v4484
        %v4553 = vunpack.c.l.b16 %v4485
        %v4554 = vunpack.c.l.b16 %v4486
        %v4555 = vunpack.c.l.b16 %v4487
        %v4556 = vunpack.c.l.b16 %v4488
        %v4557 = vunpack.c.l.b16 %v4489
        %v4558 = vunpack.c.l.b16 %v4490
        %v4559 = vunpack.c.l.b16 %v4491
        %v4560 = vunpack.c.l.b16 %v4492
        %v4561 = vunpack.c.l.b16 %v4493
        %v4562 = vpack.c.b16 %v4531, %v4530
        %v4563 = vpack.c.b16 %v4533, %v4532
        %v4564 = vpack.c.b16 %v4535, %v4534
        %v4565 = vpack.c.b16 %v4537, %v4536
        %v4566 = vpack.c.b16 %v4539, %v4538
        %v4567 = vpack.c.b16 %v4541, %v4540
        %v4568 = vpack.c.b16 %v4543, %v4542
        %v4569 = vpack.c.b16 %v4545, %v4544
        %v4570 = vpack.c.b16 %v4547, %v4546
        %v4571 = vpack.c.b16 %v4549, %v4548
        %v4572 = vpack.c.b16 %v4551, %v4550
        %v4573 = vpack.c.b16 %v4553, %v4552
        %v4574 = vpack.c.b16 %v4555, %v4554
        %v4575 = vpack.c.b16 %v4557, %v4556
        %v4576 = vpack.c.b16 %v4559, %v4558
        %v4577 = vpack.c.b16 %v4561, %v4560
        %4594 = vmatprep.subr.bf16.mxu0 0
        %4595 = vmatpush1.bf16.msra.mxu0 %v4562
        %4596 = vmatprep.subr.bf16.mxu0 0
        %4597 = vmatpush1.bf16.msra.mxu0 %v4563
        %4598 = vmatprep.subr.bf16.mxu0 0
        %4599 = vmatpush1.bf16.msra.mxu0 %v4564
        %4600 = vmatprep.subr.bf16.mxu0 0
        %4601 = vmatpush1.bf16.msra.mxu0 %v4565
        %4602 = vmatprep.subr.bf16.mxu0 0
        %4603 = vmatpush1.bf16.msra.mxu0 %v4566
        %4604 = vmatprep.subr.bf16.mxu0 0
        %4605 = vmatpush1.bf16.msra.mxu0 %v4567
        %4606 = vmatprep.subr.bf16.mxu0 0
        %4607 = vmatpush1.bf16.msra.mxu0 %v4568
        %4608 = vmatprep.subr.bf16.mxu0 0
        %4609 = vmatpush1.bf16.msra.mxu0 %v4569
        %4610 = vmatprep.subr.bf16.mxu0 0
        %4611 = vmatpush1.bf16.msra.mxu0 %v4570
        %4612 = vmatprep.subr.bf16.mxu0 0
        %4613 = vmatpush1.bf16.msra.mxu0 %v4571
        %4614 = vmatprep.subr.bf16.mxu0 0
        %4615 = vmatpush1.bf16.msra.mxu0 %v4572
        %4616 = vmatprep.subr.bf16.mxu0 0
        %4617 = vmatpush1.bf16.msra.mxu0 %v4573
        %4618 = vmatprep.subr.bf16.mxu0 0
        %4619 = vmatpush1.bf16.msra.mxu0 %v4574
        %4620 = vmatprep.subr.bf16.mxu0 0
        %4621 = vmatpush1.bf16.msra.mxu0 %v4575
        %4622 = vmatprep.subr.bf16.mxu0 0
        %4623 = vmatpush1.bf16.msra.mxu0 %v4576
        %4624 = vmatprep.subr.bf16.mxu0 0
        %4625 = vmatpush1.bf16.msra.mxu0 %v4577
        %4626 = vmatprep.mubr.bf16.mxu0 %v4461
        %4627 = vmatmul.mubr.bf16.gmra.mrb[0].mxu0 %v4460
        %v4628 = vpop.f32.mrb[0].mxu0
        %v4629 = vadd.f32 %v4497, %v4628
        %v4630 = vpop.f32.mrb[0].mxu0
        %v4631 = vpop.f32.mrb[0].mxu0
        %v4632 = vpop.f32.mrb[0].mxu0
        %4633 = vdwg.mxu0
        %v4634 = vadd.f32 %v4344, %v4629
        %v4635 = vsel %vm1309, %v4634, 0.0
        %4636 = vadd.xlane.f32.xlu0 %v4635
        %v4637 = vpop.xlane.xlu0 %4636
        %v4638 = vmul.f32 %v4637, %v4324
        %v4639 = vsub.f32 %v4634, %v4638
        %v4640 = vmul.f32 %v4639, %v4639
        %v4641 = vsel %vm1309, %v4640, 0.0
        %4642 = vadd.xlane.f32.xlu0 %v4641
        %v4643 = vpop.xlane.xlu0 %4642
        %v4644 = vmul.f32 %v4643, %v4324
        %v4645 = vadd.f32 %v4644, 1e-05
        %v4646 = vrsqrt.pop %v4645
        %v4647 = vmul.f32 %v4639, %v4646
        %v4648 = vlaneseq
        %v4649 = vshrl.u32 %v4648, 7
        %v4650 = vsub.s32 4, %v4649
        %v4651 = vrot.slane %v3915, %v4650
        %v4652 = vmul.f32 %v4647, %v4651
        %v4653 = vlaneseq
        %v4654 = vshrl.u32 %v4653, 7
        %v4655 = vsub.s32 5, %v4654
        %v4656 = vrot.slane %v3915, %v4655
        %v4657 = vadd.f32 %v4652, %v4656
        %4658 = vst.msk [vmem:[%s417] sm:$0xff] %vm1309, %v4657
        %s4659 = sand.u32 %s296, 1
        %s4660 = scalar_lea.sflag [#allocation3], %s4659
        %s4661 = sand.u32 %s296, 1
        %s4662 = smul.addr %s4661, 8
        %s4663 = scalar_lea.vmem [#allocation2], %s4662
        // Predicated region
        $region69: #{tpu_custom_call.1} parent=67 // pred_check
          %p4664 = pneg %p306
        $region70: #{tpu_custom_call.1} parent=67 // pred_check_branch
          %4666 = sbr.rel (%p4664) target = $region72
        $region71: #{tpu_custom_call.1} parent=67 // pred_region
          %s4668 = ssub.s32 128, 128
          %4669 = vsyncadd %s4660, %s4668
          %s4670 = smul.addr %s26, 128
          %s4671 = scalar_lea.hbm %s12, %s4670
          %s4673 = sshll.u32 %s4663, 4
          %s4674 = int_to_ptr.vmem [resolvable:$true] %s4673
          %4676 = dma.vmem_to_hbm [thread:$0]  %s4674, 128, %s4671, %s4660
        $region72: #{tpu_custom_call.1} parent=67 // pred_fallthru
          _
      $region68: #{tpu_custom_call.1} parent=5 // pred_fallthru
        _
      %p4677 = scmp.le.s32.totalorder 2, %s21
      // Predicated region
      $region73: #{tpu_custom_call.1} parent=5 // pred_check
        %p4678 = pneg %p4677
      $region74: #{tpu_custom_call.1} parent=5 // pred_check_branch
        %4680 = sbr.rel (%p4678) target = $region76
      $region75: #{tpu_custom_call.1} parent=5 // pred_region
        %s4681 = ssub.s32 %s21, 2
        // Predicated region
        $region77: #{tpu_custom_call.1} parent=75 // pred_check
          %p4682 = pneg %p312
        $region78: #{tpu_custom_call.1} parent=75 // pred_check_branch
          %4684 = sbr.rel (%p4682) target = $region80
        $region79: #{tpu_custom_call.1} parent=75 // pred_region
          %s4685 = sand.u32 %s297, 1
          %s4686 = scalar_lea.sflag [#allocation3], %s4685
          %s4687 = sand.u32 %s297, 1
          %s4688 = smul.addr %s4687, 8
          %s4689 = scalar_lea.vmem [#allocation2], %s4688
          %4690 = dma.done %s4686, 128
        $region80: #{tpu_custom_call.1} parent=75 // pred_fallthru
          _
      $region76: #{tpu_custom_call.1} parent=5 // pred_fallthru
        _
    $region6: #{tpu_custom_call.1} parent=1 // loop_footer
      %s25 = sadd.s32 1, %s21
    $region7: #{tpu_custom_call.1} parent=1 // loop_footer_branch
      %20 = sbr.rel target = $region3
    $region8: #{tpu_custom_call.1} parent=1 // loop_exit
      _
    %4691 = vsyncpa [#allocation3], 1
    %s4692 = scalar_lea.sflag [#allocation3], 1
    %4693 = vsyncpa %s4692, 1

</llo_original>
